<compile_context>
chip_gen: v5e
topology: v5e:2x2
jax: 0.10.0
libtpu: 0.0.40
codegen_flags: <defaults>
</compile_context>

<pallas_src>
import functools

import jax
import jax.numpy as jnp
import numpy as np
from jax.experimental import pallas as pl
from jax.experimental.pallas import tpu as pltpu

# ----------------------------- static geometry ----------------------------- #
IMG = 28          # input spatial size (1 channel)
H1 = 12           # spatial side after conv1 + 2x2 pool
H2 = 8            # conv2 pre-pool spatial side
HP2 = 4           # spatial side after conv2 + 2x2 pool
K1 = 6 * IMG      # 168: conv1 row-patch length (6 input rows x 28 cols)
K1P = 256         # lane-padded conv1 patch length
NF = 256          # flattened features feeding fc1 (= 16 * 4 * 4)
FCP = 128         # lane-padded fc widths
N_CLASSES = 10


# ------------------------------ fused kernel ------------------------------- #
def bn_lenet5_kernel(p1_ref, w1_ref, s11_ref, b11_ref,
                     w2_ref, s12_ref, b12_ref,
                     wf1_ref, s21_ref, b21_ref,
                     wf2_ref, s22_ref, b22_ref,
                     wf3_ref, bf3_ref,
                     out_ref,
                     h1_ref, flat_ref,
                     *, tile_b):
  """Whole BNLeNet5 forward for one batch tile, entirely in VMEM.

  Row layouts (within a tile of nb images):
    p1   : row = h*nb + b   lanes = flattened input rows 2h..2h+5 (168 of 256)
    h1   : row = h*nb + b   lanes = w*8 + c        (96 of 128 used)
    conv2: row = ho*nb + b  lanes = (wo%2)*64 + cout*4 + wo//2   (all 128)
    flat : row = b          lanes = i*64 + cout*4 + j            (all 256)
  """
  nb = tile_b

  # --- conv1 -> ReLU -> 2x2 maxpool -> bn11: one pooled output row per step.
  def conv1_row(h, carry):
    r0 = pl.multiple_of(h * nb, 8)
    lhs = p1_ref[pl.ds(r0, nb), :]                              # (nb, 256) bf16
    # 4 pooling candidates = 4 aligned 128-lane column blocks of w1.
    y = jnp.maximum(
        jnp.maximum(
            jnp.dot(lhs, w1_ref[:, 0:128], preferred_element_type=jnp.float32),
            jnp.dot(lhs, w1_ref[:, 128:256],
                    preferred_element_type=jnp.float32)),
        jnp.maximum(
            jnp.dot(lhs, w1_ref[:, 256:384],
                    preferred_element_type=jnp.float32),
            jnp.dot(lhs, w1_ref[:, 384:512],
                    preferred_element_type=jnp.float32)))
    y = jnp.maximum(y, 0.0)                                     # ReLU
    h1_ref[pl.ds(r0, nb), :] = (
        y * s11_ref[...] + b11_ref[...]).astype(jnp.bfloat16)   # bn11 affine
    return carry

  jax.lax.fori_loop(0, H1, conv1_row, 0)

  # --- conv2 (5 row-shifted Toeplitz matmuls) -> ReLU -> 2x2 pool -> bn12
  #     -> flatten; one pooled output row-pair per static step.
  for i in range(HP2):
    acc0 = jnp.dot(h1_ref[(2 * i) * nb:(2 * i + 1) * nb, :], w2_ref[0:128, :],
                   preferred_element_type=jnp.float32)
    acc1 = jnp.dot(h1_ref[(2 * i + 1) * nb:(2 * i + 2) * nb, :],
                   w2_ref[0:128, :], preferred_element_type=jnp.float32)
    for dh in range(1, 5):
      wblk = w2_ref[dh * 128:(dh + 1) * 128, :]
      acc0 = acc0 + jnp.dot(h1_ref[(2 * i + dh) * nb:(2 * i + dh + 1) * nb, :],
                            wblk, preferred_element_type=jnp.float32)
      acc1 = acc1 + jnp.dot(
          h1_ref[(2 * i + 1 + dh) * nb:(2 * i + 2 + dh) * nb, :],
          wblk, preferred_element_type=jnp.float32)
    v = jnp.maximum(jnp.maximum(acc0, acc1), 0.0)   # vertical pool + ReLU
    v = jnp.maximum(v[:, 0:64], v[:, 64:128])       # horizontal pool (lane max)
    v = v * s12_ref[...] + b12_ref[...]             # bn12 affine
    flat_ref[:, i * 64:(i + 1) * 64] = v.astype(jnp.bfloat16)

  # --- fc head: relu(bn21(fc1)) -> relu(bn22(fc2)) -> fc3 + bias -------------
  h = jnp.dot(flat_ref[...], wf1_ref[...], preferred_element_type=jnp.float32)
  h = jnp.maximum(h * s21_ref[...] + b21_ref[...], 0.0)
  h = jnp.dot(h.astype(jnp.bfloat16), wf2_ref[...],
              preferred_element_type=jnp.float32)
  h = jnp.maximum(h * s22_ref[...] + b22_ref[...], 0.0)
  out_ref[...] = (jnp.dot(h.astype(jnp.bfloat16), wf3_ref[...],
                          preferred_element_type=jnp.float32)
                  + bf3_ref[...])                   # lane-dense (tile_b, 128)


# ------------------------------ forward wrapper ----------------------------- #
def bn_lenet5_forward(x_nchw, kp, *, tile_b=64):
  B = x_nchw.shape[0]
  assert x_nchw.shape[1:] == (1, IMG, IMG)
  assert B % tile_b == 0 and tile_b % 8 == 0
  ntiles = B // tile_b

  x = x_nchw.reshape(B, IMG, IMG).astype(jnp.float32)
  # Raw-row gather only (cheap XLA strided slice): pooled output row h needs
  # input rows 2h..2h+5.  Rows within a tile are ordered (h, b).
  rows = jnp.stack([x[:, 2 * h:2 * h + 6, :] for h in range(H1)], axis=1)
  rows = rows.reshape(ntiles, tile_b, H1, K1)
  rows = jnp.transpose(rows, (0, 2, 1, 3))              # (nt, 12, tile_b, 168)
  p1 = rows.reshape(ntiles * H1 * tile_b, K1)
  p1 = jnp.pad(p1, ((0, 0), (0, K1P - K1))).astype(jnp.bfloat16)

  def cspec(shape):                                     # resident param block
    return pl.BlockSpec(shape, lambda t: (0, 0))

  grid_spec = pltpu.PrefetchScalarGridSpec(
      num_scalar_prefetch=0,
      grid=(ntiles,),
      in_specs=[
          pl.BlockSpec((H1 * tile_b, K1P), lambda t: (t, 0)),   # per-tile rows
          cspec((K1P, 4 * 128)),                                 # w1 (Toeplitz)
          cspec((1, 128)), cspec((1, 128)),                      # bn11
          cspec((5 * 128, 128)),                                 # w2 (Toeplitz)
          cspec((1, 64)), cspec((1, 64)),                        # bn12
          cspec((NF, FCP)), cspec((1, FCP)), cspec((1, FCP)),    # fc1 / bn21
          cspec((FCP, FCP)), cspec((1, FCP)), cspec((1, FCP)),   # fc2 / bn22
          cspec((FCP, FCP)), cspec((1, FCP)),                    # fc3
      ],
      out_specs=pl.BlockSpec((tile_b, FCP), lambda t: (t, 0)),
      scratch_shapes=[
          pltpu.VMEM((H1 * tile_b, 128), jnp.bfloat16),   # h1 (pooled conv1)
          pltpu.VMEM((tile_b, NF), jnp.bfloat16),         # flattened features
      ],
  )

  out = pl.pallas_call(
      functools.partial(bn_lenet5_kernel, tile_b=tile_b),
      out_shape=jax.ShapeDtypeStruct((B, FCP), jnp.float32),
      grid_spec=grid_spec,
      compiler_params=pltpu.CompilerParams(
          dimension_semantics=("parallel",),        # batch tiles independent
          vmem_limit_bytes=32 * 1024 * 1024),
  )(p1, kp["w1"], kp["s11"], kp["b11"],
    kp["w2"], kp["s12"], kp["b12"],
    kp["wf1"], kp["s21"], kp["b21"],
    kp["wf2"], kp["s22"], kp["b22"],
    kp["wf3"], kp["bf3"])

  # LogitAdjuster(tau=0) is the identity; drop the lane padding.
  return out[:, :N_CLASSES]


# ----------------------- parameter packing / BN folding --------------------- #
def fold_bn(gamma, beta, mean, var, eps=1e-5):
  scale = gamma / np.sqrt(var + eps)
  shift = beta - mean * scale
  return scale, shift


def pack_params(p):
  """PyTorch-layout params -> Toeplitz / permuted / padded kernel operands."""
  f32 = np.float32
  conv1_w = np.asarray(p["conv1_w"], f32)               # (6, 1, 5, 5)
  conv2_w = np.asarray(p["conv2_w"], f32)               # (16, 6, 5, 5)

  # conv1 row-Toeplitz weight (256, 512):
  #   LHS lane k = dy*28 + x  (dy in 0..5: input row 2h+dy ; x: input column)
  #   out  lane  = q*128 + w*8 + c   (q = qy*2+qx pooling candidate)
  w1 = np.zeros((K1P, 4 * 128), f32)
  for ky in range(5):
    for kx in range(5):
      for qy in range(2):
        for qx in range(2):
          q = qy * 2 + qx
          for w in range(H1):
            row = (qy + ky) * IMG + (2 * w + qx + kx)
            col = q * 128 + w * 8
            w1[row, col:col + 6] = conv1_w[:, 0, ky, kx]
  s11c, b11c = fold_bn(*[np.asarray(a, f32) for a in p["bn11"]])
  s11 = np.zeros((1, 128), f32)
  b11 = np.zeros((1, 128), f32)
  for w in range(H1):
    s11[0, w * 8:w * 8 + 6] = s11c
    b11[0, w * 8:w * 8 + 6] = b11c

  # conv2 row-Toeplitz weights, one (128,128) block per dh (stacked on rows):
  #   LHS lane = w*8 + c ; out lane = (wo%2)*64 + cout*4 + wo//2
  w2 = np.zeros((5 * 128, 128), f32)
  for dh in range(5):
    for dw in range(5):
      for wo in range(H2):
        w = wo + dw
        col = (wo % 2) * 64 + (wo // 2)
        row0 = dh * 128 + w * 8
        for cout in range(16):
          w2[row0:row0 + 6, col + cout * 4] = conv2_w[cout, :, dh, dw]
  s12c, b12c = fold_bn(*[np.asarray(a, f32) for a in p["bn12"]])
  s12 = np.repeat(s12c, 4).reshape(1, 64)
  b12 = np.repeat(b12c, 4).reshape(1, 64)

  # fc1: kernel flat lane order is (i, c, j); torch flatten order is (c, i, j).
  fc1 = np.asarray(p["fc1_w"], f32)                     # (120, 256)
  fc1 = fc1.reshape(120, 16, 4, 4).transpose(2, 1, 3, 0).reshape(NF, 120)
  wf1 = np.zeros((NF, FCP), f32)
  wf1[:, :120] = fc1
  s21c, b21c = fold_bn(*[np.asarray(a, f32) for a in p["bn21"]])
  s21 = np.zeros((1, FCP), f32); s21[0, :120] = s21c
  b21 = np.zeros((1, FCP), f32); b21[0, :120] = b21c

  fc2 = np.asarray(p["fc2_w"], f32)                     # (84, 120)
  wf2 = np.zeros((FCP, FCP), f32); wf2[:120, :84] = fc2.T
  s22c, b22c = fold_bn(*[np.asarray(a, f32) for a in p["bn22"]])
  s22 = np.zeros((1, FCP), f32); s22[0, :84] = s22c
  b22 = np.zeros((1, FCP), f32); b22[0, :84] = b22c

  fc3 = np.asarray(p["fc3_w"], f32)                     # (10, 84)
  wf3 = np.zeros((FCP, FCP), f32); wf3[:84, :N_CLASSES] = fc3.T
  bf3 = np.zeros((1, FCP), f32); bf3[0, :N_CLASSES] = np.asarray(p["fc3_b"], f32)

  bf16 = jnp.bfloat16
  return dict(
      w1=jnp.asarray(w1, bf16), s11=jnp.asarray(s11), b11=jnp.asarray(b11),
      w2=jnp.asarray(w2, bf16), s12=jnp.asarray(s12), b12=jnp.asarray(b12),
      wf1=jnp.asarray(wf1, bf16), s21=jnp.asarray(s21), b21=jnp.asarray(b21),
      wf2=jnp.asarray(wf2, bf16), s22=jnp.asarray(s22), b22=jnp.asarray(b22),
      wf3=jnp.asarray(wf3, bf16), bf3=jnp.asarray(bf3))


# ------------------------ deterministic PyTorch-layout init ------------------ #
def init_params(key):
  keys = iter(jax.random.split(key, 24))

  def nrm(shape, scale=0.1):
    return jax.random.normal(next(keys), shape, jnp.float32) * scale

  def bn(c):
    gamma = 1.0 + nrm((c,))
    beta = nrm((c,))
    mean = nrm((c,))
    var = 1.0 + jnp.abs(nrm((c,)))
    return gamma, beta, mean, var

  return {
      "conv1_w": nrm((6, 1, 5, 5)),     # (Cout, Cin, KH, KW)
      "conv2_w": nrm((16, 6, 5, 5)),
      "fc1_w": nrm((120, 256)),         # (out, in), applied as x @ W.T
      "fc2_w": nrm((84, 120)),
      "fc3_w": nrm((10, 84)),
      "fc3_b": nrm((10,)),
      "bn11": bn(6), "bn12": bn(16), "bn21": bn(120), "bn22": bn(84),
  }


# --------------------------- pure-JAX reference (f32) ----------------------- #
def reference_forward(x_nchw, p):
  def conv2d(x, w):
    return jax.lax.conv_general_dilated(
        x, w, window_strides=(1, 1), padding="VALID",
        dimension_numbers=("NCHW", "OIHW", "NCHW"))

  def bn(x, prm, axis):
    gamma, beta, mean, var = prm
    shape = [1] * x.ndim
    shape[axis] = -1
    scale = gamma / jnp.sqrt(var + 1e-5)
    shift = beta - mean * scale
    return x * scale.reshape(shape) + shift.reshape(shape)

  def pool(x):
    return jax.lax.reduce_window(x, -jnp.inf, jax.lax.max,
                                 (1, 1, 2, 2), (1, 1, 2, 2), "VALID")

  relu = lambda v: jnp.maximum(v, 0.0)
  x = bn(pool(relu(conv2d(x_nchw, p["conv1_w"]))), p["bn11"], 1)
  x = bn(pool(relu(conv2d(x, p["conv2_w"]))), p["bn12"], 1)
  x = x.reshape(x.shape[0], -1)                 # torch.flatten(x, 1) on NCHW
  x = relu(bn(x @ p["fc1_w"].T, p["bn21"], 1))
  x = relu(bn(x @ p["fc2_w"].T, p["bn22"], 1))
  return x @ p["fc3_w"].T + p["fc3_b"]          # LogitAdjuster(tau=0) == id


# ----------------------------------- main ----------------------------------- #
if __name__ == "__main__":
  key = jax.random.PRNGKey(0)
  kx, kprm = jax.random.split(key)

  B, TILE_B = 256, 64                 # 4 "parallel" grid tiles of 64 images
  x = jax.random.normal(kx, (B, 1, IMG, IMG), jnp.float32)
  params = init_params(kprm)
  kparams = pack_params(params)

  fwd = jax.jit(functools.partial(bn_lenet5_forward, tile_b=TILE_B))
  out = jax.block_until_ready(fwd(x, kparams))

  assert out.shape == (B, N_CLASSES), out.shape
  assert bool(jnp.all(jnp.isfinite(out)))

  # Structural / numerical check against the f32 reference.  The kernel uses
  # bf16 MXU operands (inputs, weights, h1/flat scratch) with f32 accumulation,
  # so allow a few percent of the logit scale.
  ref = reference_forward(x, params)
  err = float(jnp.max(jnp.abs(out - ref)))
  tol = 0.05 * (1.0 + float(jnp.max(jnp.abs(ref))))
  assert err < tol, f"max |pallas - reference| = {err} (tol {tol})"

  print("KERNEL_OK")
</pallas_src>

<mosaic_0001>
module attributes {stable_mosaic.version = 11 : i64} {
  func.func @bn_lenet5_kernel(%arg0: i32, %arg1: memref<768x256xbf16, #tpu.memory_space<vmem>>, %arg2: memref<256x512xbf16, #tpu.memory_space<vmem>>, %arg3: memref<1x128xf32, #tpu.memory_space<vmem>>, %arg4: memref<1x128xf32, #tpu.memory_space<vmem>>, %arg5: memref<640x128xbf16, #tpu.memory_space<vmem>>, %arg6: memref<1x64xf32, #tpu.memory_space<vmem>>, %arg7: memref<1x64xf32, #tpu.memory_space<vmem>>, %arg8: memref<256x128xbf16, #tpu.memory_space<vmem>>, %arg9: memref<1x128xf32, #tpu.memory_space<vmem>>, %arg10: memref<1x128xf32, #tpu.memory_space<vmem>>, %arg11: memref<128x128xbf16, #tpu.memory_space<vmem>>, %arg12: memref<1x128xf32, #tpu.memory_space<vmem>>, %arg13: memref<1x128xf32, #tpu.memory_space<vmem>>, %arg14: memref<128x128xbf16, #tpu.memory_space<vmem>>, %arg15: memref<1x128xf32, #tpu.memory_space<vmem>>, %arg16: memref<64x128xf32, #tpu.memory_space<vmem>>, %arg17: memref<768x128xbf16, #tpu.memory_space<vmem>>, %arg18: memref<64x256xbf16, #tpu.memory_space<vmem>>) attributes {dimension_semantics = [#tpu.dimension_semantics<parallel>], iteration_bounds = array<i64: 4>, scalar_prefetch = 0 : i64, scratch_operands = 2 : i64, tpu.core_type = #tpu.core_type<tc>, window_params = [{transform_indices = @transform_0, window_bounds = array<i64: 768, 256>}, {pipeline_mode = #tpu.pipeline_mode<synchronous>, transform_indices = @transform_1, window_bounds = array<i64: 256, 512>}, {pipeline_mode = #tpu.pipeline_mode<synchronous>, transform_indices = @transform_2, window_bounds = array<i64: 1, 128>}, {pipeline_mode = #tpu.pipeline_mode<synchronous>, transform_indices = @transform_3, window_bounds = array<i64: 1, 128>}, {pipeline_mode = #tpu.pipeline_mode<synchronous>, transform_indices = @transform_4, window_bounds = array<i64: 640, 128>}, {pipeline_mode = #tpu.pipeline_mode<synchronous>, transform_indices = @transform_5, window_bounds = array<i64: 1, 64>}, {pipeline_mode = #tpu.pipeline_mode<synchronous>, transform_indices = @transform_6, window_bounds = array<i64: 1, 64>}, {pipeline_mode = #tpu.pipeline_mode<synchronous>, transform_indices = @transform_7, window_bounds = array<i64: 256, 128>}, {pipeline_mode = #tpu.pipeline_mode<synchronous>, transform_indices = @transform_8, window_bounds = array<i64: 1, 128>}, {pipeline_mode = #tpu.pipeline_mode<synchronous>, transform_indices = @transform_9, window_bounds = array<i64: 1, 128>}, {pipeline_mode = #tpu.pipeline_mode<synchronous>, transform_indices = @transform_10, window_bounds = array<i64: 128, 128>}, {pipeline_mode = #tpu.pipeline_mode<synchronous>, transform_indices = @transform_11, window_bounds = array<i64: 1, 128>}, {pipeline_mode = #tpu.pipeline_mode<synchronous>, transform_indices = @transform_12, window_bounds = array<i64: 1, 128>}, {pipeline_mode = #tpu.pipeline_mode<synchronous>, transform_indices = @transform_13, window_bounds = array<i64: 128, 128>}, {pipeline_mode = #tpu.pipeline_mode<synchronous>, transform_indices = @transform_14, window_bounds = array<i64: 1, 128>}, {transform_indices = @transform_15, window_bounds = array<i64: 64, 128>}]} {
    %c0_i32 = arith.constant 0 : i32
    %c12_i32 = arith.constant 12 : i32
    %0 = arith.addi %c0_i32, %c12_i32 : i32
    %c1_i32 = arith.constant 1 : i32
    scf.for %arg19 = %c0_i32 to %0 step %c1_i32  : i32 {
      %c64_i32 = arith.constant 64 : i32
      %222 = arith.muli %arg19, %c64_i32 : i32
      %223 = tpu.assume_multiple %222, 8 : i32
      %224 = arith.index_cast %223 : i32 to index
      %c0_209 = arith.constant 0 : index
      %225 = vector.load %arg1[%224, %c0_209] : memref<768x256xbf16, #tpu.memory_space<vmem>>, vector<64x256xbf16>
      %c0_210 = arith.constant 0 : index
      %c0_211 = arith.constant 0 : index
      %226 = vector.load %arg2[%c0_210, %c0_211] : memref<256x512xbf16, #tpu.memory_space<vmem>>, vector<256x128xbf16>
      %cst_212 = arith.constant dense<0.000000e+00> : vector<64x128xf32>
      %227 = tpu.matmul %225, %226, %cst_212 {dimension_numbers = #tpu.dot_dimension_numbers<[1], [0], [0], [1], [0, 0, 1, 1], [], []>} : vector<64x256xbf16>, vector<256x128xbf16>, vector<64x128xf32> -> vector<64x128xf32>
      %c0_213 = arith.constant 0 : index
      %c128_214 = arith.constant 128 : index
      %228 = vector.load %arg2[%c0_213, %c128_214] : memref<256x512xbf16, #tpu.memory_space<vmem>>, vector<256x128xbf16>
      %cst_215 = arith.constant dense<0.000000e+00> : vector<64x128xf32>
      %229 = tpu.matmul %225, %228, %cst_215 {dimension_numbers = #tpu.dot_dimension_numbers<[1], [0], [0], [1], [0, 0, 1, 1], [], []>} : vector<64x256xbf16>, vector<256x128xbf16>, vector<64x128xf32> -> vector<64x128xf32>
      %230 = arith.maximumf %227, %229 : vector<64x128xf32>
      %c0_216 = arith.constant 0 : index
      %c256_217 = arith.constant 256 : index
      %231 = vector.load %arg2[%c0_216, %c256_217] : memref<256x512xbf16, #tpu.memory_space<vmem>>, vector<256x128xbf16>
      %cst_218 = arith.constant dense<0.000000e+00> : vector<64x128xf32>
      %232 = tpu.matmul %225, %231, %cst_218 {dimension_numbers = #tpu.dot_dimension_numbers<[1], [0], [0], [1], [0, 0, 1, 1], [], []>} : vector<64x256xbf16>, vector<256x128xbf16>, vector<64x128xf32> -> vector<64x128xf32>
      %c0_219 = arith.constant 0 : index
      %c384_220 = arith.constant 384 : index
      %233 = vector.load %arg2[%c0_219, %c384_220] : memref<256x512xbf16, #tpu.memory_space<vmem>>, vector<256x128xbf16>
      %cst_221 = arith.constant dense<0.000000e+00> : vector<64x128xf32>
      %234 = tpu.matmul %225, %233, %cst_221 {dimension_numbers = #tpu.dot_dimension_numbers<[1], [0], [0], [1], [0, 0, 1, 1], [], []>} : vector<64x256xbf16>, vector<256x128xbf16>, vector<64x128xf32> -> vector<64x128xf32>
      %235 = arith.maximumf %232, %234 : vector<64x128xf32>
      %236 = arith.maximumf %230, %235 : vector<64x128xf32>
      %cst_222 = arith.constant 0.000000e+00 : f32
      %237 = vector.broadcast %cst_222 : f32 to vector<64x128xf32>
      %238 = arith.maximumf %236, %237 : vector<64x128xf32>
      %c0_223 = arith.constant 0 : index
      %c0_224 = arith.constant 0 : index
      %239 = vector.load %arg3[%c0_223, %c0_224] : memref<1x128xf32, #tpu.memory_space<vmem>>, vector<1x128xf32>
      %240 = vector.broadcast %239 : vector<1x128xf32> to vector<64x128xf32>
      %241 = arith.mulf %238, %240 : vector<64x128xf32>
      %c0_225 = arith.constant 0 : index
      %c0_226 = arith.constant 0 : index
      %242 = vector.load %arg4[%c0_225, %c0_226] : memref<1x128xf32, #tpu.memory_space<vmem>>, vector<1x128xf32>
      %243 = vector.broadcast %242 : vector<1x128xf32> to vector<64x128xf32>
      %244 = arith.addf %241, %243 : vector<64x128xf32>
      %245 = arith.truncf %244 : vector<64x128xf32> to vector<64x128xbf16>
      %246 = arith.index_cast %223 : i32 to index
      %c0_227 = arith.constant 0 : index
      %247 = vector.load %arg17[%246, %c0_227] : memref<768x128xbf16, #tpu.memory_space<vmem>>, vector<64x128xbf16>
      tpu.vector_store %arg17[%246, %c0_227], %245 {strides = array<i32>} : memref<768x128xbf16, #tpu.memory_space<vmem>>, vector<64x128xbf16>,
    }
    %c12_i32_0 = arith.constant 12 : i32
    %c0 = arith.constant 0 : index
    %c0_1 = arith.constant 0 : index
    %1 = vector.load %arg17[%c0, %c0_1] : memref<768x128xbf16, #tpu.memory_space<vmem>>, vector<64x128xbf16>
    %c0_2 = arith.constant 0 : index
    %c0_3 = arith.constant 0 : index
    %2 = vector.load %arg5[%c0_2, %c0_3] : memref<640x128xbf16, #tpu.memory_space<vmem>>, vector<128x128xbf16>
    %cst = arith.constant dense<0.000000e+00> : vector<64x128xf32>
    %3 = tpu.matmul %1, %2, %cst {dimension_numbers = #tpu.dot_dimension_numbers<[1], [0], [0], [1], [0, 0, 1, 1], [], []>} : vector<64x128xbf16>, vector<128x128xbf16>, vector<64x128xf32> -> vector<64x128xf32>
    %c64 = arith.constant 64 : index
    %c0_4 = arith.constant 0 : index
    %4 = vector.load %arg17[%c64, %c0_4] : memref<768x128xbf16, #tpu.memory_space<vmem>>, vector<64x128xbf16>
    %c0_5 = arith.constant 0 : index
    %c0_6 = arith.constant 0 : index
    %5 = vector.load %arg5[%c0_5, %c0_6] : memref<640x128xbf16, #tpu.memory_space<vmem>>, vector<128x128xbf16>
    %cst_7 = arith.constant dense<0.000000e+00> : vector<64x128xf32>
    %6 = tpu.matmul %4, %5, %cst_7 {dimension_numbers = #tpu.dot_dimension_numbers<[1], [0], [0], [1], [0, 0, 1, 1], [], []>} : vector<64x128xbf16>, vector<128x128xbf16>, vector<64x128xf32> -> vector<64x128xf32>
    %c128 = arith.constant 128 : index
    %c0_8 = arith.constant 0 : index
    %7 = vector.load %arg5[%c128, %c0_8] : memref<640x128xbf16, #tpu.memory_space<vmem>>, vector<128x128xbf16>
    %c64_9 = arith.constant 64 : index
    %c0_10 = arith.constant 0 : index
    %8 = vector.load %arg17[%c64_9, %c0_10] : memref<768x128xbf16, #tpu.memory_space<vmem>>, vector<64x128xbf16>
    %cst_11 = arith.constant dense<0.000000e+00> : vector<64x128xf32>
    %9 = tpu.matmul %8, %7, %cst_11 {dimension_numbers = #tpu.dot_dimension_numbers<[1], [0], [0], [1], [0, 0, 1, 1], [], []>} : vector<64x128xbf16>, vector<128x128xbf16>, vector<64x128xf32> -> vector<64x128xf32>
    %10 = arith.addf %3, %9 : vector<64x128xf32>
    %c128_12 = arith.constant 128 : index
    %c0_13 = arith.constant 0 : index
    %11 = vector.load %arg17[%c128_12, %c0_13] : memref<768x128xbf16, #tpu.memory_space<vmem>>, vector<64x128xbf16>
    %cst_14 = arith.constant dense<0.000000e+00> : vector<64x128xf32>
    %12 = tpu.matmul %11, %7, %cst_14 {dimension_numbers = #tpu.dot_dimension_numbers<[1], [0], [0], [1], [0, 0, 1, 1], [], []>} : vector<64x128xbf16>, vector<128x128xbf16>, vector<64x128xf32> -> vector<64x128xf32>
    %13 = arith.addf %6, %12 : vector<64x128xf32>
    %c256 = arith.constant 256 : index
    %c0_15 = arith.constant 0 : index
    %14 = vector.load %arg5[%c256, %c0_15] : memref<640x128xbf16, #tpu.memory_space<vmem>>, vector<128x128xbf16>
    %c128_16 = arith.constant 128 : index
    %c0_17 = arith.constant 0 : index
    %15 = vector.load %arg17[%c128_16, %c0_17] : memref<768x128xbf16, #tpu.memory_space<vmem>>, vector<64x128xbf16>
    %cst_18 = arith.constant dense<0.000000e+00> : vector<64x128xf32>
    %16 = tpu.matmul %15, %14, %cst_18 {dimension_numbers = #tpu.dot_dimension_numbers<[1], [0], [0], [1], [0, 0, 1, 1], [], []>} : vector<64x128xbf16>, vector<128x128xbf16>, vector<64x128xf32> -> vector<64x128xf32>
    %17 = arith.addf %10, %16 : vector<64x128xf32>
    %c192 = arith.constant 192 : index
    %c0_19 = arith.constant 0 : index
    %18 = vector.load %arg17[%c192, %c0_19] : memref<768x128xbf16, #tpu.memory_space<vmem>>, vector<64x128xbf16>
    %cst_20 = arith.constant dense<0.000000e+00> : vector<64x128xf32>
    %19 = tpu.matmul %18, %14, %cst_20 {dimension_numbers = #tpu.dot_dimension_numbers<[1], [0], [0], [1], [0, 0, 1, 1], [], []>} : vector<64x128xbf16>, vector<128x128xbf16>, vector<64x128xf32> -> vector<64x128xf32>
    %20 = arith.addf %13, %19 : vector<64x128xf32>
    %c384 = arith.constant 384 : index
    %c0_21 = arith.constant 0 : index
    %21 = vector.load %arg5[%c384, %c0_21] : memref<640x128xbf16, #tpu.memory_space<vmem>>, vector<128x128xbf16>
    %c192_22 = arith.constant 192 : index
    %c0_23 = arith.constant 0 : index
    %22 = vector.load %arg17[%c192_22, %c0_23] : memref<768x128xbf16, #tpu.memory_space<vmem>>, vector<64x128xbf16>
    %cst_24 = arith.constant dense<0.000000e+00> : vector<64x128xf32>
    %23 = tpu.matmul %22, %21, %cst_24 {dimension_numbers = #tpu.dot_dimension_numbers<[1], [0], [0], [1], [0, 0, 1, 1], [], []>} : vector<64x128xbf16>, vector<128x128xbf16>, vector<64x128xf32> -> vector<64x128xf32>
    %24 = arith.addf %17, %23 : vector<64x128xf32>
    %c256_25 = arith.constant 256 : index
    %c0_26 = arith.constant 0 : index
    %25 = vector.load %arg17[%c256_25, %c0_26] : memref<768x128xbf16, #tpu.memory_space<vmem>>, vector<64x128xbf16>
    %cst_27 = arith.constant dense<0.000000e+00> : vector<64x128xf32>
    %26 = tpu.matmul %25, %21, %cst_27 {dimension_numbers = #tpu.dot_dimension_numbers<[1], [0], [0], [1], [0, 0, 1, 1], [], []>} : vector<64x128xbf16>, vector<128x128xbf16>, vector<64x128xf32> -> vector<64x128xf32>
    %27 = arith.addf %20, %26 : vector<64x128xf32>
    %c512 = arith.constant 512 : index
    %c0_28 = arith.constant 0 : index
    %28 = vector.load %arg5[%c512, %c0_28] : memref<640x128xbf16, #tpu.memory_space<vmem>>, vector<128x128xbf16>
    %c256_29 = arith.constant 256 : index
    %c0_30 = arith.constant 0 : index
    %29 = vector.load %arg17[%c256_29, %c0_30] : memref<768x128xbf16, #tpu.memory_space<vmem>>, vector<64x128xbf16>
    %cst_31 = arith.constant dense<0.000000e+00> : vector<64x128xf32>
    %30 = tpu.matmul %29, %28, %cst_31 {dimension_numbers = #tpu.dot_dimension_numbers<[1], [0], [0], [1], [0, 0, 1, 1], [], []>} : vector<64x128xbf16>, vector<128x128xbf16>, vector<64x128xf32> -> vector<64x128xf32>
    %31 = arith.addf %24, %30 : vector<64x128xf32>
    %c320 = arith.constant 320 : index
    %c0_32 = arith.constant 0 : index
    %32 = vector.load %arg17[%c320, %c0_32] : memref<768x128xbf16, #tpu.memory_space<vmem>>, vector<64x128xbf16>
    %cst_33 = arith.constant dense<0.000000e+00> : vector<64x128xf32>
    %33 = tpu.matmul %32, %28, %cst_33 {dimension_numbers = #tpu.dot_dimension_numbers<[1], [0], [0], [1], [0, 0, 1, 1], [], []>} : vector<64x128xbf16>, vector<128x128xbf16>, vector<64x128xf32> -> vector<64x128xf32>
    %34 = arith.addf %27, %33 : vector<64x128xf32>
    %35 = arith.maximumf %31, %34 : vector<64x128xf32>
    %cst_34 = arith.constant 0.000000e+00 : f32
    %36 = vector.broadcast %cst_34 : f32 to vector<64x128xf32>
    %37 = arith.maximumf %35, %36 : vector<64x128xf32>
    %38 = vector.extract_strided_slice %37 {offsets = [0, 0], sizes = [64, 64], strides = [1, 1]} : vector<64x128xf32> to vector<64x64xf32>
    %39 = vector.extract_strided_slice %37 {offsets = [0, 64], sizes = [64, 64], strides = [1, 1]} : vector<64x128xf32> to vector<64x64xf32>
    %40 = arith.maximumf %38, %39 : vector<64x64xf32>
    %c0_35 = arith.constant 0 : index
    %c0_36 = arith.constant 0 : index
    %41 = vector.load %arg6[%c0_35, %c0_36] : memref<1x64xf32, #tpu.memory_space<vmem>>, vector<1x64xf32>
    %42 = vector.broadcast %41 : vector<1x64xf32> to vector<64x64xf32>
    %43 = arith.mulf %40, %42 : vector<64x64xf32>
    %c0_37 = arith.constant 0 : index
    %c0_38 = arith.constant 0 : index
    %44 = vector.load %arg7[%c0_37, %c0_38] : memref<1x64xf32, #tpu.memory_space<vmem>>, vector<1x64xf32>
    %45 = vector.broadcast %44 : vector<1x64xf32> to vector<64x64xf32>
    %46 = arith.addf %43, %45 : vector<64x64xf32>
    %47 = arith.truncf %46 : vector<64x64xf32> to vector<64x64xbf16>
    %c0_39 = arith.constant 0 : index
    %c0_40 = arith.constant 0 : index
    %48 = vector.load %arg18[%c0_39, %c0_40] : memref<64x256xbf16, #tpu.memory_space<vmem>>, vector<64x64xbf16>
    tpu.vector_store %arg18[%c0_39, %c0_40], %47 {strides = array<i32>} : memref<64x256xbf16, #tpu.memory_space<vmem>>, vector<64x64xbf16>,
    %c128_41 = arith.constant 128 : index
    %c0_42 = arith.constant 0 : index
    %49 = vector.load %arg17[%c128_41, %c0_42] : memref<768x128xbf16, #tpu.memory_space<vmem>>, vector<64x128xbf16>
    %c0_43 = arith.constant 0 : index
    %c0_44 = arith.constant 0 : index
    %50 = vector.load %arg5[%c0_43, %c0_44] : memref<640x128xbf16, #tpu.memory_space<vmem>>, vector<128x128xbf16>
    %cst_45 = arith.constant dense<0.000000e+00> : vector<64x128xf32>
    %51 = tpu.matmul %49, %50, %cst_45 {dimension_numbers = #tpu.dot_dimension_numbers<[1], [0], [0], [1], [0, 0, 1, 1], [], []>} : vector<64x128xbf16>, vector<128x128xbf16>, vector<64x128xf32> -> vector<64x128xf32>
    %c192_46 = arith.constant 192 : index
    %c0_47 = arith.constant 0 : index
    %52 = vector.load %arg17[%c192_46, %c0_47] : memref<768x128xbf16, #tpu.memory_space<vmem>>, vector<64x128xbf16>
    %c0_48 = arith.constant 0 : index
    %c0_49 = arith.constant 0 : index
    %53 = vector.load %arg5[%c0_48, %c0_49] : memref<640x128xbf16, #tpu.memory_space<vmem>>, vector<128x128xbf16>
    %cst_50 = arith.constant dense<0.000000e+00> : vector<64x128xf32>
    %54 = tpu.matmul %52, %53, %cst_50 {dimension_numbers = #tpu.dot_dimension_numbers<[1], [0], [0], [1], [0, 0, 1, 1], [], []>} : vector<64x128xbf16>, vector<128x128xbf16>, vector<64x128xf32> -> vector<64x128xf32>
    %c128_51 = arith.constant 128 : index
    %c0_52 = arith.constant 0 : index
    %55 = vector.load %arg5[%c128_51, %c0_52] : memref<640x128xbf16, #tpu.memory_space<vmem>>, vector<128x128xbf16>
    %c192_53 = arith.constant 192 : index
    %c0_54 = arith.constant 0 : index
    %56 = vector.load %arg17[%c192_53, %c0_54] : memref<768x128xbf16, #tpu.memory_space<vmem>>, vector<64x128xbf16>
    %cst_55 = arith.constant dense<0.000000e+00> : vector<64x128xf32>
    %57 = tpu.matmul %56, %55, %cst_55 {dimension_numbers = #tpu.dot_dimension_numbers<[1], [0], [0], [1], [0, 0, 1, 1], [], []>} : vector<64x128xbf16>, vector<128x128xbf16>, vector<64x128xf32> -> vector<64x128xf32>
    %58 = arith.addf %51, %57 : vector<64x128xf32>
    %c256_56 = arith.constant 256 : index
    %c0_57 = arith.constant 0 : index
    %59 = vector.load %arg17[%c256_56, %c0_57] : memref<768x128xbf16, #tpu.memory_space<vmem>>, vector<64x128xbf16>
    %cst_58 = arith.constant dense<0.000000e+00> : vector<64x128xf32>
    %60 = tpu.matmul %59, %55, %cst_58 {dimension_numbers = #tpu.dot_dimension_numbers<[1], [0], [0], [1], [0, 0, 1, 1], [], []>} : vector<64x128xbf16>, vector<128x128xbf16>, vector<64x128xf32> -> vector<64x128xf32>
    %61 = arith.addf %54, %60 : vector<64x128xf32>
    %c256_59 = arith.constant 256 : index
    %c0_60 = arith.constant 0 : index
    %62 = vector.load %arg5[%c256_59, %c0_60] : memref<640x128xbf16, #tpu.memory_space<vmem>>, vector<128x128xbf16>
    %c256_61 = arith.constant 256 : index
    %c0_62 = arith.constant 0 : index
    %63 = vector.load %arg17[%c256_61, %c0_62] : memref<768x128xbf16, #tpu.memory_space<vmem>>, vector<64x128xbf16>
    %cst_63 = arith.constant dense<0.000000e+00> : vector<64x128xf32>
    %64 = tpu.matmul %63, %62, %cst_63 {dimension_numbers = #tpu.dot_dimension_numbers<[1], [0], [0], [1], [0, 0, 1, 1], [], []>} : vector<64x128xbf16>, vector<128x128xbf16>, vector<64x128xf32> -> vector<64x128xf32>
    %65 = arith.addf %58, %64 : vector<64x128xf32>
    %c320_64 = arith.constant 320 : index
    %c0_65 = arith.constant 0 : index
    %66 = vector.load %arg17[%c320_64, %c0_65] : memref<768x128xbf16, #tpu.memory_space<vmem>>, vector<64x128xbf16>
    %cst_66 = arith.constant dense<0.000000e+00> : vector<64x128xf32>
    %67 = tpu.matmul %66, %62, %cst_66 {dimension_numbers = #tpu.dot_dimension_numbers<[1], [0], [0], [1], [0, 0, 1, 1], [], []>} : vector<64x128xbf16>, vector<128x128xbf16>, vector<64x128xf32> -> vector<64x128xf32>
    %68 = arith.addf %61, %67 : vector<64x128xf32>
    %c384_67 = arith.constant 384 : index
    %c0_68 = arith.constant 0 : index
    %69 = vector.load %arg5[%c384_67, %c0_68] : memref<640x128xbf16, #tpu.memory_space<vmem>>, vector<128x128xbf16>
    %c320_69 = arith.constant 320 : index
    %c0_70 = arith.constant 0 : index
    %70 = vector.load %arg17[%c320_69, %c0_70] : memref<768x128xbf16, #tpu.memory_space<vmem>>, vector<64x128xbf16>
    %cst_71 = arith.constant dense<0.000000e+00> : vector<64x128xf32>
    %71 = tpu.matmul %70, %69, %cst_71 {dimension_numbers = #tpu.dot_dimension_numbers<[1], [0], [0], [1], [0, 0, 1, 1], [], []>} : vector<64x128xbf16>, vector<128x128xbf16>, vector<64x128xf32> -> vector<64x128xf32>
    %72 = arith.addf %65, %71 : vector<64x128xf32>
    %c384_72 = arith.constant 384 : index
    %c0_73 = arith.constant 0 : index
    %73 = vector.load %arg17[%c384_72, %c0_73] : memref<768x128xbf16, #tpu.memory_space<vmem>>, vector<64x128xbf16>
    %cst_74 = arith.constant dense<0.000000e+00> : vector<64x128xf32>
    %74 = tpu.matmul %73, %69, %cst_74 {dimension_numbers = #tpu.dot_dimension_numbers<[1], [0], [0], [1], [0, 0, 1, 1], [], []>} : vector<64x128xbf16>, vector<128x128xbf16>, vector<64x128xf32> -> vector<64x128xf32>
    %75 = arith.addf %68, %74 : vector<64x128xf32>
    %c512_75 = arith.constant 512 : index
    %c0_76 = arith.constant 0 : index
    %76 = vector.load %arg5[%c512_75, %c0_76] : memref<640x128xbf16, #tpu.memory_space<vmem>>, vector<128x128xbf16>
    %c384_77 = arith.constant 384 : index
    %c0_78 = arith.constant 0 : index
    %77 = vector.load %arg17[%c384_77, %c0_78] : memref<768x128xbf16, #tpu.memory_space<vmem>>, vector<64x128xbf16>
    %cst_79 = arith.constant dense<0.000000e+00> : vector<64x128xf32>
    %78 = tpu.matmul %77, %76, %cst_79 {dimension_numbers = #tpu.dot_dimension_numbers<[1], [0], [0], [1], [0, 0, 1, 1], [], []>} : vector<64x128xbf16>, vector<128x128xbf16>, vector<64x128xf32> -> vector<64x128xf32>
    %79 = arith.addf %72, %78 : vector<64x128xf32>
    %c448 = arith.constant 448 : index
    %c0_80 = arith.constant 0 : index
    %80 = vector.load %arg17[%c448, %c0_80] : memref<768x128xbf16, #tpu.memory_space<vmem>>, vector<64x128xbf16>
    %cst_81 = arith.constant dense<0.000000e+00> : vector<64x128xf32>
    %81 = tpu.matmul %80, %76, %cst_81 {dimension_numbers = #tpu.dot_dimension_numbers<[1], [0], [0], [1], [0, 0, 1, 1], [], []>} : vector<64x128xbf16>, vector<128x128xbf16>, vector<64x128xf32> -> vector<64x128xf32>
    %82 = arith.addf %75, %81 : vector<64x128xf32>
    %83 = arith.maximumf %79, %82 : vector<64x128xf32>
    %cst_82 = arith.constant 0.000000e+00 : f32
    %84 = vector.broadcast %cst_82 : f32 to vector<64x128xf32>
    %85 = arith.maximumf %83, %84 : vector<64x128xf32>
    %86 = vector.extract_strided_slice %85 {offsets = [0, 0], sizes = [64, 64], strides = [1, 1]} : vector<64x128xf32> to vector<64x64xf32>
    %87 = vector.extract_strided_slice %85 {offsets = [0, 64], sizes = [64, 64], strides = [1, 1]} : vector<64x128xf32> to vector<64x64xf32>
    %88 = arith.maximumf %86, %87 : vector<64x64xf32>
    %c0_83 = arith.constant 0 : index
    %c0_84 = arith.constant 0 : index
    %89 = vector.load %arg6[%c0_83, %c0_84] : memref<1x64xf32, #tpu.memory_space<vmem>>, vector<1x64xf32>
    %90 = vector.broadcast %89 : vector<1x64xf32> to vector<64x64xf32>
    %91 = arith.mulf %88, %90 : vector<64x64xf32>
    %c0_85 = arith.constant 0 : index
    %c0_86 = arith.constant 0 : index
    %92 = vector.load %arg7[%c0_85, %c0_86] : memref<1x64xf32, #tpu.memory_space<vmem>>, vector<1x64xf32>
    %93 = vector.broadcast %92 : vector<1x64xf32> to vector<64x64xf32>
    %94 = arith.addf %91, %93 : vector<64x64xf32>
    %95 = arith.truncf %94 : vector<64x64xf32> to vector<64x64xbf16>
    %c0_87 = arith.constant 0 : index
    %c64_88 = arith.constant 64 : index
    %96 = vector.load %arg18[%c0_87, %c64_88] : memref<64x256xbf16, #tpu.memory_space<vmem>>, vector<64x64xbf16>
    tpu.vector_store %arg18[%c0_87, %c64_88], %95 {strides = array<i32>} : memref<64x256xbf16, #tpu.memory_space<vmem>>, vector<64x64xbf16>,
    %c256_89 = arith.constant 256 : index
    %c0_90 = arith.constant 0 : index
    %97 = vector.load %arg17[%c256_89, %c0_90] : memref<768x128xbf16, #tpu.memory_space<vmem>>, vector<64x128xbf16>
    %c0_91 = arith.constant 0 : index
    %c0_92 = arith.constant 0 : index
    %98 = vector.load %arg5[%c0_91, %c0_92] : memref<640x128xbf16, #tpu.memory_space<vmem>>, vector<128x128xbf16>
    %cst_93 = arith.constant dense<0.000000e+00> : vector<64x128xf32>
    %99 = tpu.matmul %97, %98, %cst_93 {dimension_numbers = #tpu.dot_dimension_numbers<[1], [0], [0], [1], [0, 0, 1, 1], [], []>} : vector<64x128xbf16>, vector<128x128xbf16>, vector<64x128xf32> -> vector<64x128xf32>
    %c320_94 = arith.constant 320 : index
    %c0_95 = arith.constant 0 : index
    %100 = vector.load %arg17[%c320_94, %c0_95] : memref<768x128xbf16, #tpu.memory_space<vmem>>, vector<64x128xbf16>
    %c0_96 = arith.constant 0 : index
    %c0_97 = arith.constant 0 : index
    %101 = vector.load %arg5[%c0_96, %c0_97] : memref<640x128xbf16, #tpu.memory_space<vmem>>, vector<128x128xbf16>
    %cst_98 = arith.constant dense<0.000000e+00> : vector<64x128xf32>
    %102 = tpu.matmul %100, %101, %cst_98 {dimension_numbers = #tpu.dot_dimension_numbers<[1], [0], [0], [1], [0, 0, 1, 1], [], []>} : vector<64x128xbf16>, vector<128x128xbf16>, vector<64x128xf32> -> vector<64x128xf32>
    %c128_99 = arith.constant 128 : index
    %c0_100 = arith.constant 0 : index
    %103 = vector.load %arg5[%c128_99, %c0_100] : memref<640x128xbf16, #tpu.memory_space<vmem>>, vector<128x128xbf16>
    %c320_101 = arith.constant 320 : index
    %c0_102 = arith.constant 0 : index
    %104 = vector.load %arg17[%c320_101, %c0_102] : memref<768x128xbf16, #tpu.memory_space<vmem>>, vector<64x128xbf16>
    %cst_103 = arith.constant dense<0.000000e+00> : vector<64x128xf32>
    %105 = tpu.matmul %104, %103, %cst_103 {dimension_numbers = #tpu.dot_dimension_numbers<[1], [0], [0], [1], [0, 0, 1, 1], [], []>} : vector<64x128xbf16>, vector<128x128xbf16>, vector<64x128xf32> -> vector<64x128xf32>
    %106 = arith.addf %99, %105 : vector<64x128xf32>
    %c384_104 = arith.constant 384 : index
    %c0_105 = arith.constant 0 : index
    %107 = vector.load %arg17[%c384_104, %c0_105] : memref<768x128xbf16, #tpu.memory_space<vmem>>, vector<64x128xbf16>
    %cst_106 = arith.constant dense<0.000000e+00> : vector<64x128xf32>
    %108 = tpu.matmul %107, %103, %cst_106 {dimension_numbers = #tpu.dot_dimension_numbers<[1], [0], [0], [1], [0, 0, 1, 1], [], []>} : vector<64x128xbf16>, vector<128x128xbf16>, vector<64x128xf32> -> vector<64x128xf32>
    %109 = arith.addf %102, %108 : vector<64x128xf32>
    %c256_107 = arith.constant 256 : index
    %c0_108 = arith.constant 0 : index
    %110 = vector.load %arg5[%c256_107, %c0_108] : memref<640x128xbf16, #tpu.memory_space<vmem>>, vector<128x128xbf16>
    %c384_109 = arith.constant 384 : index
    %c0_110 = arith.constant 0 : index
    %111 = vector.load %arg17[%c384_109, %c0_110] : memref<768x128xbf16, #tpu.memory_space<vmem>>, vector<64x128xbf16>
    %cst_111 = arith.constant dense<0.000000e+00> : vector<64x128xf32>
    %112 = tpu.matmul %111, %110, %cst_111 {dimension_numbers = #tpu.dot_dimension_numbers<[1], [0], [0], [1], [0, 0, 1, 1], [], []>} : vector<64x128xbf16>, vector<128x128xbf16>, vector<64x128xf32> -> vector<64x128xf32>
    %113 = arith.addf %106, %112 : vector<64x128xf32>
    %c448_112 = arith.constant 448 : index
    %c0_113 = arith.constant 0 : index
    %114 = vector.load %arg17[%c448_112, %c0_113] : memref<768x128xbf16, #tpu.memory_space<vmem>>, vector<64x128xbf16>
    %cst_114 = arith.constant dense<0.000000e+00> : vector<64x128xf32>
    %115 = tpu.matmul %114, %110, %cst_114 {dimension_numbers = #tpu.dot_dimension_numbers<[1], [0], [0], [1], [0, 0, 1, 1], [], []>} : vector<64x128xbf16>, vector<128x128xbf16>, vector<64x128xf32> -> vector<64x128xf32>
    %116 = arith.addf %109, %115 : vector<64x128xf32>
    %c384_115 = arith.constant 384 : index
    %c0_116 = arith.constant 0 : index
    %117 = vector.load %arg5[%c384_115, %c0_116] : memref<640x128xbf16, #tpu.memory_space<vmem>>, vector<128x128xbf16>
    %c448_117 = arith.constant 448 : index
    %c0_118 = arith.constant 0 : index
    %118 = vector.load %arg17[%c448_117, %c0_118] : memref<768x128xbf16, #tpu.memory_space<vmem>>, vector<64x128xbf16>
    %cst_119 = arith.constant dense<0.000000e+00> : vector<64x128xf32>
    %119 = tpu.matmul %118, %117, %cst_119 {dimension_numbers = #tpu.dot_dimension_numbers<[1], [0], [0], [1], [0, 0, 1, 1], [], []>} : vector<64x128xbf16>, vector<128x128xbf16>, vector<64x128xf32> -> vector<64x128xf32>
    %120 = arith.addf %113, %119 : vector<64x128xf32>
    %c512_120 = arith.constant 512 : index
    %c0_121 = arith.constant 0 : index
    %121 = vector.load %arg17[%c512_120, %c0_121] : memref<768x128xbf16, #tpu.memory_space<vmem>>, vector<64x128xbf16>
    %cst_122 = arith.constant dense<0.000000e+00> : vector<64x128xf32>
    %122 = tpu.matmul %121, %117, %cst_122 {dimension_numbers = #tpu.dot_dimension_numbers<[1], [0], [0], [1], [0, 0, 1, 1], [], []>} : vector<64x128xbf16>, vector<128x128xbf16>, vector<64x128xf32> -> vector<64x128xf32>
    %123 = arith.addf %116, %122 : vector<64x128xf32>
    %c512_123 = arith.constant 512 : index
    %c0_124 = arith.constant 0 : index
    %124 = vector.load %arg5[%c512_123, %c0_124] : memref<640x128xbf16, #tpu.memory_space<vmem>>, vector<128x128xbf16>
    %c512_125 = arith.constant 512 : index
    %c0_126 = arith.constant 0 : index
    %125 = vector.load %arg17[%c512_125, %c0_126] : memref<768x128xbf16, #tpu.memory_space<vmem>>, vector<64x128xbf16>
    %cst_127 = arith.constant dense<0.000000e+00> : vector<64x128xf32>
    %126 = tpu.matmul %125, %124, %cst_127 {dimension_numbers = #tpu.dot_dimension_numbers<[1], [0], [0], [1], [0, 0, 1, 1], [], []>} : vector<64x128xbf16>, vector<128x128xbf16>, vector<64x128xf32> -> vector<64x128xf32>
    %127 = arith.addf %120, %126 : vector<64x128xf32>
    %c576 = arith.constant 576 : index
    %c0_128 = arith.constant 0 : index
    %128 = vector.load %arg17[%c576, %c0_128] : memref<768x128xbf16, #tpu.memory_space<vmem>>, vector<64x128xbf16>
    %cst_129 = arith.constant dense<0.000000e+00> : vector<64x128xf32>
    %129 = tpu.matmul %128, %124, %cst_129 {dimension_numbers = #tpu.dot_dimension_numbers<[1], [0], [0], [1], [0, 0, 1, 1], [], []>} : vector<64x128xbf16>, vector<128x128xbf16>, vector<64x128xf32> -> vector<64x128xf32>
    %130 = arith.addf %123, %129 : vector<64x128xf32>
    %131 = arith.maximumf %127, %130 : vector<64x128xf32>
    %cst_130 = arith.constant 0.000000e+00 : f32
    %132 = vector.broadcast %cst_130 : f32 to vector<64x128xf32>
    %133 = arith.maximumf %131, %132 : vector<64x128xf32>
    %134 = vector.extract_strided_slice %133 {offsets = [0, 0], sizes = [64, 64], strides = [1, 1]} : vector<64x128xf32> to vector<64x64xf32>
    %135 = vector.extract_strided_slice %133 {offsets = [0, 64], sizes = [64, 64], strides = [1, 1]} : vector<64x128xf32> to vector<64x64xf32>
    %136 = arith.maximumf %134, %135 : vector<64x64xf32>
    %c0_131 = arith.constant 0 : index
    %c0_132 = arith.constant 0 : index
    %137 = vector.load %arg6[%c0_131, %c0_132] : memref<1x64xf32, #tpu.memory_space<vmem>>, vector<1x64xf32>
    %138 = vector.broadcast %137 : vector<1x64xf32> to vector<64x64xf32>
    %139 = arith.mulf %136, %138 : vector<64x64xf32>
    %c0_133 = arith.constant 0 : index
    %c0_134 = arith.constant 0 : index
    %140 = vector.load %arg7[%c0_133, %c0_134] : memref<1x64xf32, #tpu.memory_space<vmem>>, vector<1x64xf32>
    %141 = vector.broadcast %140 : vector<1x64xf32> to vector<64x64xf32>
    %142 = arith.addf %139, %141 : vector<64x64xf32>
    %143 = arith.truncf %142 : vector<64x64xf32> to vector<64x64xbf16>
    %c0_135 = arith.constant 0 : index
    %c128_136 = arith.constant 128 : index
    %144 = vector.load %arg18[%c0_135, %c128_136] : memref<64x256xbf16, #tpu.memory_space<vmem>>, vector<64x64xbf16>
    tpu.vector_store %arg18[%c0_135, %c128_136], %143 {strides = array<i32>} : memref<64x256xbf16, #tpu.memory_space<vmem>>, vector<64x64xbf16>,
    %c384_137 = arith.constant 384 : index
    %c0_138 = arith.constant 0 : index
    %145 = vector.load %arg17[%c384_137, %c0_138] : memref<768x128xbf16, #tpu.memory_space<vmem>>, vector<64x128xbf16>
    %c0_139 = arith.constant 0 : index
    %c0_140 = arith.constant 0 : index
    %146 = vector.load %arg5[%c0_139, %c0_140] : memref<640x128xbf16, #tpu.memory_space<vmem>>, vector<128x128xbf16>
    %cst_141 = arith.constant dense<0.000000e+00> : vector<64x128xf32>
    %147 = tpu.matmul %145, %146, %cst_141 {dimension_numbers = #tpu.dot_dimension_numbers<[1], [0], [0], [1], [0, 0, 1, 1], [], []>} : vector<64x128xbf16>, vector<128x128xbf16>, vector<64x128xf32> -> vector<64x128xf32>
    %c448_142 = arith.constant 448 : index
    %c0_143 = arith.constant 0 : index
    %148 = vector.load %arg17[%c448_142, %c0_143] : memref<768x128xbf16, #tpu.memory_space<vmem>>, vector<64x128xbf16>
    %c0_144 = arith.constant 0 : index
    %c0_145 = arith.constant 0 : index
    %149 = vector.load %arg5[%c0_144, %c0_145] : memref<640x128xbf16, #tpu.memory_space<vmem>>, vector<128x128xbf16>
    %cst_146 = arith.constant dense<0.000000e+00> : vector<64x128xf32>
    %150 = tpu.matmul %148, %149, %cst_146 {dimension_numbers = #tpu.dot_dimension_numbers<[1], [0], [0], [1], [0, 0, 1, 1], [], []>} : vector<64x128xbf16>, vector<128x128xbf16>, vector<64x128xf32> -> vector<64x128xf32>
    %c128_147 = arith.constant 128 : index
    %c0_148 = arith.constant 0 : index
    %151 = vector.load %arg5[%c128_147, %c0_148] : memref<640x128xbf16, #tpu.memory_space<vmem>>, vector<128x128xbf16>
    %c448_149 = arith.constant 448 : index
    %c0_150 = arith.constant 0 : index
    %152 = vector.load %arg17[%c448_149, %c0_150] : memref<768x128xbf16, #tpu.memory_space<vmem>>, vector<64x128xbf16>
    %cst_151 = arith.constant dense<0.000000e+00> : vector<64x128xf32>
    %153 = tpu.matmul %152, %151, %cst_151 {dimension_numbers = #tpu.dot_dimension_numbers<[1], [0], [0], [1], [0, 0, 1, 1], [], []>} : vector<64x128xbf16>, vector<128x128xbf16>, vector<64x128xf32> -> vector<64x128xf32>
    %154 = arith.addf %147, %153 : vector<64x128xf32>
    %c512_152 = arith.constant 512 : index
    %c0_153 = arith.constant 0 : index
    %155 = vector.load %arg17[%c512_152, %c0_153] : memref<768x128xbf16, #tpu.memory_space<vmem>>, vector<64x128xbf16>
    %cst_154 = arith.constant dense<0.000000e+00> : vector<64x128xf32>
    %156 = tpu.matmul %155, %151, %cst_154 {dimension_numbers = #tpu.dot_dimension_numbers<[1], [0], [0], [1], [0, 0, 1, 1], [], []>} : vector<64x128xbf16>, vector<128x128xbf16>, vector<64x128xf32> -> vector<64x128xf32>
    %157 = arith.addf %150, %156 : vector<64x128xf32>
    %c256_155 = arith.constant 256 : index
    %c0_156 = arith.constant 0 : index
    %158 = vector.load %arg5[%c256_155, %c0_156] : memref<640x128xbf16, #tpu.memory_space<vmem>>, vector<128x128xbf16>
    %c512_157 = arith.constant 512 : index
    %c0_158 = arith.constant 0 : index
    %159 = vector.load %arg17[%c512_157, %c0_158] : memref<768x128xbf16, #tpu.memory_space<vmem>>, vector<64x128xbf16>
    %cst_159 = arith.constant dense<0.000000e+00> : vector<64x128xf32>
    %160 = tpu.matmul %159, %158, %cst_159 {dimension_numbers = #tpu.dot_dimension_numbers<[1], [0], [0], [1], [0, 0, 1, 1], [], []>} : vector<64x128xbf16>, vector<128x128xbf16>, vector<64x128xf32> -> vector<64x128xf32>
    %161 = arith.addf %154, %160 : vector<64x128xf32>
    %c576_160 = arith.constant 576 : index
    %c0_161 = arith.constant 0 : index
    %162 = vector.load %arg17[%c576_160, %c0_161] : memref<768x128xbf16, #tpu.memory_space<vmem>>, vector<64x128xbf16>
    %cst_162 = arith.constant dense<0.000000e+00> : vector<64x128xf32>
    %163 = tpu.matmul %162, %158, %cst_162 {dimension_numbers = #tpu.dot_dimension_numbers<[1], [0], [0], [1], [0, 0, 1, 1], [], []>} : vector<64x128xbf16>, vector<128x128xbf16>, vector<64x128xf32> -> vector<64x128xf32>
    %164 = arith.addf %157, %163 : vector<64x128xf32>
    %c384_163 = arith.constant 384 : index
    %c0_164 = arith.constant 0 : index
    %165 = vector.load %arg5[%c384_163, %c0_164] : memref<640x128xbf16, #tpu.memory_space<vmem>>, vector<128x128xbf16>
    %c576_165 = arith.constant 576 : index
    %c0_166 = arith.constant 0 : index
    %166 = vector.load %arg17[%c576_165, %c0_166] : memref<768x128xbf16, #tpu.memory_space<vmem>>, vector<64x128xbf16>
    %cst_167 = arith.constant dense<0.000000e+00> : vector<64x128xf32>
    %167 = tpu.matmul %166, %165, %cst_167 {dimension_numbers = #tpu.dot_dimension_numbers<[1], [0], [0], [1], [0, 0, 1, 1], [], []>} : vector<64x128xbf16>, vector<128x128xbf16>, vector<64x128xf32> -> vector<64x128xf32>
    %168 = arith.addf %161, %167 : vector<64x128xf32>
    %c640 = arith.constant 640 : index
    %c0_168 = arith.constant 0 : index
    %169 = vector.load %arg17[%c640, %c0_168] : memref<768x128xbf16, #tpu.memory_space<vmem>>, vector<64x128xbf16>
    %cst_169 = arith.constant dense<0.000000e+00> : vector<64x128xf32>
    %170 = tpu.matmul %169, %165, %cst_169 {dimension_numbers = #tpu.dot_dimension_numbers<[1], [0], [0], [1], [0, 0, 1, 1], [], []>} : vector<64x128xbf16>, vector<128x128xbf16>, vector<64x128xf32> -> vector<64x128xf32>
    %171 = arith.addf %164, %170 : vector<64x128xf32>
    %c512_170 = arith.constant 512 : index
    %c0_171 = arith.constant 0 : index
    %172 = vector.load %arg5[%c512_170, %c0_171] : memref<640x128xbf16, #tpu.memory_space<vmem>>, vector<128x128xbf16>
    %c640_172 = arith.constant 640 : index
    %c0_173 = arith.constant 0 : index
    %173 = vector.load %arg17[%c640_172, %c0_173] : memref<768x128xbf16, #tpu.memory_space<vmem>>, vector<64x128xbf16>
    %cst_174 = arith.constant dense<0.000000e+00> : vector<64x128xf32>
    %174 = tpu.matmul %173, %172, %cst_174 {dimension_numbers = #tpu.dot_dimension_numbers<[1], [0], [0], [1], [0, 0, 1, 1], [], []>} : vector<64x128xbf16>, vector<128x128xbf16>, vector<64x128xf32> -> vector<64x128xf32>
    %175 = arith.addf %168, %174 : vector<64x128xf32>
    %c704 = arith.constant 704 : index
    %c0_175 = arith.constant 0 : index
    %176 = vector.load %arg17[%c704, %c0_175] : memref<768x128xbf16, #tpu.memory_space<vmem>>, vector<64x128xbf16>
    %cst_176 = arith.constant dense<0.000000e+00> : vector<64x128xf32>
    %177 = tpu.matmul %176, %172, %cst_176 {dimension_numbers = #tpu.dot_dimension_numbers<[1], [0], [0], [1], [0, 0, 1, 1], [], []>} : vector<64x128xbf16>, vector<128x128xbf16>, vector<64x128xf32> -> vector<64x128xf32>
    %178 = arith.addf %171, %177 : vector<64x128xf32>
    %179 = arith.maximumf %175, %178 : vector<64x128xf32>
    %cst_177 = arith.constant 0.000000e+00 : f32
    %180 = vector.broadcast %cst_177 : f32 to vector<64x128xf32>
    %181 = arith.maximumf %179, %180 : vector<64x128xf32>
    %182 = vector.extract_strided_slice %181 {offsets = [0, 0], sizes = [64, 64], strides = [1, 1]} : vector<64x128xf32> to vector<64x64xf32>
    %183 = vector.extract_strided_slice %181 {offsets = [0, 64], sizes = [64, 64], strides = [1, 1]} : vector<64x128xf32> to vector<64x64xf32>
    %184 = arith.maximumf %182, %183 : vector<64x64xf32>
    %c0_178 = arith.constant 0 : index
    %c0_179 = arith.constant 0 : index
    %185 = vector.load %arg6[%c0_178, %c0_179] : memref<1x64xf32, #tpu.memory_space<vmem>>, vector<1x64xf32>
    %186 = vector.broadcast %185 : vector<1x64xf32> to vector<64x64xf32>
    %187 = arith.mulf %184, %186 : vector<64x64xf32>
    %c0_180 = arith.constant 0 : index
    %c0_181 = arith.constant 0 : index
    %188 = vector.load %arg7[%c0_180, %c0_181] : memref<1x64xf32, #tpu.memory_space<vmem>>, vector<1x64xf32>
    %189 = vector.broadcast %188 : vector<1x64xf32> to vector<64x64xf32>
    %190 = arith.addf %187, %189 : vector<64x64xf32>
    %191 = arith.truncf %190 : vector<64x64xf32> to vector<64x64xbf16>
    %c0_182 = arith.constant 0 : index
    %c192_183 = arith.constant 192 : index
    %192 = vector.load %arg18[%c0_182, %c192_183] : memref<64x256xbf16, #tpu.memory_space<vmem>>, vector<64x64xbf16>
    tpu.vector_store %arg18[%c0_182, %c192_183], %191 {strides = array<i32>} : memref<64x256xbf16, #tpu.memory_space<vmem>>, vector<64x64xbf16>,
    %c0_184 = arith.constant 0 : index
    %c0_185 = arith.constant 0 : index
    %193 = vector.load %arg18[%c0_184, %c0_185] : memref<64x256xbf16, #tpu.memory_space<vmem>>, vector<64x256xbf16>
    %c0_186 = arith.constant 0 : index
    %c0_187 = arith.constant 0 : index
    %194 = vector.load %arg8[%c0_186, %c0_187] : memref<256x128xbf16, #tpu.memory_space<vmem>>, vector<256x128xbf16>
    %cst_188 = arith.constant dense<0.000000e+00> : vector<64x128xf32>
    %195 = tpu.matmul %193, %194, %cst_188 {dimension_numbers = #tpu.dot_dimension_numbers<[1], [0], [0], [1], [0, 0, 1, 1], [], []>} : vector<64x256xbf16>, vector<256x128xbf16>, vector<64x128xf32> -> vector<64x128xf32>
    %c0_189 = arith.constant 0 : index
    %c0_190 = arith.constant 0 : index
    %196 = vector.load %arg9[%c0_189, %c0_190] : memref<1x128xf32, #tpu.memory_space<vmem>>, vector<1x128xf32>
    %197 = vector.broadcast %196 : vector<1x128xf32> to vector<64x128xf32>
    %198 = arith.mulf %195, %197 : vector<64x128xf32>
    %c0_191 = arith.constant 0 : index
    %c0_192 = arith.constant 0 : index
    %199 = vector.load %arg10[%c0_191, %c0_192] : memref<1x128xf32, #tpu.memory_space<vmem>>, vector<1x128xf32>
    %200 = vector.broadcast %199 : vector<1x128xf32> to vector<64x128xf32>
    %201 = arith.addf %198, %200 : vector<64x128xf32>
    %cst_193 = arith.constant 0.000000e+00 : f32
    %202 = vector.broadcast %cst_193 : f32 to vector<64x128xf32>
    %203 = arith.maximumf %201, %202 : vector<64x128xf32>
    %204 = arith.truncf %203 : vector<64x128xf32> to vector<64x128xbf16>
    %c0_194 = arith.constant 0 : index
    %c0_195 = arith.constant 0 : index
    %205 = vector.load %arg11[%c0_194, %c0_195] : memref<128x128xbf16, #tpu.memory_space<vmem>>, vector<128x128xbf16>
    %cst_196 = arith.constant dense<0.000000e+00> : vector<64x128xf32>
    %206 = tpu.matmul %204, %205, %cst_196 {dimension_numbers = #tpu.dot_dimension_numbers<[1], [0], [0], [1], [0, 0, 1, 1], [], []>} : vector<64x128xbf16>, vector<128x128xbf16>, vector<64x128xf32> -> vector<64x128xf32>
    %c0_197 = arith.constant 0 : index
    %c0_198 = arith.constant 0 : index
    %207 = vector.load %arg12[%c0_197, %c0_198] : memref<1x128xf32, #tpu.memory_space<vmem>>, vector<1x128xf32>
    %208 = vector.broadcast %207 : vector<1x128xf32> to vector<64x128xf32>
    %209 = arith.mulf %206, %208 : vector<64x128xf32>
    %c0_199 = arith.constant 0 : index
    %c0_200 = arith.constant 0 : index
    %210 = vector.load %arg13[%c0_199, %c0_200] : memref<1x128xf32, #tpu.memory_space<vmem>>, vector<1x128xf32>
    %211 = vector.broadcast %210 : vector<1x128xf32> to vector<64x128xf32>
    %212 = arith.addf %209, %211 : vector<64x128xf32>
    %cst_201 = arith.constant 0.000000e+00 : f32
    %213 = vector.broadcast %cst_201 : f32 to vector<64x128xf32>
    %214 = arith.maximumf %212, %213 : vector<64x128xf32>
    %215 = arith.truncf %214 : vector<64x128xf32> to vector<64x128xbf16>
    %c0_202 = arith.constant 0 : index
    %c0_203 = arith.constant 0 : index
    %216 = vector.load %arg14[%c0_202, %c0_203] : memref<128x128xbf16, #tpu.memory_space<vmem>>, vector<128x128xbf16>
    %cst_204 = arith.constant dense<0.000000e+00> : vector<64x128xf32>
    %217 = tpu.matmul %215, %216, %cst_204 {dimension_numbers = #tpu.dot_dimension_numbers<[1], [0], [0], [1], [0, 0, 1, 1], [], []>} : vector<64x128xbf16>, vector<128x128xbf16>, vector<64x128xf32> -> vector<64x128xf32>
    %c0_205 = arith.constant 0 : index
    %c0_206 = arith.constant 0 : index
    %218 = vector.load %arg15[%c0_205, %c0_206] : memref<1x128xf32, #tpu.memory_space<vmem>>, vector<1x128xf32>
    %219 = vector.broadcast %218 : vector<1x128xf32> to vector<64x128xf32>
    %220 = arith.addf %217, %219 : vector<64x128xf32>
    %c0_207 = arith.constant 0 : index
    %c0_208 = arith.constant 0 : index
    %221 = vector.load %arg16[%c0_207, %c0_208] : memref<64x128xf32, #tpu.memory_space<vmem>>, vector<64x128xf32>
    tpu.vector_store %arg16[%c0_207, %c0_208], %220 {strides = array<i32>} : memref<64x128xf32, #tpu.memory_space<vmem>>, vector<64x128xf32>,
    return
  }
  func.func @transform_0(%arg0: i32) -> (i32, i32) {
    %c0_i32 = arith.constant 0 : i32
    %c0_i32_0 = arith.constant 0 : i32
    return %arg0, %c0_i32 : i32, i32
  }
  func.func @transform_1(%arg0: i32) -> (i32, i32) {
    %c0_i32 = arith.constant 0 : i32
    %c0_i32_0 = arith.constant 0 : i32
    %c0_i32_1 = arith.constant 0 : i32
    return %c0_i32, %c0_i32_0 : i32, i32
  }
  func.func @transform_2(%arg0: i32) -> (i32, i32) {
    %c0_i32 = arith.constant 0 : i32
    %c0_i32_0 = arith.constant 0 : i32
    %c0_i32_1 = arith.constant 0 : i32
    return %c0_i32, %c0_i32_0 : i32, i32
  }
  func.func @transform_3(%arg0: i32) -> (i32, i32) {
    %c0_i32 = arith.constant 0 : i32
    %c0_i32_0 = arith.constant 0 : i32
    %c0_i32_1 = arith.constant 0 : i32
    return %c0_i32, %c0_i32_0 : i32, i32
  }
  func.func @transform_4(%arg0: i32) -> (i32, i32) {
    %c0_i32 = arith.constant 0 : i32
    %c0_i32_0 = arith.constant 0 : i32
    %c0_i32_1 = arith.constant 0 : i32
    return %c0_i32, %c0_i32_0 : i32, i32
  }
  func.func @transform_5(%arg0: i32) -> (i32, i32) {
    %c0_i32 = arith.constant 0 : i32
    %c0_i32_0 = arith.constant 0 : i32
    %c0_i32_1 = arith.constant 0 : i32
    return %c0_i32, %c0_i32_0 : i32, i32
  }
  func.func @transform_6(%arg0: i32) -> (i32, i32) {
    %c0_i32 = arith.constant 0 : i32
    %c0_i32_0 = arith.constant 0 : i32
    %c0_i32_1 = arith.constant 0 : i32
    return %c0_i32, %c0_i32_0 : i32, i32
  }
  func.func @transform_7(%arg0: i32) -> (i32, i32) {
    %c0_i32 = arith.constant 0 : i32
    %c0_i32_0 = arith.constant 0 : i32
    %c0_i32_1 = arith.constant 0 : i32
    return %c0_i32, %c0_i32_0 : i32, i32
  }
  func.func @transform_8(%arg0: i32) -> (i32, i32) {
    %c0_i32 = arith.constant 0 : i32
    %c0_i32_0 = arith.constant 0 : i32
    %c0_i32_1 = arith.constant 0 : i32
    return %c0_i32, %c0_i32_0 : i32, i32
  }
  func.func @transform_9(%arg0: i32) -> (i32, i32) {
    %c0_i32 = arith.constant 0 : i32
    %c0_i32_0 = arith.constant 0 : i32
    %c0_i32_1 = arith.constant 0 : i32
    return %c0_i32, %c0_i32_0 : i32, i32
  }
  func.func @transform_10(%arg0: i32) -> (i32, i32) {
    %c0_i32 = arith.constant 0 : i32
    %c0_i32_0 = arith.constant 0 : i32
    %c0_i32_1 = arith.constant 0 : i32
    return %c0_i32, %c0_i32_0 : i32, i32
  }
  func.func @transform_11(%arg0: i32) -> (i32, i32) {
    %c0_i32 = arith.constant 0 : i32
    %c0_i32_0 = arith.constant 0 : i32
    %c0_i32_1 = arith.constant 0 : i32
    return %c0_i32, %c0_i32_0 : i32, i32
  }
  func.func @transform_12(%arg0: i32) -> (i32, i32) {
    %c0_i32 = arith.constant 0 : i32
    %c0_i32_0 = arith.constant 0 : i32
    %c0_i32_1 = arith.constant 0 : i32
    return %c0_i32, %c0_i32_0 : i32, i32
  }
  func.func @transform_13(%arg0: i32) -> (i32, i32) {
    %c0_i32 = arith.constant 0 : i32
    %c0_i32_0 = arith.constant 0 : i32
    %c0_i32_1 = arith.constant 0 : i32
    return %c0_i32, %c0_i32_0 : i32, i32
  }
  func.func @transform_14(%arg0: i32) -> (i32, i32) {
    %c0_i32 = arith.constant 0 : i32
    %c0_i32_0 = arith.constant 0 : i32
    %c0_i32_1 = arith.constant 0 : i32
    return %c0_i32, %c0_i32_0 : i32, i32
  }
  func.func @transform_15(%arg0: i32) -> (i32, i32) {
    %c0_i32 = arith.constant 0 : i32
    %c0_i32_0 = arith.constant 0 : i32
    return %arg0, %c0_i32 : i32, i32
  }
}

</mosaic_0001>

<llo_original>
// kernel: bn_lenet5_forward.1
$region0: #{bn_lenet5_forward.1}
  #allocation0 [shape = 'u32[]', space=smem, size = 0x4, offset = 0x4, fixed_abs, tag = 'smem constant byte address 0x4 - core index']
  #allocation1 [shape = 'u32[72,128]{1,0:T(1,128)}', space=vmem, size = 0x9000, scoped, tag = 'internal scratch']
  #allocation2 [shape = 'bf16[768,128]{1,0:T(8,128)(2,1)}', space=vmem, size = 0x30000, scoped, tag = 'scratch operand']
  #allocation3 [shape = 'bf16[64,256]{1,0:T(8,128)(2,1)}', space=vmem, size = 0x8000, scoped, tag = 'scratch operand']
  %s0 = inlined_call_operand.vmem [shape: bf16[3072,256], index: 0, kind: input, shape index: {}]
  %s1 = inlined_call_operand.vmem [shape: bf16[256,512], index: 1, kind: input, shape index: {}]
  %s2 = inlined_call_operand.vmem [shape: f32[1,128], index: 2, kind: input, shape index: {}]
  %s3 = inlined_call_operand.vmem [shape: f32[1,128], index: 3, kind: input, shape index: {}]
  %s4 = inlined_call_operand.vmem [shape: bf16[640,128], index: 4, kind: input, shape index: {}]
  %s5 = inlined_call_operand.vmem [shape: f32[1,64], index: 5, kind: input, shape index: {}]
  %s6 = inlined_call_operand.vmem [shape: f32[1,64], index: 6, kind: input, shape index: {}]
  %s7 = inlined_call_operand.vmem [shape: bf16[256,128], index: 7, kind: input, shape index: {}]
  %s8 = inlined_call_operand.vmem [shape: f32[1,128], index: 8, kind: input, shape index: {}]
  %s9 = inlined_call_operand.vmem [shape: f32[1,128], index: 9, kind: input, shape index: {}]
  %s10 = inlined_call_operand.vmem [shape: bf16[128,128], index: 10, kind: input, shape index: {}]
  %s11 = inlined_call_operand.vmem [shape: f32[1,128], index: 11, kind: input, shape index: {}]
  %s12 = inlined_call_operand.vmem [shape: f32[1,128], index: 12, kind: input, shape index: {}]
  %s13 = inlined_call_operand.vmem [shape: bf16[128,128], index: 13, kind: input, shape index: {}]
  %s14 = inlined_call_operand.vmem [shape: f32[1,128], index: 14, kind: input, shape index: {}]
  %s15 = inlined_call_operand.vmem [shape: f32[256,128], index: 15, kind: output, shape index: {}]
  %s16 = sld [smem:[#allocation0]]
  $region100: #{bn_lenet5_forward.1} parent=0
    _
  %s18 = ssub.s32 1, %s16
  %s19 = scalar_select 0, %s18, %s16
  loop: start=0, step=1, limit=6
  $region2: #{bn_lenet5_forward.1} parent=0 // loop_pre_header
    _
  $region3: #{bn_lenet5_forward.1} parent=0 // loop_header
    %s21 = sphi 0, %s25
    %p22 = scmp.ge.s32.totalorder %s21, 6
    %s31 = sphi 0, %s33
    %s34 = sphi 0, %s31
    %s35 = sphi 0, %s34
    %s51 = sphi 0, %s35
    %s55 = sphi 0, %s55
    %s57 = sphi 0, %s55
    %s58 = sphi 0, %s57
    %s72 = sphi 0, %s58
    %s76 = sphi 0, %s76
    %s78 = sphi 0, %s76
    %s79 = sphi 0, %s78
    %s93 = sphi 0, %s79
    %s97 = sphi 0, %s97
    %s99 = sphi 0, %s97
    %s100 = sphi 0, %s99
    %s114 = sphi 0, %s100
    %s118 = sphi 0, %s118
    %s120 = sphi 0, %s118
    %s121 = sphi 0, %s120
    %s135 = sphi 0, %s121
    %s139 = sphi 0, %s139
    %s141 = sphi 0, %s139
    %s142 = sphi 0, %s141
    %s156 = sphi 0, %s142
    %s160 = sphi 0, %s160
    %s162 = sphi 0, %s160
    %s163 = sphi 0, %s162
    %s177 = sphi 0, %s163
    %s181 = sphi 0, %s181
    %s183 = sphi 0, %s181
    %s184 = sphi 0, %s183
    %s198 = sphi 0, %s184
    %s202 = sphi 0, %s202
    %s204 = sphi 0, %s202
    %s205 = sphi 0, %s204
    %s219 = sphi 0, %s205
    %s223 = sphi 0, %s223
    %s225 = sphi 0, %s223
    %s226 = sphi 0, %s225
    %s240 = sphi 0, %s226
    %s244 = sphi 0, %s244
    %s246 = sphi 0, %s244
    %s247 = sphi 0, %s246
    %s261 = sphi 0, %s247
    %s265 = sphi 0, %s265
    %s267 = sphi 0, %s265
    %s268 = sphi 0, %s267
    %s282 = sphi 0, %s268
    %s286 = sphi 0, %s286
    %s288 = sphi 0, %s286
    %s289 = sphi 0, %s288
    %s303 = sphi 0, %s289
    %s307 = sphi 0, %s307
    %s309 = sphi 0, %s307
    %s310 = sphi 0, %s309
    %s324 = sphi 0, %s310
    %s328 = sphi 0, %s328
    %s330 = sphi 0, %s328
    %s331 = sphi 0, %s330
    %s345 = sphi 0, %s331
    %s351 = sphi 0, %s353
    %s354 = sphi 0, %s351
    %s355 = sphi 0, %s354
    %s371 = sphi 0, %s355
  $region4: #{bn_lenet5_forward.1} parent=0 // loop_header_branch
    %24 = sbr.rel (%p22) target = $region8
  $region5: #{bn_lenet5_forward.1} parent=0 // loop_body
    %s26 = ssub.s32 %s21, 1
    %s27 = ssub.s32 %s21, 2
    %s28 = sadd.s32 %s21, 1
    %s29 = ssub.s32 %s21, %s28
    %p30 = scmp.eq.s32.totalorder %s29, 0
    %s32 = sadd.s32 %s31, 1
    %s33 = scalar_select %p30, %s31, %s32
    %p36 = pneg %p30
    %p37 = scmp.eq.s32.totalorder %s21, 3
    %p38 = por %p36, %p37
    %p39 = scmp.ne.s32.totalorder %s31, %s34
    %p40 = scmp.eq.s32.totalorder %s21, 0
    %p41 = por %p39, %p40
    %p42 = scmp.ne.s32.totalorder %s31, %s34
    %p43 = scmp.eq.s32.totalorder %s26, 3
    %p44 = por %p42, %p43
    %p45 = scmp.ne.s32.totalorder %s34, %s35
    %p46 = scmp.eq.s32.totalorder %s26, 0
    %p47 = por %p45, %p46
    %p48 = scmp.ne.s32.totalorder %s34, %s35
    %p49 = scmp.eq.s32.totalorder %s27, 3
    %p50 = por %p48, %p49
    %p52 = scmp.ne.s32.totalorder %s35, %s51
    %p53 = scmp.eq.s32.totalorder %s27, 0
    %p54 = por %p52, %p53
    %s56 = sadd.s32 %s55, 1
    %p59 = scmp.eq.s32.totalorder %s21, 3
    %p60 = scmp.ne.s32.totalorder %s55, %s57
    %p61 = scmp.eq.s32.totalorder %s21, 0
    %p62 = por %p60, %p61
    %p63 = scmp.ne.s32.totalorder %s55, %s57
    %p64 = scmp.eq.s32.totalorder %s26, 3
    %p65 = por %p63, %p64
    %p66 = scmp.ne.s32.totalorder %s57, %s58
    %p67 = scmp.eq.s32.totalorder %s26, 0
    %p68 = por %p66, %p67
    %p69 = scmp.ne.s32.totalorder %s57, %s58
    %p70 = scmp.eq.s32.totalorder %s27, 3
    %p71 = por %p69, %p70
    %p73 = scmp.ne.s32.totalorder %s58, %s72
    %p74 = scmp.eq.s32.totalorder %s27, 0
    %p75 = por %p73, %p74
    %s77 = sadd.s32 %s76, 1
    %p80 = scmp.eq.s32.totalorder %s21, 3
    %p81 = scmp.ne.s32.totalorder %s76, %s78
    %p82 = scmp.eq.s32.totalorder %s21, 0
    %p83 = por %p81, %p82
    %p84 = scmp.ne.s32.totalorder %s76, %s78
    %p85 = scmp.eq.s32.totalorder %s26, 3
    %p86 = por %p84, %p85
    %p87 = scmp.ne.s32.totalorder %s78, %s79
    %p88 = scmp.eq.s32.totalorder %s26, 0
    %p89 = por %p87, %p88
    %p90 = scmp.ne.s32.totalorder %s78, %s79
    %p91 = scmp.eq.s32.totalorder %s27, 3
    %p92 = por %p90, %p91
    %p94 = scmp.ne.s32.totalorder %s79, %s93
    %p95 = scmp.eq.s32.totalorder %s27, 0
    %p96 = por %p94, %p95
    %s98 = sadd.s32 %s97, 1
    %p101 = scmp.eq.s32.totalorder %s21, 3
    %p102 = scmp.ne.s32.totalorder %s97, %s99
    %p103 = scmp.eq.s32.totalorder %s21, 0
    %p104 = por %p102, %p103
    %p105 = scmp.ne.s32.totalorder %s97, %s99
    %p106 = scmp.eq.s32.totalorder %s26, 3
    %p107 = por %p105, %p106
    %p108 = scmp.ne.s32.totalorder %s99, %s100
    %p109 = scmp.eq.s32.totalorder %s26, 0
    %p110 = por %p108, %p109
    %p111 = scmp.ne.s32.totalorder %s99, %s100
    %p112 = scmp.eq.s32.totalorder %s27, 3
    %p113 = por %p111, %p112
    %p115 = scmp.ne.s32.totalorder %s100, %s114
    %p116 = scmp.eq.s32.totalorder %s27, 0
    %p117 = por %p115, %p116
    %s119 = sadd.s32 %s118, 1
    %p122 = scmp.eq.s32.totalorder %s21, 3
    %p123 = scmp.ne.s32.totalorder %s118, %s120
    %p124 = scmp.eq.s32.totalorder %s21, 0
    %p125 = por %p123, %p124
    %p126 = scmp.ne.s32.totalorder %s118, %s120
    %p127 = scmp.eq.s32.totalorder %s26, 3
    %p128 = por %p126, %p127
    %p129 = scmp.ne.s32.totalorder %s120, %s121
    %p130 = scmp.eq.s32.totalorder %s26, 0
    %p131 = por %p129, %p130
    %p132 = scmp.ne.s32.totalorder %s120, %s121
    %p133 = scmp.eq.s32.totalorder %s27, 3
    %p134 = por %p132, %p133
    %p136 = scmp.ne.s32.totalorder %s121, %s135
    %p137 = scmp.eq.s32.totalorder %s27, 0
    %p138 = por %p136, %p137
    %s140 = sadd.s32 %s139, 1
    %p143 = scmp.eq.s32.totalorder %s21, 3
    %p144 = scmp.ne.s32.totalorder %s139, %s141
    %p145 = scmp.eq.s32.totalorder %s21, 0
    %p146 = por %p144, %p145
    %p147 = scmp.ne.s32.totalorder %s139, %s141
    %p148 = scmp.eq.s32.totalorder %s26, 3
    %p149 = por %p147, %p148
    %p150 = scmp.ne.s32.totalorder %s141, %s142
    %p151 = scmp.eq.s32.totalorder %s26, 0
    %p152 = por %p150, %p151
    %p153 = scmp.ne.s32.totalorder %s141, %s142
    %p154 = scmp.eq.s32.totalorder %s27, 3
    %p155 = por %p153, %p154
    %p157 = scmp.ne.s32.totalorder %s142, %s156
    %p158 = scmp.eq.s32.totalorder %s27, 0
    %p159 = por %p157, %p158
    %s161 = sadd.s32 %s160, 1
    %p164 = scmp.eq.s32.totalorder %s21, 3
    %p165 = scmp.ne.s32.totalorder %s160, %s162
    %p166 = scmp.eq.s32.totalorder %s21, 0
    %p167 = por %p165, %p166
    %p168 = scmp.ne.s32.totalorder %s160, %s162
    %p169 = scmp.eq.s32.totalorder %s26, 3
    %p170 = por %p168, %p169
    %p171 = scmp.ne.s32.totalorder %s162, %s163
    %p172 = scmp.eq.s32.totalorder %s26, 0
    %p173 = por %p171, %p172
    %p174 = scmp.ne.s32.totalorder %s162, %s163
    %p175 = scmp.eq.s32.totalorder %s27, 3
    %p176 = por %p174, %p175
    %p178 = scmp.ne.s32.totalorder %s163, %s177
    %p179 = scmp.eq.s32.totalorder %s27, 0
    %p180 = por %p178, %p179
    %s182 = sadd.s32 %s181, 1
    %p185 = scmp.eq.s32.totalorder %s21, 3
    %p186 = scmp.ne.s32.totalorder %s181, %s183
    %p187 = scmp.eq.s32.totalorder %s21, 0
    %p188 = por %p186, %p187
    %p189 = scmp.ne.s32.totalorder %s181, %s183
    %p190 = scmp.eq.s32.totalorder %s26, 3
    %p191 = por %p189, %p190
    %p192 = scmp.ne.s32.totalorder %s183, %s184
    %p193 = scmp.eq.s32.totalorder %s26, 0
    %p194 = por %p192, %p193
    %p195 = scmp.ne.s32.totalorder %s183, %s184
    %p196 = scmp.eq.s32.totalorder %s27, 3
    %p197 = por %p195, %p196
    %p199 = scmp.ne.s32.totalorder %s184, %s198
    %p200 = scmp.eq.s32.totalorder %s27, 0
    %p201 = por %p199, %p200
    %s203 = sadd.s32 %s202, 1
    %p206 = scmp.eq.s32.totalorder %s21, 3
    %p207 = scmp.ne.s32.totalorder %s202, %s204
    %p208 = scmp.eq.s32.totalorder %s21, 0
    %p209 = por %p207, %p208
    %p210 = scmp.ne.s32.totalorder %s202, %s204
    %p211 = scmp.eq.s32.totalorder %s26, 3
    %p212 = por %p210, %p211
    %p213 = scmp.ne.s32.totalorder %s204, %s205
    %p214 = scmp.eq.s32.totalorder %s26, 0
    %p215 = por %p213, %p214
    %p216 = scmp.ne.s32.totalorder %s204, %s205
    %p217 = scmp.eq.s32.totalorder %s27, 3
    %p218 = por %p216, %p217
    %p220 = scmp.ne.s32.totalorder %s205, %s219
    %p221 = scmp.eq.s32.totalorder %s27, 0
    %p222 = por %p220, %p221
    %s224 = sadd.s32 %s223, 1
    %p227 = scmp.eq.s32.totalorder %s21, 3
    %p228 = scmp.ne.s32.totalorder %s223, %s225
    %p229 = scmp.eq.s32.totalorder %s21, 0
    %p230 = por %p228, %p229
    %p231 = scmp.ne.s32.totalorder %s223, %s225
    %p232 = scmp.eq.s32.totalorder %s26, 3
    %p233 = por %p231, %p232
    %p234 = scmp.ne.s32.totalorder %s225, %s226
    %p235 = scmp.eq.s32.totalorder %s26, 0
    %p236 = por %p234, %p235
    %p237 = scmp.ne.s32.totalorder %s225, %s226
    %p238 = scmp.eq.s32.totalorder %s27, 3
    %p239 = por %p237, %p238
    %p241 = scmp.ne.s32.totalorder %s226, %s240
    %p242 = scmp.eq.s32.totalorder %s27, 0
    %p243 = por %p241, %p242
    %s245 = sadd.s32 %s244, 1
    %p248 = scmp.eq.s32.totalorder %s21, 3
    %p249 = scmp.ne.s32.totalorder %s244, %s246
    %p250 = scmp.eq.s32.totalorder %s21, 0
    %p251 = por %p249, %p250
    %p252 = scmp.ne.s32.totalorder %s244, %s246
    %p253 = scmp.eq.s32.totalorder %s26, 3
    %p254 = por %p252, %p253
    %p255 = scmp.ne.s32.totalorder %s246, %s247
    %p256 = scmp.eq.s32.totalorder %s26, 0
    %p257 = por %p255, %p256
    %p258 = scmp.ne.s32.totalorder %s246, %s247
    %p259 = scmp.eq.s32.totalorder %s27, 3
    %p260 = por %p258, %p259
    %p262 = scmp.ne.s32.totalorder %s247, %s261
    %p263 = scmp.eq.s32.totalorder %s27, 0
    %p264 = por %p262, %p263
    %s266 = sadd.s32 %s265, 1
    %p269 = scmp.eq.s32.totalorder %s21, 3
    %p270 = scmp.ne.s32.totalorder %s265, %s267
    %p271 = scmp.eq.s32.totalorder %s21, 0
    %p272 = por %p270, %p271
    %p273 = scmp.ne.s32.totalorder %s265, %s267
    %p274 = scmp.eq.s32.totalorder %s26, 3
    %p275 = por %p273, %p274
    %p276 = scmp.ne.s32.totalorder %s267, %s268
    %p277 = scmp.eq.s32.totalorder %s26, 0
    %p278 = por %p276, %p277
    %p279 = scmp.ne.s32.totalorder %s267, %s268
    %p280 = scmp.eq.s32.totalorder %s27, 3
    %p281 = por %p279, %p280
    %p283 = scmp.ne.s32.totalorder %s268, %s282
    %p284 = scmp.eq.s32.totalorder %s27, 0
    %p285 = por %p283, %p284
    %s287 = sadd.s32 %s286, 1
    %p290 = scmp.eq.s32.totalorder %s21, 3
    %p291 = scmp.ne.s32.totalorder %s286, %s288
    %p292 = scmp.eq.s32.totalorder %s21, 0
    %p293 = por %p291, %p292
    %p294 = scmp.ne.s32.totalorder %s286, %s288
    %p295 = scmp.eq.s32.totalorder %s26, 3
    %p296 = por %p294, %p295
    %p297 = scmp.ne.s32.totalorder %s288, %s289
    %p298 = scmp.eq.s32.totalorder %s26, 0
    %p299 = por %p297, %p298
    %p300 = scmp.ne.s32.totalorder %s288, %s289
    %p301 = scmp.eq.s32.totalorder %s27, 3
    %p302 = por %p300, %p301
    %p304 = scmp.ne.s32.totalorder %s289, %s303
    %p305 = scmp.eq.s32.totalorder %s27, 0
    %p306 = por %p304, %p305
    %s308 = sadd.s32 %s307, 1
    %p311 = scmp.eq.s32.totalorder %s21, 3
    %p312 = scmp.ne.s32.totalorder %s307, %s309
    %p313 = scmp.eq.s32.totalorder %s21, 0
    %p314 = por %p312, %p313
    %p315 = scmp.ne.s32.totalorder %s307, %s309
    %p316 = scmp.eq.s32.totalorder %s26, 3
    %p317 = por %p315, %p316
    %p318 = scmp.ne.s32.totalorder %s309, %s310
    %p319 = scmp.eq.s32.totalorder %s26, 0
    %p320 = por %p318, %p319
    %p321 = scmp.ne.s32.totalorder %s309, %s310
    %p322 = scmp.eq.s32.totalorder %s27, 3
    %p323 = por %p321, %p322
    %p325 = scmp.ne.s32.totalorder %s310, %s324
    %p326 = scmp.eq.s32.totalorder %s27, 0
    %p327 = por %p325, %p326
    %s329 = sadd.s32 %s328, 1
    %p332 = scmp.eq.s32.totalorder %s21, 3
    %p333 = scmp.ne.s32.totalorder %s328, %s330
    %p334 = scmp.eq.s32.totalorder %s21, 0
    %p335 = por %p333, %p334
    %p336 = scmp.ne.s32.totalorder %s328, %s330
    %p337 = scmp.eq.s32.totalorder %s26, 3
    %p338 = por %p336, %p337
    %p339 = scmp.ne.s32.totalorder %s330, %s331
    %p340 = scmp.eq.s32.totalorder %s26, 0
    %p341 = por %p339, %p340
    %p342 = scmp.ne.s32.totalorder %s330, %s331
    %p343 = scmp.eq.s32.totalorder %s27, 3
    %p344 = por %p342, %p343
    %p346 = scmp.ne.s32.totalorder %s331, %s345
    %p347 = scmp.eq.s32.totalorder %s27, 0
    %p348 = por %p346, %p347
    %s349 = ssub.s32 %s21, %s28
    %p350 = scmp.eq.s32.totalorder %s349, 0
    %s352 = sadd.s32 %s351, 1
    %s353 = scalar_select %p350, %s351, %s352
    %p356 = pneg %p350
    %p357 = scmp.eq.s32.totalorder %s21, 3
    %p358 = por %p356, %p357
    %p359 = scmp.ne.s32.totalorder %s351, %s354
    %p360 = scmp.eq.s32.totalorder %s21, 0
    %p361 = por %p359, %p360
    %p362 = scmp.ne.s32.totalorder %s351, %s354
    %p363 = scmp.eq.s32.totalorder %s26, 3
    %p364 = por %p362, %p363
    %p365 = scmp.ne.s32.totalorder %s354, %s355
    %p366 = scmp.eq.s32.totalorder %s26, 0
    %p367 = por %p365, %p366
    %p368 = scmp.ne.s32.totalorder %s354, %s355
    %p369 = scmp.eq.s32.totalorder %s27, 3
    %p370 = por %p368, %p369
    %p372 = scmp.ne.s32.totalorder %s355, %s371
    %p373 = scmp.eq.s32.totalorder %s27, 0
    %p374 = por %p372, %p373
    %p375 = scmp.le.s32.totalorder 1, %s21
    %p376 = scmp.lt.s32.totalorder %s21, 5
    %p377 = pnand %p375, %p376
    %p378 = pneg %p377
    // Predicated region
    $region9: #{bn_lenet5_forward.1} parent=5 // pred_check
      _
    $region10: #{bn_lenet5_forward.1} parent=5 // pred_check_branch
      %380 = sbr.rel (%p377) target = $region12
    $region11: #{bn_lenet5_forward.1} parent=5 // pred_region
      %s381 = ssub.s32 %s21, 1
      // Predicated region
      $region13: #{bn_lenet5_forward.1} parent=11 // pred_check
        %p382 = pneg %p68
      $region14: #{bn_lenet5_forward.1} parent=11 // pred_check_branch
        %384 = sbr.rel (%p382) target = $region16
      $region15: #{bn_lenet5_forward.1} parent=11 // pred_region
        _
      $region16: #{bn_lenet5_forward.1} parent=11 // pred_fallthru
        _
      // Predicated region
      $region17: #{bn_lenet5_forward.1} parent=11 // pred_check
        %p385 = pneg %p89
      $region18: #{bn_lenet5_forward.1} parent=11 // pred_check_branch
        %387 = sbr.rel (%p385) target = $region20
      $region19: #{bn_lenet5_forward.1} parent=11 // pred_region
        _
      $region20: #{bn_lenet5_forward.1} parent=11 // pred_fallthru
        _
      // Predicated region
      $region21: #{bn_lenet5_forward.1} parent=11 // pred_check
        %p388 = pneg %p110
      $region22: #{bn_lenet5_forward.1} parent=11 // pred_check_branch
        %390 = sbr.rel (%p388) target = $region24
      $region23: #{bn_lenet5_forward.1} parent=11 // pred_region
        _
      $region24: #{bn_lenet5_forward.1} parent=11 // pred_fallthru
        _
      // Predicated region
      $region25: #{bn_lenet5_forward.1} parent=11 // pred_check
        %p391 = pneg %p131
      $region26: #{bn_lenet5_forward.1} parent=11 // pred_check_branch
        %393 = sbr.rel (%p391) target = $region28
      $region27: #{bn_lenet5_forward.1} parent=11 // pred_region
        _
      $region28: #{bn_lenet5_forward.1} parent=11 // pred_fallthru
        _
      // Predicated region
      $region29: #{bn_lenet5_forward.1} parent=11 // pred_check
        %p394 = pneg %p152
      $region30: #{bn_lenet5_forward.1} parent=11 // pred_check_branch
        %396 = sbr.rel (%p394) target = $region32
      $region31: #{bn_lenet5_forward.1} parent=11 // pred_region
        _
      $region32: #{bn_lenet5_forward.1} parent=11 // pred_fallthru
        _
      // Predicated region
      $region33: #{bn_lenet5_forward.1} parent=11 // pred_check
        %p397 = pneg %p173
      $region34: #{bn_lenet5_forward.1} parent=11 // pred_check_branch
        %399 = sbr.rel (%p397) target = $region36
      $region35: #{bn_lenet5_forward.1} parent=11 // pred_region
        _
      $region36: #{bn_lenet5_forward.1} parent=11 // pred_fallthru
        _
      // Predicated region
      $region37: #{bn_lenet5_forward.1} parent=11 // pred_check
        %p400 = pneg %p194
      $region38: #{bn_lenet5_forward.1} parent=11 // pred_check_branch
        %402 = sbr.rel (%p400) target = $region40
      $region39: #{bn_lenet5_forward.1} parent=11 // pred_region
        _
      $region40: #{bn_lenet5_forward.1} parent=11 // pred_fallthru
        _
      // Predicated region
      $region41: #{bn_lenet5_forward.1} parent=11 // pred_check
        %p403 = pneg %p215
      $region42: #{bn_lenet5_forward.1} parent=11 // pred_check_branch
        %405 = sbr.rel (%p403) target = $region44
      $region43: #{bn_lenet5_forward.1} parent=11 // pred_region
        _
      $region44: #{bn_lenet5_forward.1} parent=11 // pred_fallthru
        _
      // Predicated region
      $region45: #{bn_lenet5_forward.1} parent=11 // pred_check
        %p406 = pneg %p236
      $region46: #{bn_lenet5_forward.1} parent=11 // pred_check_branch
        %408 = sbr.rel (%p406) target = $region48
      $region47: #{bn_lenet5_forward.1} parent=11 // pred_region
        _
      $region48: #{bn_lenet5_forward.1} parent=11 // pred_fallthru
        _
      // Predicated region
      $region49: #{bn_lenet5_forward.1} parent=11 // pred_check
        %p409 = pneg %p257
      $region50: #{bn_lenet5_forward.1} parent=11 // pred_check_branch
        %411 = sbr.rel (%p409) target = $region52
      $region51: #{bn_lenet5_forward.1} parent=11 // pred_region
        _
      $region52: #{bn_lenet5_forward.1} parent=11 // pred_fallthru
        _
      // Predicated region
      $region53: #{bn_lenet5_forward.1} parent=11 // pred_check
        %p412 = pneg %p278
      $region54: #{bn_lenet5_forward.1} parent=11 // pred_check_branch
        %414 = sbr.rel (%p412) target = $region56
      $region55: #{bn_lenet5_forward.1} parent=11 // pred_region
        _
      $region56: #{bn_lenet5_forward.1} parent=11 // pred_fallthru
        _
      // Predicated region
      $region57: #{bn_lenet5_forward.1} parent=11 // pred_check
        %p415 = pneg %p299
      $region58: #{bn_lenet5_forward.1} parent=11 // pred_check_branch
        %417 = sbr.rel (%p415) target = $region60
      $region59: #{bn_lenet5_forward.1} parent=11 // pred_region
        _
      $region60: #{bn_lenet5_forward.1} parent=11 // pred_fallthru
        _
      // Predicated region
      $region61: #{bn_lenet5_forward.1} parent=11 // pred_check
        %p418 = pneg %p320
      $region62: #{bn_lenet5_forward.1} parent=11 // pred_check_branch
        %420 = sbr.rel (%p418) target = $region64
      $region63: #{bn_lenet5_forward.1} parent=11 // pred_region
        _
      $region64: #{bn_lenet5_forward.1} parent=11 // pred_fallthru
        _
      // Predicated region
      $region65: #{bn_lenet5_forward.1} parent=11 // pred_check
        %p421 = pneg %p341
      $region66: #{bn_lenet5_forward.1} parent=11 // pred_check_branch
        %423 = sbr.rel (%p421) target = $region68
      $region67: #{bn_lenet5_forward.1} parent=11 // pred_region
        _
      $region68: #{bn_lenet5_forward.1} parent=11 // pred_fallthru
        _
    $region12: #{bn_lenet5_forward.1} parent=5 // pred_fallthru
      _
    %p424 = scmp.lt.s32.totalorder %s21, 4
    // Predicated region
    $region69: #{bn_lenet5_forward.1} parent=5 // pred_check
      %p425 = pneg %p424
    $region70: #{bn_lenet5_forward.1} parent=5 // pred_check_branch
      %427 = sbr.rel (%p425) target = $region72
    $region71: #{bn_lenet5_forward.1} parent=5 // pred_region
      // Predicated region
      $region73: #{bn_lenet5_forward.1} parent=71 // pred_check
        %p428 = pneg %p41
      $region74: #{bn_lenet5_forward.1} parent=71 // pred_check_branch
        %430 = sbr.rel (%p428) target = $region76
      $region75: #{bn_lenet5_forward.1} parent=71 // pred_region
        %s431 = smul.u32 96, %s21
        %p432 = scmp.lt.s32.totalorder %s431, 383
        %s433 = scalar_select %p432, %s431, 383
        %s434 = smul.addr %s433, 2
        %s435 = smul.addr %s434, 4
        %s436 = scalar_lea.vmem %s0, %s435
        %s437 = smul.u32 96, %s21
      $region76: #{bn_lenet5_forward.1} parent=71 // pred_fallthru
        _
    $region72: #{bn_lenet5_forward.1} parent=5 // pred_fallthru
      _
    %p438 = scmp.le.s32.totalorder 1, %s21
    %p439 = scmp.lt.s32.totalorder %s21, 5
    %p440 = pnand %p438, %p439
    %p441 = pneg %p440
    // Predicated region
    $region77: #{bn_lenet5_forward.1} parent=5 // pred_check
      _
    $region78: #{bn_lenet5_forward.1} parent=5 // pred_check_branch
      %443 = sbr.rel (%p440) target = $region80
    $region79: #{bn_lenet5_forward.1} parent=5 // pred_region
      %s444 = ssub.s32 %s21, 1
      %s445 = smul.u32 96, %s26
      %p446 = scmp.lt.s32.totalorder %s445, 383
      %s447 = scalar_select %p446, %s445, 383
      %s448 = smul.addr %s447, 2
      %s449 = smul.addr %s448, 4
      %s450 = scalar_lea.vmem %s0, %s449
      %p451 = pneg %p47
      %p452 = pneg %p44
      %p453 = pneg %p68
      %p454 = pneg %p65
      %p455 = pneg %p89
      %p456 = pneg %p86
      %p457 = pneg %p110
      %p458 = pneg %p107
      %p459 = pneg %p131
      %p460 = pneg %p128
      %p461 = pneg %p152
      %p462 = pneg %p149
      %p463 = pneg %p173
      %p464 = pneg %p170
      %p465 = pneg %p194
      %p466 = pneg %p191
      %p467 = pneg %p215
      %p468 = pneg %p212
      %p469 = pneg %p236
      %p470 = pneg %p233
      %p471 = pneg %p257
      %p472 = pneg %p254
      %p473 = pneg %p278
      %p474 = pneg %p275
      %p475 = pneg %p299
      %p476 = pneg %p296
      %p477 = pneg %p320
      %p478 = pneg %p317
      %p479 = pneg %p341
      %p480 = pneg %p338
      %p481 = pneg %p367
      %p482 = pneg %p364
      %s483 = smul.u32 8, %s26
      %p484 = scmp.lt.s32.totalorder %s483, 31
      %s485 = scalar_select %p484, %s483, 31
      %s486 = smul.addr %s485, 8
      %s487 = scalar_lea.vmem %s15, %s486
      %s488 = smul.u32 96, %s26
      %p489 = scmp.lt.s32.totalorder %s488, 383
      %s490 = scalar_select %p489, %s488, 383
      %s491 = smul.addr %s490, 2
      %s492 = smul.addr %s491, 4
      %s493 = scalar_lea.vmem %s0, %s492
      %s494 = smul.u32 96, %s26
      %s495 = smul.u32 8, %s26
      %p496 = scmp.lt.s32.totalorder %s495, 31
      %s497 = scalar_select %p496, %s495, 31
      %s498 = smul.addr %s497, 8
      %s499 = scalar_lea.vmem %s15, %s498
      %s500 = smul.u32 8, %s26
      loop: start=0, step=1, limit=12
      $region81: #{bn_lenet5_forward.1} parent=79 // loop_pre_header
        _
      $region82: #{bn_lenet5_forward.1} parent=79 // loop_header
        %s502 = sphi 0, %s506
        %p503 = scmp.ge.s32.totalorder %s502, 12
      $region83: #{bn_lenet5_forward.1} parent=79 // loop_header_branch
        %505 = sbr.rel (%p503) target = $region87
      $region84: #{bn_lenet5_forward.1} parent=79 // loop_body
        %s507 = smul.u32 %s502, 64
        %s508 = sshra.s32 %s507, 3
        %s509 = sand.u32 %s507, 7
        %s510 = smul.u32 %s508, 2
        %s511 = smul.addr %s510, 4
        %s512 = scalar_lea.vmem %s493, %s511
        %v513 = vld [vmem:[%s512] sm:$0xff]
        %v514 = vld [vmem:[%s512 + $0x8] sm:$0xff]
        %v515 = vld [vmem:[%s512 + $0x10] sm:$0xff]
        %v516 = vld [vmem:[%s512 + $0x18] sm:$0xff]
        %v517 = vld [vmem:[%s512 + $0x20] sm:$0xff]
        %v518 = vld [vmem:[%s512 + $0x28] sm:$0xff]
        %v519 = vld [vmem:[%s512 + $0x30] sm:$0xff]
        %v520 = vld [vmem:[%s512 + $0x38] sm:$0xff]
        %v521 = vld [vmem:[%s1] sm:$0xf]
        %v522 = vld [vmem:[%s1 + $0x10] sm:$0xf]
        %v523 = vld [vmem:[%s1 + $0x20] sm:$0xf]
        %v524 = vld [vmem:[%s1 + $0x30] sm:$0xf]
        %v525 = vld [vmem:[%s1 + $0x40] sm:$0xf]
        %v526 = vld [vmem:[%s1 + $0x50] sm:$0xf]
        %v527 = vld [vmem:[%s1 + $0x60] sm:$0xf]
        %v528 = vld [vmem:[%s1 + $0x70] sm:$0xf]
        %v529 = vld [vmem:[%s1 + $0x80] sm:$0xf]
        %v530 = vld [vmem:[%s1 + $0x90] sm:$0xf]
        %v531 = vld [vmem:[%s1 + $0xa0] sm:$0xf]
        %v532 = vld [vmem:[%s1 + $0xb0] sm:$0xf]
        %v533 = vld [vmem:[%s1 + $0xc0] sm:$0xf]
        %v534 = vld [vmem:[%s1 + $0xd0] sm:$0xf]
        %v535 = vld [vmem:[%s1 + $0xe0] sm:$0xf]
        %v536 = vld [vmem:[%s1 + $0xf0] sm:$0xf]
        %v537 = vld [vmem:[%s1 + $0x100] sm:$0xf]
        %v538 = vld [vmem:[%s1 + $0x110] sm:$0xf]
        %v539 = vld [vmem:[%s1 + $0x120] sm:$0xf]
        %v540 = vld [vmem:[%s1 + $0x130] sm:$0xf]
        %v541 = vld [vmem:[%s1 + $0x140] sm:$0xf]
        %v542 = vld [vmem:[%s1 + $0x150] sm:$0xf]
        %v543 = vld [vmem:[%s1 + $0x160] sm:$0xf]
        %v544 = vld [vmem:[%s1 + $0x170] sm:$0xf]
        %v545 = vld [vmem:[%s1 + $0x180] sm:$0xf]
        %v546 = vld [vmem:[%s1 + $0x190] sm:$0xf]
        %v547 = vld [vmem:[%s1 + $0x1a0] sm:$0xf]
        %v548 = vld [vmem:[%s1 + $0x1b0] sm:$0xf]
        %v549 = vld [vmem:[%s1 + $0x1c0] sm:$0xf]
        %v550 = vld [vmem:[%s1 + $0x1d0] sm:$0xf]
        %v551 = vld [vmem:[%s1 + $0x1e0] sm:$0xf]
        %v552 = vld [vmem:[%s1 + $0x1f0] sm:$0xf]
        %v561 = vunpack.c.l.b16 %v513
        %v562 = vunpack.c.h.b16 %v513
        %v563 = vunpack.c.l.b16 %v514
        %v564 = vunpack.c.h.b16 %v514
        %v565 = vunpack.c.l.b16 %v515
        %v566 = vunpack.c.h.b16 %v515
        %v567 = vunpack.c.l.b16 %v516
        %v568 = vunpack.c.h.b16 %v516
        %v569 = vunpack.c.l.b16 %v517
        %v570 = vunpack.c.h.b16 %v517
        %v571 = vunpack.c.l.b16 %v518
        %v572 = vunpack.c.h.b16 %v518
        %v573 = vunpack.c.l.b16 %v519
        %v574 = vunpack.c.h.b16 %v519
        %v575 = vunpack.c.l.b16 %v520
        %v576 = vunpack.c.h.b16 %v520
        %v577 = vpack.c.b16 %v563, %v561
        %v578 = vpack.c.b16 %v564, %v562
        %v579 = vpack.c.b16 %v567, %v565
        %v580 = vpack.c.b16 %v568, %v566
        %v581 = vpack.c.b16 %v571, %v569
        %v582 = vpack.c.b16 %v572, %v570
        %v583 = vpack.c.b16 %v575, %v573
        %v584 = vpack.c.b16 %v576, %v574
        %v625 = vunpack.c.l.b16 %v521
        %v626 = vunpack.c.l.b16 %v522
        %v627 = vunpack.c.l.b16 %v523
        %v628 = vunpack.c.l.b16 %v524
        %v629 = vunpack.c.l.b16 %v525
        %v630 = vunpack.c.l.b16 %v526
        %v631 = vunpack.c.l.b16 %v527
        %v632 = vunpack.c.l.b16 %v528
        %v633 = vunpack.c.l.b16 %v529
        %v634 = vunpack.c.l.b16 %v530
        %v635 = vunpack.c.l.b16 %v531
        %v636 = vunpack.c.l.b16 %v532
        %v637 = vunpack.c.l.b16 %v533
        %v638 = vunpack.c.l.b16 %v534
        %v639 = vunpack.c.l.b16 %v535
        %v640 = vunpack.c.l.b16 %v536
        %v641 = vunpack.c.l.b16 %v537
        %v642 = vunpack.c.l.b16 %v538
        %v643 = vunpack.c.l.b16 %v539
        %v644 = vunpack.c.l.b16 %v540
        %v645 = vunpack.c.l.b16 %v541
        %v646 = vunpack.c.l.b16 %v542
        %v647 = vunpack.c.l.b16 %v543
        %v648 = vunpack.c.l.b16 %v544
        %v649 = vunpack.c.l.b16 %v545
        %v650 = vunpack.c.l.b16 %v546
        %v651 = vunpack.c.l.b16 %v547
        %v652 = vunpack.c.l.b16 %v548
        %v653 = vunpack.c.l.b16 %v549
        %v654 = vunpack.c.l.b16 %v550
        %v655 = vunpack.c.l.b16 %v551
        %v656 = vunpack.c.l.b16 %v552
        %v657 = vpack.c.b16 %v626, %v625
        %v658 = vpack.c.b16 %v628, %v627
        %v659 = vpack.c.b16 %v630, %v629
        %v660 = vpack.c.b16 %v632, %v631
        %v661 = vpack.c.b16 %v634, %v633
        %v662 = vpack.c.b16 %v636, %v635
        %v663 = vpack.c.b16 %v638, %v637
        %v664 = vpack.c.b16 %v640, %v639
        %v665 = vpack.c.b16 %v642, %v641
        %v666 = vpack.c.b16 %v644, %v643
        %v667 = vpack.c.b16 %v646, %v645
        %v668 = vpack.c.b16 %v648, %v647
        %v669 = vpack.c.b16 %v650, %v649
        %v670 = vpack.c.b16 %v652, %v651
        %v671 = vpack.c.b16 %v654, %v653
        %v672 = vpack.c.b16 %v656, %v655
        %689 = vmatpush.bf16.msra.mxu0 %v664
        %690 = vmatpush.bf16.msra.mxu0 %v663
        %691 = vmatpush.bf16.msra.mxu0 %v662
        %692 = vmatpush.bf16.msra.mxu0 %v661
        %693 = vmatpush.bf16.msra.mxu0 %v660
        %694 = vmatpush.bf16.msra.mxu0 %v659
        %695 = vmatpush.bf16.msra.mxu0 %v658
        %696 = vmatpush.bf16.msra.mxu0 %v657
        %697 = vmatmul.bf16.gmra.mxu0 %v577
        %v698 = vpop.f32.mrf.mxu0
        %v699 = vadd.f32 0.0, %v698
        %v700 = vpop.f32.mrf.mxu0
        %v701 = vadd.f32 0.0, %v700
        %702 = vmatmul.bf16.gmra.mxu0 %v579
        %v703 = vpop.f32.mrf.mxu0
        %v704 = vadd.f32 0.0, %v703
        %v705 = vpop.f32.mrf.mxu0
        %v706 = vadd.f32 0.0, %v705
        %707 = vmatmul.bf16.gmra.mxu0 %v581
        %v708 = vpop.f32.mrf.mxu0
        %v709 = vadd.f32 0.0, %v708
        %v710 = vpop.f32.mrf.mxu0
        %v711 = vadd.f32 0.0, %v710
        %712 = vmatmul.bf16.gmra.mxu0 %v583
        %v713 = vpop.f32.mrf.mxu0
        %v714 = vadd.f32 0.0, %v713
        %v715 = vpop.f32.mrf.mxu0
        %v716 = vadd.f32 0.0, %v715
        %717 = vdwg.mxu0
        %718 = vmatpush.bf16.msra.mxu0 %v672
        %719 = vmatpush.bf16.msra.mxu0 %v671
        %720 = vmatpush.bf16.msra.mxu0 %v670
        %721 = vmatpush.bf16.msra.mxu0 %v669
        %722 = vmatpush.bf16.msra.mxu0 %v668
        %723 = vmatpush.bf16.msra.mxu0 %v667
        %724 = vmatpush.bf16.msra.mxu0 %v666
        %725 = vmatpush.bf16.msra.mxu0 %v665
        %726 = vmatmul.bf16.gmra.mxu0 %v578
        %v727 = vpop.f32.mrf.mxu0
        %v728 = vadd.f32 %v699, %v727
        %v729 = vpop.f32.mrf.mxu0
        %v730 = vadd.f32 %v701, %v729
        %731 = vmatmul.bf16.gmra.mxu0 %v580
        %v732 = vpop.f32.mrf.mxu0
        %v733 = vadd.f32 %v704, %v732
        %v734 = vpop.f32.mrf.mxu0
        %v735 = vadd.f32 %v706, %v734
        %736 = vmatmul.bf16.gmra.mxu0 %v582
        %v737 = vpop.f32.mrf.mxu0
        %v738 = vadd.f32 %v709, %v737
        %v739 = vpop.f32.mrf.mxu0
        %v740 = vadd.f32 %v711, %v739
        %741 = vmatmul.bf16.gmra.mxu0 %v584
        %v742 = vpop.f32.mrf.mxu0
        %v743 = vadd.f32 %v714, %v742
        %v744 = vpop.f32.mrf.mxu0
        %v745 = vadd.f32 %v716, %v744
        %746 = vdwg.mxu0
        %v747 = vld [vmem:[%s1 + $0x4] sm:$0xf]
        %v748 = vld [vmem:[%s1 + $0x14] sm:$0xf]
        %v749 = vld [vmem:[%s1 + $0x24] sm:$0xf]
        %v750 = vld [vmem:[%s1 + $0x34] sm:$0xf]
        %v751 = vld [vmem:[%s1 + $0x44] sm:$0xf]
        %v752 = vld [vmem:[%s1 + $0x54] sm:$0xf]
        %v753 = vld [vmem:[%s1 + $0x64] sm:$0xf]
        %v754 = vld [vmem:[%s1 + $0x74] sm:$0xf]
        %v755 = vld [vmem:[%s1 + $0x84] sm:$0xf]
        %v756 = vld [vmem:[%s1 + $0x94] sm:$0xf]
        %v757 = vld [vmem:[%s1 + $0xa4] sm:$0xf]
        %v758 = vld [vmem:[%s1 + $0xb4] sm:$0xf]
        %v759 = vld [vmem:[%s1 + $0xc4] sm:$0xf]
        %v760 = vld [vmem:[%s1 + $0xd4] sm:$0xf]
        %v761 = vld [vmem:[%s1 + $0xe4] sm:$0xf]
        %v762 = vld [vmem:[%s1 + $0xf4] sm:$0xf]
        %v763 = vld [vmem:[%s1 + $0x104] sm:$0xf]
        %v764 = vld [vmem:[%s1 + $0x114] sm:$0xf]
        %v765 = vld [vmem:[%s1 + $0x124] sm:$0xf]
        %v766 = vld [vmem:[%s1 + $0x134] sm:$0xf]
        %v767 = vld [vmem:[%s1 + $0x144] sm:$0xf]
        %v768 = vld [vmem:[%s1 + $0x154] sm:$0xf]
        %v769 = vld [vmem:[%s1 + $0x164] sm:$0xf]
        %v770 = vld [vmem:[%s1 + $0x174] sm:$0xf]
        %v771 = vld [vmem:[%s1 + $0x184] sm:$0xf]
        %v772 = vld [vmem:[%s1 + $0x194] sm:$0xf]
        %v773 = vld [vmem:[%s1 + $0x1a4] sm:$0xf]
        %v774 = vld [vmem:[%s1 + $0x1b4] sm:$0xf]
        %v775 = vld [vmem:[%s1 + $0x1c4] sm:$0xf]
        %v776 = vld [vmem:[%s1 + $0x1d4] sm:$0xf]
        %v777 = vld [vmem:[%s1 + $0x1e4] sm:$0xf]
        %v778 = vld [vmem:[%s1 + $0x1f4] sm:$0xf]
        %v811 = vunpack.c.l.b16 %v747
        %v812 = vunpack.c.l.b16 %v748
        %v813 = vunpack.c.l.b16 %v749
        %v814 = vunpack.c.l.b16 %v750
        %v815 = vunpack.c.l.b16 %v751
        %v816 = vunpack.c.l.b16 %v752
        %v817 = vunpack.c.l.b16 %v753
        %v818 = vunpack.c.l.b16 %v754
        %v819 = vunpack.c.l.b16 %v755
        %v820 = vunpack.c.l.b16 %v756
        %v821 = vunpack.c.l.b16 %v757
        %v822 = vunpack.c.l.b16 %v758
        %v823 = vunpack.c.l.b16 %v759
        %v824 = vunpack.c.l.b16 %v760
        %v825 = vunpack.c.l.b16 %v761
        %v826 = vunpack.c.l.b16 %v762
        %v827 = vunpack.c.l.b16 %v763
        %v828 = vunpack.c.l.b16 %v764
        %v829 = vunpack.c.l.b16 %v765
        %v830 = vunpack.c.l.b16 %v766
        %v831 = vunpack.c.l.b16 %v767
        %v832 = vunpack.c.l.b16 %v768
        %v833 = vunpack.c.l.b16 %v769
        %v834 = vunpack.c.l.b16 %v770
        %v835 = vunpack.c.l.b16 %v771
        %v836 = vunpack.c.l.b16 %v772
        %v837 = vunpack.c.l.b16 %v773
        %v838 = vunpack.c.l.b16 %v774
        %v839 = vunpack.c.l.b16 %v775
        %v840 = vunpack.c.l.b16 %v776
        %v841 = vunpack.c.l.b16 %v777
        %v842 = vunpack.c.l.b16 %v778
        %v843 = vpack.c.b16 %v812, %v811
        %v844 = vpack.c.b16 %v814, %v813
        %v845 = vpack.c.b16 %v816, %v815
        %v846 = vpack.c.b16 %v818, %v817
        %v847 = vpack.c.b16 %v820, %v819
        %v848 = vpack.c.b16 %v822, %v821
        %v849 = vpack.c.b16 %v824, %v823
        %v850 = vpack.c.b16 %v826, %v825
        %v851 = vpack.c.b16 %v828, %v827
        %v852 = vpack.c.b16 %v830, %v829
        %v853 = vpack.c.b16 %v832, %v831
        %v854 = vpack.c.b16 %v834, %v833
        %v855 = vpack.c.b16 %v836, %v835
        %v856 = vpack.c.b16 %v838, %v837
        %v857 = vpack.c.b16 %v840, %v839
        %v858 = vpack.c.b16 %v842, %v841
        %875 = vmatpush.bf16.msra.mxu0 %v850
        %876 = vmatpush.bf16.msra.mxu0 %v849
        %877 = vmatpush.bf16.msra.mxu0 %v848
        %878 = vmatpush.bf16.msra.mxu0 %v847
        %879 = vmatpush.bf16.msra.mxu0 %v846
        %880 = vmatpush.bf16.msra.mxu0 %v845
        %881 = vmatpush.bf16.msra.mxu0 %v844
        %882 = vmatpush.bf16.msra.mxu0 %v843
        %883 = vmatmul.bf16.gmra.mxu0 %v577
        %v884 = vpop.f32.mrf.mxu0
        %v885 = vadd.f32 0.0, %v884
        %v886 = vpop.f32.mrf.mxu0
        %v887 = vadd.f32 0.0, %v886
        %888 = vmatmul.bf16.gmra.mxu0 %v579
        %v889 = vpop.f32.mrf.mxu0
        %v890 = vadd.f32 0.0, %v889
        %v891 = vpop.f32.mrf.mxu0
        %v892 = vadd.f32 0.0, %v891
        %893 = vmatmul.bf16.gmra.mxu0 %v581
        %v894 = vpop.f32.mrf.mxu0
        %v895 = vadd.f32 0.0, %v894
        %v896 = vpop.f32.mrf.mxu0
        %v897 = vadd.f32 0.0, %v896
        %898 = vmatmul.bf16.gmra.mxu0 %v583
        %v899 = vpop.f32.mrf.mxu0
        %v900 = vadd.f32 0.0, %v899
        %v901 = vpop.f32.mrf.mxu0
        %v902 = vadd.f32 0.0, %v901
        %903 = vdwg.mxu0
        %904 = vmatpush.bf16.msra.mxu0 %v858
        %905 = vmatpush.bf16.msra.mxu0 %v857
        %906 = vmatpush.bf16.msra.mxu0 %v856
        %907 = vmatpush.bf16.msra.mxu0 %v855
        %908 = vmatpush.bf16.msra.mxu0 %v854
        %909 = vmatpush.bf16.msra.mxu0 %v853
        %910 = vmatpush.bf16.msra.mxu0 %v852
        %911 = vmatpush.bf16.msra.mxu0 %v851
        %912 = vmatmul.bf16.gmra.mxu0 %v578
        %v913 = vpop.f32.mrf.mxu0
        %v914 = vadd.f32 %v885, %v913
        %v915 = vpop.f32.mrf.mxu0
        %v916 = vadd.f32 %v887, %v915
        %917 = vmatmul.bf16.gmra.mxu0 %v580
        %v918 = vpop.f32.mrf.mxu0
        %v919 = vadd.f32 %v890, %v918
        %v920 = vpop.f32.mrf.mxu0
        %v921 = vadd.f32 %v892, %v920
        %922 = vmatmul.bf16.gmra.mxu0 %v582
        %v923 = vpop.f32.mrf.mxu0
        %v924 = vadd.f32 %v895, %v923
        %v925 = vpop.f32.mrf.mxu0
        %v926 = vadd.f32 %v897, %v925
        %927 = vmatmul.bf16.gmra.mxu0 %v584
        %v928 = vpop.f32.mrf.mxu0
        %v929 = vadd.f32 %v900, %v928
        %v930 = vpop.f32.mrf.mxu0
        %v931 = vadd.f32 %v902, %v930
        %932 = vdwg.mxu0
        %v933 = vmax.f32 %v728, %v914
        %v934 = vmax.f32 %v730, %v916
        %v935 = vmax.f32 %v733, %v919
        %v936 = vmax.f32 %v735, %v921
        %v937 = vmax.f32 %v738, %v924
        %v938 = vmax.f32 %v740, %v926
        %v939 = vmax.f32 %v743, %v929
        %v940 = vmax.f32 %v745, %v931
        %v941 = vld [vmem:[%s1 + $0x8] sm:$0xf]
        %v942 = vld [vmem:[%s1 + $0x18] sm:$0xf]
        %v943 = vld [vmem:[%s1 + $0x28] sm:$0xf]
        %v944 = vld [vmem:[%s1 + $0x38] sm:$0xf]
        %v945 = vld [vmem:[%s1 + $0x48] sm:$0xf]
        %v946 = vld [vmem:[%s1 + $0x58] sm:$0xf]
        %v947 = vld [vmem:[%s1 + $0x68] sm:$0xf]
        %v948 = vld [vmem:[%s1 + $0x78] sm:$0xf]
        %v949 = vld [vmem:[%s1 + $0x88] sm:$0xf]
        %v950 = vld [vmem:[%s1 + $0x98] sm:$0xf]
        %v951 = vld [vmem:[%s1 + $0xa8] sm:$0xf]
        %v952 = vld [vmem:[%s1 + $0xb8] sm:$0xf]
        %v953 = vld [vmem:[%s1 + $0xc8] sm:$0xf]
        %v954 = vld [vmem:[%s1 + $0xd8] sm:$0xf]
        %v955 = vld [vmem:[%s1 + $0xe8] sm:$0xf]
        %v956 = vld [vmem:[%s1 + $0xf8] sm:$0xf]
        %v957 = vld [vmem:[%s1 + $0x108] sm:$0xf]
        %v958 = vld [vmem:[%s1 + $0x118] sm:$0xf]
        %v959 = vld [vmem:[%s1 + $0x128] sm:$0xf]
        %v960 = vld [vmem:[%s1 + $0x138] sm:$0xf]
        %v961 = vld [vmem:[%s1 + $0x148] sm:$0xf]
        %v962 = vld [vmem:[%s1 + $0x158] sm:$0xf]
        %v963 = vld [vmem:[%s1 + $0x168] sm:$0xf]
        %v964 = vld [vmem:[%s1 + $0x178] sm:$0xf]
        %v965 = vld [vmem:[%s1 + $0x188] sm:$0xf]
        %v966 = vld [vmem:[%s1 + $0x198] sm:$0xf]
        %v967 = vld [vmem:[%s1 + $0x1a8] sm:$0xf]
        %v968 = vld [vmem:[%s1 + $0x1b8] sm:$0xf]
        %v969 = vld [vmem:[%s1 + $0x1c8] sm:$0xf]
        %v970 = vld [vmem:[%s1 + $0x1d8] sm:$0xf]
        %v971 = vld [vmem:[%s1 + $0x1e8] sm:$0xf]
        %v972 = vld [vmem:[%s1 + $0x1f8] sm:$0xf]
        %v1005 = vunpack.c.l.b16 %v941
        %v1006 = vunpack.c.l.b16 %v942
        %v1007 = vunpack.c.l.b16 %v943
        %v1008 = vunpack.c.l.b16 %v944
        %v1009 = vunpack.c.l.b16 %v945
        %v1010 = vunpack.c.l.b16 %v946
        %v1011 = vunpack.c.l.b16 %v947
        %v1012 = vunpack.c.l.b16 %v948
        %v1013 = vunpack.c.l.b16 %v949
        %v1014 = vunpack.c.l.b16 %v950
        %v1015 = vunpack.c.l.b16 %v951
        %v1016 = vunpack.c.l.b16 %v952
        %v1017 = vunpack.c.l.b16 %v953
        %v1018 = vunpack.c.l.b16 %v954
        %v1019 = vunpack.c.l.b16 %v955
        %v1020 = vunpack.c.l.b16 %v956
        %v1021 = vunpack.c.l.b16 %v957
        %v1022 = vunpack.c.l.b16 %v958
        %v1023 = vunpack.c.l.b16 %v959
        %v1024 = vunpack.c.l.b16 %v960
        %v1025 = vunpack.c.l.b16 %v961
        %v1026 = vunpack.c.l.b16 %v962
        %v1027 = vunpack.c.l.b16 %v963
        %v1028 = vunpack.c.l.b16 %v964
        %v1029 = vunpack.c.l.b16 %v965
        %v1030 = vunpack.c.l.b16 %v966
        %v1031 = vunpack.c.l.b16 %v967
        %v1032 = vunpack.c.l.b16 %v968
        %v1033 = vunpack.c.l.b16 %v969
        %v1034 = vunpack.c.l.b16 %v970
        %v1035 = vunpack.c.l.b16 %v971
        %v1036 = vunpack.c.l.b16 %v972
        %v1037 = vpack.c.b16 %v1006, %v1005
        %v1038 = vpack.c.b16 %v1008, %v1007
        %v1039 = vpack.c.b16 %v1010, %v1009
        %v1040 = vpack.c.b16 %v1012, %v1011
        %v1041 = vpack.c.b16 %v1014, %v1013
        %v1042 = vpack.c.b16 %v1016, %v1015
        %v1043 = vpack.c.b16 %v1018, %v1017
        %v1044 = vpack.c.b16 %v1020, %v1019
        %v1045 = vpack.c.b16 %v1022, %v1021
        %v1046 = vpack.c.b16 %v1024, %v1023
        %v1047 = vpack.c.b16 %v1026, %v1025
        %v1048 = vpack.c.b16 %v1028, %v1027
        %v1049 = vpack.c.b16 %v1030, %v1029
        %v1050 = vpack.c.b16 %v1032, %v1031
        %v1051 = vpack.c.b16 %v1034, %v1033
        %v1052 = vpack.c.b16 %v1036, %v1035
        %1069 = vmatpush.bf16.msra.mxu0 %v1044
        %1070 = vmatpush.bf16.msra.mxu0 %v1043
        %1071 = vmatpush.bf16.msra.mxu0 %v1042
        %1072 = vmatpush.bf16.msra.mxu0 %v1041
        %1073 = vmatpush.bf16.msra.mxu0 %v1040
        %1074 = vmatpush.bf16.msra.mxu0 %v1039
        %1075 = vmatpush.bf16.msra.mxu0 %v1038
        %1076 = vmatpush.bf16.msra.mxu0 %v1037
        %1077 = vmatmul.bf16.gmra.mxu0 %v577
        %v1078 = vpop.f32.mrf.mxu0
        %v1079 = vadd.f32 0.0, %v1078
        %v1080 = vpop.f32.mrf.mxu0
        %v1081 = vadd.f32 0.0, %v1080
        %1082 = vmatmul.bf16.gmra.mxu0 %v579
        %v1083 = vpop.f32.mrf.mxu0
        %v1084 = vadd.f32 0.0, %v1083
        %v1085 = vpop.f32.mrf.mxu0
        %v1086 = vadd.f32 0.0, %v1085
        %1087 = vmatmul.bf16.gmra.mxu0 %v581
        %v1088 = vpop.f32.mrf.mxu0
        %v1089 = vadd.f32 0.0, %v1088
        %v1090 = vpop.f32.mrf.mxu0
        %v1091 = vadd.f32 0.0, %v1090
        %1092 = vmatmul.bf16.gmra.mxu0 %v583
        %v1093 = vpop.f32.mrf.mxu0
        %v1094 = vadd.f32 0.0, %v1093
        %v1095 = vpop.f32.mrf.mxu0
        %v1096 = vadd.f32 0.0, %v1095
        %1097 = vdwg.mxu0
        %1098 = vmatpush.bf16.msra.mxu0 %v1052
        %1099 = vmatpush.bf16.msra.mxu0 %v1051
        %1100 = vmatpush.bf16.msra.mxu0 %v1050
        %1101 = vmatpush.bf16.msra.mxu0 %v1049
        %1102 = vmatpush.bf16.msra.mxu0 %v1048
        %1103 = vmatpush.bf16.msra.mxu0 %v1047
        %1104 = vmatpush.bf16.msra.mxu0 %v1046
        %1105 = vmatpush.bf16.msra.mxu0 %v1045
        %1106 = vmatmul.bf16.gmra.mxu0 %v578
        %v1107 = vpop.f32.mrf.mxu0
        %v1108 = vadd.f32 %v1079, %v1107
        %v1109 = vpop.f32.mrf.mxu0
        %v1110 = vadd.f32 %v1081, %v1109
        %1111 = vmatmul.bf16.gmra.mxu0 %v580
        %v1112 = vpop.f32.mrf.mxu0
        %v1113 = vadd.f32 %v1084, %v1112
        %v1114 = vpop.f32.mrf.mxu0
        %v1115 = vadd.f32 %v1086, %v1114
        %1116 = vmatmul.bf16.gmra.mxu0 %v582
        %v1117 = vpop.f32.mrf.mxu0
        %v1118 = vadd.f32 %v1089, %v1117
        %v1119 = vpop.f32.mrf.mxu0
        %v1120 = vadd.f32 %v1091, %v1119
        %1121 = vmatmul.bf16.gmra.mxu0 %v584
        %v1122 = vpop.f32.mrf.mxu0
        %v1123 = vadd.f32 %v1094, %v1122
        %v1124 = vpop.f32.mrf.mxu0
        %v1125 = vadd.f32 %v1096, %v1124
        %1126 = vdwg.mxu0
        %v1127 = vld [vmem:[%s1 + $0xc] sm:$0xf]
        %v1128 = vld [vmem:[%s1 + $0x1c] sm:$0xf]
        %v1129 = vld [vmem:[%s1 + $0x2c] sm:$0xf]
        %v1130 = vld [vmem:[%s1 + $0x3c] sm:$0xf]
        %v1131 = vld [vmem:[%s1 + $0x4c] sm:$0xf]
        %v1132 = vld [vmem:[%s1 + $0x5c] sm:$0xf]
        %v1133 = vld [vmem:[%s1 + $0x6c] sm:$0xf]
        %v1134 = vld [vmem:[%s1 + $0x7c] sm:$0xf]
        %v1135 = vld [vmem:[%s1 + $0x8c] sm:$0xf]
        %v1136 = vld [vmem:[%s1 + $0x9c] sm:$0xf]
        %v1137 = vld [vmem:[%s1 + $0xac] sm:$0xf]
        %v1138 = vld [vmem:[%s1 + $0xbc] sm:$0xf]
        %v1139 = vld [vmem:[%s1 + $0xcc] sm:$0xf]
        %v1140 = vld [vmem:[%s1 + $0xdc] sm:$0xf]
        %v1141 = vld [vmem:[%s1 + $0xec] sm:$0xf]
        %v1142 = vld [vmem:[%s1 + $0xfc] sm:$0xf]
        %v1143 = vld [vmem:[%s1 + $0x10c] sm:$0xf]
        %v1144 = vld [vmem:[%s1 + $0x11c] sm:$0xf]
        %v1145 = vld [vmem:[%s1 + $0x12c] sm:$0xf]
        %v1146 = vld [vmem:[%s1 + $0x13c] sm:$0xf]
        %v1147 = vld [vmem:[%s1 + $0x14c] sm:$0xf]
        %v1148 = vld [vmem:[%s1 + $0x15c] sm:$0xf]
        %v1149 = vld [vmem:[%s1 + $0x16c] sm:$0xf]
        %v1150 = vld [vmem:[%s1 + $0x17c] sm:$0xf]
        %v1151 = vld [vmem:[%s1 + $0x18c] sm:$0xf]
        %v1152 = vld [vmem:[%s1 + $0x19c] sm:$0xf]
        %v1153 = vld [vmem:[%s1 + $0x1ac] sm:$0xf]
        %v1154 = vld [vmem:[%s1 + $0x1bc] sm:$0xf]
        %v1155 = vld [vmem:[%s1 + $0x1cc] sm:$0xf]
        %v1156 = vld [vmem:[%s1 + $0x1dc] sm:$0xf]
        %v1157 = vld [vmem:[%s1 + $0x1ec] sm:$0xf]
        %v1158 = vld [vmem:[%s1 + $0x1fc] sm:$0xf]
        %v1191 = vunpack.c.l.b16 %v1127
        %v1192 = vunpack.c.l.b16 %v1128
        %v1193 = vunpack.c.l.b16 %v1129
        %v1194 = vunpack.c.l.b16 %v1130
        %v1195 = vunpack.c.l.b16 %v1131
        %v1196 = vunpack.c.l.b16 %v1132
        %v1197 = vunpack.c.l.b16 %v1133
        %v1198 = vunpack.c.l.b16 %v1134
        %v1199 = vunpack.c.l.b16 %v1135
        %v1200 = vunpack.c.l.b16 %v1136
        %v1201 = vunpack.c.l.b16 %v1137
        %v1202 = vunpack.c.l.b16 %v1138
        %v1203 = vunpack.c.l.b16 %v1139
        %v1204 = vunpack.c.l.b16 %v1140
        %v1205 = vunpack.c.l.b16 %v1141
        %v1206 = vunpack.c.l.b16 %v1142
        %v1207 = vunpack.c.l.b16 %v1143
        %v1208 = vunpack.c.l.b16 %v1144
        %v1209 = vunpack.c.l.b16 %v1145
        %v1210 = vunpack.c.l.b16 %v1146
        %v1211 = vunpack.c.l.b16 %v1147
        %v1212 = vunpack.c.l.b16 %v1148
        %v1213 = vunpack.c.l.b16 %v1149
        %v1214 = vunpack.c.l.b16 %v1150
        %v1215 = vunpack.c.l.b16 %v1151
        %v1216 = vunpack.c.l.b16 %v1152
        %v1217 = vunpack.c.l.b16 %v1153
        %v1218 = vunpack.c.l.b16 %v1154
        %v1219 = vunpack.c.l.b16 %v1155
        %v1220 = vunpack.c.l.b16 %v1156
        %v1221 = vunpack.c.l.b16 %v1157
        %v1222 = vunpack.c.l.b16 %v1158
        %v1223 = vpack.c.b16 %v1192, %v1191
        %v1224 = vpack.c.b16 %v1194, %v1193
        %v1225 = vpack.c.b16 %v1196, %v1195
        %v1226 = vpack.c.b16 %v1198, %v1197
        %v1227 = vpack.c.b16 %v1200, %v1199
        %v1228 = vpack.c.b16 %v1202, %v1201
        %v1229 = vpack.c.b16 %v1204, %v1203
        %v1230 = vpack.c.b16 %v1206, %v1205
        %v1231 = vpack.c.b16 %v1208, %v1207
        %v1232 = vpack.c.b16 %v1210, %v1209
        %v1233 = vpack.c.b16 %v1212, %v1211
        %v1234 = vpack.c.b16 %v1214, %v1213
        %v1235 = vpack.c.b16 %v1216, %v1215
        %v1236 = vpack.c.b16 %v1218, %v1217
        %v1237 = vpack.c.b16 %v1220, %v1219
        %v1238 = vpack.c.b16 %v1222, %v1221
        %1255 = vmatpush.bf16.msra.mxu0 %v1230
        %1256 = vmatpush.bf16.msra.mxu0 %v1229
        %1257 = vmatpush.bf16.msra.mxu0 %v1228
        %1258 = vmatpush.bf16.msra.mxu0 %v1227
        %1259 = vmatpush.bf16.msra.mxu0 %v1226
        %1260 = vmatpush.bf16.msra.mxu0 %v1225
        %1261 = vmatpush.bf16.msra.mxu0 %v1224
        %1262 = vmatpush.bf16.msra.mxu0 %v1223
        %1263 = vmatmul.bf16.gmra.mxu0 %v577
        %v1264 = vpop.f32.mrf.mxu0
        %v1265 = vadd.f32 0.0, %v1264
        %v1266 = vpop.f32.mrf.mxu0
        %v1267 = vadd.f32 0.0, %v1266
        %1268 = vmatmul.bf16.gmra.mxu0 %v579
        %v1269 = vpop.f32.mrf.mxu0
        %v1270 = vadd.f32 0.0, %v1269
        %v1271 = vpop.f32.mrf.mxu0
        %v1272 = vadd.f32 0.0, %v1271
        %1273 = vmatmul.bf16.gmra.mxu0 %v581
        %v1274 = vpop.f32.mrf.mxu0
        %v1275 = vadd.f32 0.0, %v1274
        %v1276 = vpop.f32.mrf.mxu0
        %v1277 = vadd.f32 0.0, %v1276
        %1278 = vmatmul.bf16.gmra.mxu0 %v583
        %v1279 = vpop.f32.mrf.mxu0
        %v1280 = vadd.f32 0.0, %v1279
        %v1281 = vpop.f32.mrf.mxu0
        %v1282 = vadd.f32 0.0, %v1281
        %1283 = vdwg.mxu0
        %1284 = vmatpush.bf16.msra.mxu0 %v1238
        %1285 = vmatpush.bf16.msra.mxu0 %v1237
        %1286 = vmatpush.bf16.msra.mxu0 %v1236
        %1287 = vmatpush.bf16.msra.mxu0 %v1235
        %1288 = vmatpush.bf16.msra.mxu0 %v1234
        %1289 = vmatpush.bf16.msra.mxu0 %v1233
        %1290 = vmatpush.bf16.msra.mxu0 %v1232
        %1291 = vmatpush.bf16.msra.mxu0 %v1231
        %1292 = vmatmul.bf16.gmra.mxu0 %v578
        %v1293 = vpop.f32.mrf.mxu0
        %v1294 = vadd.f32 %v1265, %v1293
        %v1295 = vpop.f32.mrf.mxu0
        %v1296 = vadd.f32 %v1267, %v1295
        %1297 = vmatmul.bf16.gmra.mxu0 %v580
        %v1298 = vpop.f32.mrf.mxu0
        %v1299 = vadd.f32 %v1270, %v1298
        %v1300 = vpop.f32.mrf.mxu0
        %v1301 = vadd.f32 %v1272, %v1300
        %1302 = vmatmul.bf16.gmra.mxu0 %v582
        %v1303 = vpop.f32.mrf.mxu0
        %v1304 = vadd.f32 %v1275, %v1303
        %v1305 = vpop.f32.mrf.mxu0
        %v1306 = vadd.f32 %v1277, %v1305
        %1307 = vmatmul.bf16.gmra.mxu0 %v584
        %v1308 = vpop.f32.mrf.mxu0
        %v1309 = vadd.f32 %v1280, %v1308
        %v1310 = vpop.f32.mrf.mxu0
        %v1311 = vadd.f32 %v1282, %v1310
        %1312 = vdwg.mxu0
        %v1313 = vmax.f32 %v1108, %v1294
        %v1314 = vmax.f32 %v1110, %v1296
        %v1315 = vmax.f32 %v1113, %v1299
        %v1316 = vmax.f32 %v1115, %v1301
        %v1317 = vmax.f32 %v1118, %v1304
        %v1318 = vmax.f32 %v1120, %v1306
        %v1319 = vmax.f32 %v1123, %v1309
        %v1320 = vmax.f32 %v1125, %v1311
        %v1321 = vmax.f32 %v933, %v1313
        %v1322 = vmax.f32 %v934, %v1314
        %v1323 = vmax.f32 %v935, %v1315
        %v1324 = vmax.f32 %v936, %v1316
        %v1325 = vmax.f32 %v937, %v1317
        %v1326 = vmax.f32 %v938, %v1318
        %v1327 = vmax.f32 %v939, %v1319
        %v1328 = vmax.f32 %v940, %v1320
        %v1329 = vmax.f32 %v1321, 0.0
        %v1330 = vmax.f32 %v1322, 0.0
        %v1331 = vmax.f32 %v1323, 0.0
        %v1332 = vmax.f32 %v1324, 0.0
        %v1333 = vmax.f32 %v1325, 0.0
        %v1334 = vmax.f32 %v1326, 0.0
        %v1335 = vmax.f32 %v1327, 0.0
        %v1336 = vmax.f32 %v1328, 0.0
        %v1337 = vld [vmem:[%s2] sm:$0x1]
        %v1339 = vperm.slane %v1337, 0
        %v1341 = vmul.f32 %v1329, %v1339
        %v1342 = vmul.f32 %v1330, %v1339
        %v1343 = vmul.f32 %v1331, %v1339
        %v1344 = vmul.f32 %v1332, %v1339
        %v1345 = vmul.f32 %v1333, %v1339
        %v1346 = vmul.f32 %v1334, %v1339
        %v1347 = vmul.f32 %v1335, %v1339
        %v1348 = vmul.f32 %v1336, %v1339
        %v1349 = vld [vmem:[%s3] sm:$0x1]
        %v1351 = vperm.slane %v1349, 0
        %v1353 = vadd.f32 %v1341, %v1351
        %v1354 = vadd.f32 %v1342, %v1351
        %v1355 = vadd.f32 %v1343, %v1351
        %v1356 = vadd.f32 %v1344, %v1351
        %v1357 = vadd.f32 %v1345, %v1351
        %v1358 = vadd.f32 %v1346, %v1351
        %v1359 = vadd.f32 %v1347, %v1351
        %v1360 = vadd.f32 %v1348, %v1351
        %v1361 = vpack.c.bf16 %v1353, %v1353
        %v1362 = vpack.c.bf16 %v1354, %v1354
        %v1363 = vpack.c.bf16 %v1355, %v1355
        %v1364 = vpack.c.bf16 %v1356, %v1356
        %v1365 = vpack.c.bf16 %v1357, %v1357
        %v1366 = vpack.c.bf16 %v1358, %v1358
        %v1367 = vpack.c.bf16 %v1359, %v1359
        %v1368 = vpack.c.bf16 %v1360, %v1360
        %s1369 = smul.addr %s508, 4
        %s1370 = scalar_lea.vmem [#allocation2], %s1369
        %1371 = vst [vmem:[%s1370] sm:$0xf] %v1361
        %1372 = vst [vmem:[%s1370 + $0x4] sm:$0xf] %v1362
        %1373 = vst [vmem:[%s1370 + $0x8] sm:$0xf] %v1363
        %1374 = vst [vmem:[%s1370 + $0xc] sm:$0xf] %v1364
        %1375 = vst [vmem:[%s1370 + $0x10] sm:$0xf] %v1365
        %1376 = vst [vmem:[%s1370 + $0x14] sm:$0xf] %v1366
        %1377 = vst [vmem:[%s1370 + $0x18] sm:$0xf] %v1367
        %1378 = vst [vmem:[%s1370 + $0x1c] sm:$0xf] %v1368
      $region85: #{bn_lenet5_forward.1} parent=79 // loop_footer
        %s506 = sadd.s32 1, %s502
      $region86: #{bn_lenet5_forward.1} parent=79 // loop_footer_branch
        %501 = sbr.rel target = $region82
      $region87: #{bn_lenet5_forward.1} parent=79 // loop_exit
        _
      %v1379 = vld [vmem:[#allocation2] sm:$0xf]
      %v1380 = vld [vmem:[#allocation2 + $0x4] sm:$0xf]
      %v1381 = vld [vmem:[#allocation2 + $0x8] sm:$0xf]
      %v1382 = vld [vmem:[#allocation2 + $0xc] sm:$0xf]
      %v1383 = vld [vmem:[#allocation2 + $0x10] sm:$0xf]
      %v1384 = vld [vmem:[#allocation2 + $0x14] sm:$0xf]
      %v1385 = vld [vmem:[#allocation2 + $0x18] sm:$0xf]
      %v1386 = vld [vmem:[#allocation2 + $0x1c] sm:$0xf]
      %v1387 = vld [vmem:[%s4] sm:$0xf]
      %v1388 = vld [vmem:[%s4 + $0x4] sm:$0xf]
      %v1389 = vld [vmem:[%s4 + $0x8] sm:$0xf]
      %v1390 = vld [vmem:[%s4 + $0xc] sm:$0xf]
      %v1391 = vld [vmem:[%s4 + $0x10] sm:$0xf]
      %v1392 = vld [vmem:[%s4 + $0x14] sm:$0xf]
      %v1393 = vld [vmem:[%s4 + $0x18] sm:$0xf]
      %v1394 = vld [vmem:[%s4 + $0x1c] sm:$0xf]
      %v1395 = vld [vmem:[%s4 + $0x20] sm:$0xf]
      %v1396 = vld [vmem:[%s4 + $0x24] sm:$0xf]
      %v1397 = vld [vmem:[%s4 + $0x28] sm:$0xf]
      %v1398 = vld [vmem:[%s4 + $0x2c] sm:$0xf]
      %v1399 = vld [vmem:[%s4 + $0x30] sm:$0xf]
      %v1400 = vld [vmem:[%s4 + $0x34] sm:$0xf]
      %v1401 = vld [vmem:[%s4 + $0x38] sm:$0xf]
      %v1402 = vld [vmem:[%s4 + $0x3c] sm:$0xf]
      %v1403 = vld [vmem:[#allocation2 + $0x20] sm:$0xf]
      %v1404 = vld [vmem:[#allocation2 + $0x24] sm:$0xf]
      %v1405 = vld [vmem:[#allocation2 + $0x28] sm:$0xf]
      %v1406 = vld [vmem:[#allocation2 + $0x2c] sm:$0xf]
      %v1407 = vld [vmem:[#allocation2 + $0x30] sm:$0xf]
      %v1408 = vld [vmem:[#allocation2 + $0x34] sm:$0xf]
      %v1409 = vld [vmem:[#allocation2 + $0x38] sm:$0xf]
      %v1410 = vld [vmem:[#allocation2 + $0x3c] sm:$0xf]
      %v1411 = vld [vmem:[%s4 + $0x40] sm:$0xf]
      %v1412 = vld [vmem:[%s4 + $0x44] sm:$0xf]
      %v1413 = vld [vmem:[%s4 + $0x48] sm:$0xf]
      %v1414 = vld [vmem:[%s4 + $0x4c] sm:$0xf]
      %v1415 = vld [vmem:[%s4 + $0x50] sm:$0xf]
      %v1416 = vld [vmem:[%s4 + $0x54] sm:$0xf]
      %v1417 = vld [vmem:[%s4 + $0x58] sm:$0xf]
      %v1418 = vld [vmem:[%s4 + $0x5c] sm:$0xf]
      %v1419 = vld [vmem:[%s4 + $0x60] sm:$0xf]
      %v1420 = vld [vmem:[%s4 + $0x64] sm:$0xf]
      %v1421 = vld [vmem:[%s4 + $0x68] sm:$0xf]
      %v1422 = vld [vmem:[%s4 + $0x6c] sm:$0xf]
      %v1423 = vld [vmem:[%s4 + $0x70] sm:$0xf]
      %v1424 = vld [vmem:[%s4 + $0x74] sm:$0xf]
      %v1425 = vld [vmem:[%s4 + $0x78] sm:$0xf]
      %v1426 = vld [vmem:[%s4 + $0x7c] sm:$0xf]
      %v1435 = vunpack.c.l.b16 %v1403
      %v1436 = vunpack.c.l.b16 %v1404
      %v1437 = vunpack.c.l.b16 %v1405
      %v1438 = vunpack.c.l.b16 %v1406
      %v1439 = vunpack.c.l.b16 %v1407
      %v1440 = vunpack.c.l.b16 %v1408
      %v1441 = vunpack.c.l.b16 %v1409
      %v1442 = vunpack.c.l.b16 %v1410
      %v1443 = vpack.c.b16 %v1436, %v1435
      %v1444 = vpack.c.b16 %v1438, %v1437
      %v1445 = vpack.c.b16 %v1440, %v1439
      %v1446 = vpack.c.b16 %v1442, %v1441
      %v1467 = vunpack.c.l.b16 %v1411
      %v1468 = vunpack.c.l.b16 %v1412
      %v1469 = vunpack.c.l.b16 %v1413
      %v1470 = vunpack.c.l.b16 %v1414
      %v1471 = vunpack.c.l.b16 %v1415
      %v1472 = vunpack.c.l.b16 %v1416
      %v1473 = vunpack.c.l.b16 %v1417
      %v1474 = vunpack.c.l.b16 %v1418
      %v1475 = vunpack.c.l.b16 %v1419
      %v1476 = vunpack.c.l.b16 %v1420
      %v1477 = vunpack.c.l.b16 %v1421
      %v1478 = vunpack.c.l.b16 %v1422
      %v1479 = vunpack.c.l.b16 %v1423
      %v1480 = vunpack.c.l.b16 %v1424
      %v1481 = vunpack.c.l.b16 %v1425
      %v1482 = vunpack.c.l.b16 %v1426
      %v1483 = vpack.c.b16 %v1468, %v1467
      %v1484 = vpack.c.b16 %v1470, %v1469
      %v1485 = vpack.c.b16 %v1472, %v1471
      %v1486 = vpack.c.b16 %v1474, %v1473
      %v1487 = vpack.c.b16 %v1476, %v1475
      %v1488 = vpack.c.b16 %v1478, %v1477
      %v1489 = vpack.c.b16 %v1480, %v1479
      %v1490 = vpack.c.b16 %v1482, %v1481
      %1499 = vmatpush.bf16.msra.mxu0 %v1490
      %1500 = vmatpush.bf16.msra.mxu0 %v1489
      %1501 = vmatpush.bf16.msra.mxu0 %v1488
      %1502 = vmatpush.bf16.msra.mxu0 %v1487
      %1503 = vmatpush.bf16.msra.mxu0 %v1486
      %1504 = vmatpush.bf16.msra.mxu0 %v1485
      %1505 = vmatpush.bf16.msra.mxu0 %v1484
      %1506 = vmatpush.bf16.msra.mxu0 %v1483
      %1507 = vmatmul.bf16.gmra.mxu0 %v1443
      %v1508 = vpop.f32.mrf.mxu0
      %v1509 = vadd.f32 0.0, %v1508
      %v1510 = vpop.f32.mrf.mxu0
      %v1511 = vadd.f32 0.0, %v1510
      %1512 = vmatmul.bf16.gmra.mxu0 %v1444
      %v1513 = vpop.f32.mrf.mxu0
      %v1514 = vadd.f32 0.0, %v1513
      %v1515 = vpop.f32.mrf.mxu0
      %v1516 = vadd.f32 0.0, %v1515
      %1517 = vmatmul.bf16.gmra.mxu0 %v1445
      %v1518 = vpop.f32.mrf.mxu0
      %v1519 = vadd.f32 0.0, %v1518
      %v1520 = vpop.f32.mrf.mxu0
      %v1521 = vadd.f32 0.0, %v1520
      %1522 = vmatmul.bf16.gmra.mxu0 %v1446
      %v1523 = vpop.f32.mrf.mxu0
      %v1524 = vadd.f32 0.0, %v1523
      %v1525 = vpop.f32.mrf.mxu0
      %v1526 = vadd.f32 0.0, %v1525
      %1527 = vdwg.mxu0
      %v1536 = vunpack.c.l.b16 %v1379
      %v1537 = vunpack.c.l.b16 %v1380
      %v1538 = vunpack.c.l.b16 %v1381
      %v1539 = vunpack.c.l.b16 %v1382
      %v1540 = vunpack.c.l.b16 %v1383
      %v1541 = vunpack.c.l.b16 %v1384
      %v1542 = vunpack.c.l.b16 %v1385
      %v1543 = vunpack.c.l.b16 %v1386
      %v1544 = vpack.c.b16 %v1537, %v1536
      %v1545 = vpack.c.b16 %v1539, %v1538
      %v1546 = vpack.c.b16 %v1541, %v1540
      %v1547 = vpack.c.b16 %v1543, %v1542
      %v1568 = vunpack.c.l.b16 %v1387
      %v1569 = vunpack.c.l.b16 %v1388
      %v1570 = vunpack.c.l.b16 %v1389
      %v1571 = vunpack.c.l.b16 %v1390
      %v1572 = vunpack.c.l.b16 %v1391
      %v1573 = vunpack.c.l.b16 %v1392
      %v1574 = vunpack.c.l.b16 %v1393
      %v1575 = vunpack.c.l.b16 %v1394
      %v1576 = vunpack.c.l.b16 %v1395
      %v1577 = vunpack.c.l.b16 %v1396
      %v1578 = vunpack.c.l.b16 %v1397
      %v1579 = vunpack.c.l.b16 %v1398
      %v1580 = vunpack.c.l.b16 %v1399
      %v1581 = vunpack.c.l.b16 %v1400
      %v1582 = vunpack.c.l.b16 %v1401
      %v1583 = vunpack.c.l.b16 %v1402
      %v1584 = vpack.c.b16 %v1569, %v1568
      %v1585 = vpack.c.b16 %v1571, %v1570
      %v1586 = vpack.c.b16 %v1573, %v1572
      %v1587 = vpack.c.b16 %v1575, %v1574
      %v1588 = vpack.c.b16 %v1577, %v1576
      %v1589 = vpack.c.b16 %v1579, %v1578
      %v1590 = vpack.c.b16 %v1581, %v1580
      %v1591 = vpack.c.b16 %v1583, %v1582
      %1600 = vmatpush.bf16.msra.mxu0 %v1591
      %1601 = vmatpush.bf16.msra.mxu0 %v1590
      %1602 = vmatpush.bf16.msra.mxu0 %v1589
      %1603 = vmatpush.bf16.msra.mxu0 %v1588
      %1604 = vmatpush.bf16.msra.mxu0 %v1587
      %1605 = vmatpush.bf16.msra.mxu0 %v1586
      %1606 = vmatpush.bf16.msra.mxu0 %v1585
      %1607 = vmatpush.bf16.msra.mxu0 %v1584
      %1608 = vmatmul.bf16.gmra.mxu0 %v1544
      %v1609 = vpop.f32.mrf.mxu0
      %v1610 = vadd.f32 %v1509, %v1609
      %v1611 = vpop.f32.mrf.mxu0
      %v1612 = vadd.f32 %v1511, %v1611
      %1613 = vmatmul.bf16.gmra.mxu0 %v1545
      %v1614 = vpop.f32.mrf.mxu0
      %v1615 = vadd.f32 %v1514, %v1614
      %v1616 = vpop.f32.mrf.mxu0
      %v1617 = vadd.f32 %v1516, %v1616
      %1618 = vmatmul.bf16.gmra.mxu0 %v1546
      %v1619 = vpop.f32.mrf.mxu0
      %v1620 = vadd.f32 %v1519, %v1619
      %v1621 = vpop.f32.mrf.mxu0
      %v1622 = vadd.f32 %v1521, %v1621
      %1623 = vmatmul.bf16.gmra.mxu0 %v1547
      %v1624 = vpop.f32.mrf.mxu0
      %v1625 = vadd.f32 %v1524, %v1624
      %v1626 = vpop.f32.mrf.mxu0
      %v1627 = vadd.f32 %v1526, %v1626
      %1628 = vdwg.mxu0
      %v1629 = vld [vmem:[#allocation2 + $0x40] sm:$0xf]
      %v1630 = vld [vmem:[#allocation2 + $0x44] sm:$0xf]
      %v1631 = vld [vmem:[#allocation2 + $0x48] sm:$0xf]
      %v1632 = vld [vmem:[#allocation2 + $0x4c] sm:$0xf]
      %v1633 = vld [vmem:[#allocation2 + $0x50] sm:$0xf]
      %v1634 = vld [vmem:[#allocation2 + $0x54] sm:$0xf]
      %v1635 = vld [vmem:[#allocation2 + $0x58] sm:$0xf]
      %v1636 = vld [vmem:[#allocation2 + $0x5c] sm:$0xf]
      %v1645 = vunpack.c.l.b16 %v1629
      %v1646 = vunpack.c.l.b16 %v1630
      %v1647 = vunpack.c.l.b16 %v1631
      %v1648 = vunpack.c.l.b16 %v1632
      %v1649 = vunpack.c.l.b16 %v1633
      %v1650 = vunpack.c.l.b16 %v1634
      %v1651 = vunpack.c.l.b16 %v1635
      %v1652 = vunpack.c.l.b16 %v1636
      %v1653 = vpack.c.b16 %v1646, %v1645
      %v1654 = vpack.c.b16 %v1648, %v1647
      %v1655 = vpack.c.b16 %v1650, %v1649
      %v1656 = vpack.c.b16 %v1652, %v1651
      %1661 = vmatpush.bf16.msra.mxu0 %v1490
      %1662 = vmatpush.bf16.msra.mxu0 %v1489
      %1663 = vmatpush.bf16.msra.mxu0 %v1488
      %1664 = vmatpush.bf16.msra.mxu0 %v1487
      %1665 = vmatpush.bf16.msra.mxu0 %v1486
      %1666 = vmatpush.bf16.msra.mxu0 %v1485
      %1667 = vmatpush.bf16.msra.mxu0 %v1484
      %1668 = vmatpush.bf16.msra.mxu0 %v1483
      %1669 = vmatmul.bf16.gmra.mxu0 %v1653
      %v1670 = vpop.f32.mrf.mxu0
      %v1671 = vadd.f32 0.0, %v1670
      %v1672 = vpop.f32.mrf.mxu0
      %v1673 = vadd.f32 0.0, %v1672
      %1674 = vmatmul.bf16.gmra.mxu0 %v1654
      %v1675 = vpop.f32.mrf.mxu0
      %v1676 = vadd.f32 0.0, %v1675
      %v1677 = vpop.f32.mrf.mxu0
      %v1678 = vadd.f32 0.0, %v1677
      %1679 = vmatmul.bf16.gmra.mxu0 %v1655
      %v1680 = vpop.f32.mrf.mxu0
      %v1681 = vadd.f32 0.0, %v1680
      %v1682 = vpop.f32.mrf.mxu0
      %v1683 = vadd.f32 0.0, %v1682
      %1684 = vmatmul.bf16.gmra.mxu0 %v1656
      %v1685 = vpop.f32.mrf.mxu0
      %v1686 = vadd.f32 0.0, %v1685
      %v1687 = vpop.f32.mrf.mxu0
      %v1688 = vadd.f32 0.0, %v1687
      %1689 = vdwg.mxu0
      %1690 = vmatpush.bf16.msra.mxu0 %v1591
      %1691 = vmatpush.bf16.msra.mxu0 %v1590
      %1692 = vmatpush.bf16.msra.mxu0 %v1589
      %1693 = vmatpush.bf16.msra.mxu0 %v1588
      %1694 = vmatpush.bf16.msra.mxu0 %v1587
      %1695 = vmatpush.bf16.msra.mxu0 %v1586
      %1696 = vmatpush.bf16.msra.mxu0 %v1585
      %1697 = vmatpush.bf16.msra.mxu0 %v1584
      %1698 = vmatmul.bf16.gmra.mxu0 %v1443
      %v1699 = vpop.f32.mrf.mxu0
      %v1700 = vadd.f32 %v1671, %v1699
      %v1701 = vpop.f32.mrf.mxu0
      %v1702 = vadd.f32 %v1673, %v1701
      %1703 = vmatmul.bf16.gmra.mxu0 %v1444
      %v1704 = vpop.f32.mrf.mxu0
      %v1705 = vadd.f32 %v1676, %v1704
      %v1706 = vpop.f32.mrf.mxu0
      %v1707 = vadd.f32 %v1678, %v1706
      %1708 = vmatmul.bf16.gmra.mxu0 %v1445
      %v1709 = vpop.f32.mrf.mxu0
      %v1710 = vadd.f32 %v1681, %v1709
      %v1711 = vpop.f32.mrf.mxu0
      %v1712 = vadd.f32 %v1683, %v1711
      %1713 = vmatmul.bf16.gmra.mxu0 %v1446
      %v1714 = vpop.f32.mrf.mxu0
      %v1715 = vadd.f32 %v1686, %v1714
      %v1716 = vpop.f32.mrf.mxu0
      %v1717 = vadd.f32 %v1688, %v1716
      %1718 = vdwg.mxu0
      %v1719 = vld [vmem:[%s4 + $0x80] sm:$0xf]
      %v1720 = vld [vmem:[%s4 + $0x84] sm:$0xf]
      %v1721 = vld [vmem:[%s4 + $0x88] sm:$0xf]
      %v1722 = vld [vmem:[%s4 + $0x8c] sm:$0xf]
      %v1723 = vld [vmem:[%s4 + $0x90] sm:$0xf]
      %v1724 = vld [vmem:[%s4 + $0x94] sm:$0xf]
      %v1725 = vld [vmem:[%s4 + $0x98] sm:$0xf]
      %v1726 = vld [vmem:[%s4 + $0x9c] sm:$0xf]
      %v1727 = vld [vmem:[%s4 + $0xa0] sm:$0xf]
      %v1728 = vld [vmem:[%s4 + $0xa4] sm:$0xf]
      %v1729 = vld [vmem:[%s4 + $0xa8] sm:$0xf]
      %v1730 = vld [vmem:[%s4 + $0xac] sm:$0xf]
      %v1731 = vld [vmem:[%s4 + $0xb0] sm:$0xf]
      %v1732 = vld [vmem:[%s4 + $0xb4] sm:$0xf]
      %v1733 = vld [vmem:[%s4 + $0xb8] sm:$0xf]
      %v1734 = vld [vmem:[%s4 + $0xbc] sm:$0xf]
      %v1751 = vunpack.c.l.b16 %v1719
      %v1752 = vunpack.c.l.b16 %v1720
      %v1753 = vunpack.c.l.b16 %v1721
      %v1754 = vunpack.c.l.b16 %v1722
      %v1755 = vunpack.c.l.b16 %v1723
      %v1756 = vunpack.c.l.b16 %v1724
      %v1757 = vunpack.c.l.b16 %v1725
      %v1758 = vunpack.c.l.b16 %v1726
      %v1759 = vunpack.c.l.b16 %v1727
      %v1760 = vunpack.c.l.b16 %v1728
      %v1761 = vunpack.c.l.b16 %v1729
      %v1762 = vunpack.c.l.b16 %v1730
      %v1763 = vunpack.c.l.b16 %v1731
      %v1764 = vunpack.c.l.b16 %v1732
      %v1765 = vunpack.c.l.b16 %v1733
      %v1766 = vunpack.c.l.b16 %v1734
      %v1767 = vpack.c.b16 %v1752, %v1751
      %v1768 = vpack.c.b16 %v1754, %v1753
      %v1769 = vpack.c.b16 %v1756, %v1755
      %v1770 = vpack.c.b16 %v1758, %v1757
      %v1771 = vpack.c.b16 %v1760, %v1759
      %v1772 = vpack.c.b16 %v1762, %v1761
      %v1773 = vpack.c.b16 %v1764, %v1763
      %v1774 = vpack.c.b16 %v1766, %v1765
      %1783 = vmatpush.bf16.msra.mxu0 %v1774
      %1784 = vmatpush.bf16.msra.mxu0 %v1773
      %1785 = vmatpush.bf16.msra.mxu0 %v1772
      %1786 = vmatpush.bf16.msra.mxu0 %v1771
      %1787 = vmatpush.bf16.msra.mxu0 %v1770
      %1788 = vmatpush.bf16.msra.mxu0 %v1769
      %1789 = vmatpush.bf16.msra.mxu0 %v1768
      %1790 = vmatpush.bf16.msra.mxu0 %v1767
      %1791 = vmatmul.bf16.gmra.mxu0 %v1653
      %v1792 = vpop.f32.mrf.mxu0
      %v1793 = vadd.f32 0.0, %v1792
      %v1794 = vpop.f32.mrf.mxu0
      %v1795 = vadd.f32 0.0, %v1794
      %1796 = vmatmul.bf16.gmra.mxu0 %v1654
      %v1797 = vpop.f32.mrf.mxu0
      %v1798 = vadd.f32 0.0, %v1797
      %v1799 = vpop.f32.mrf.mxu0
      %v1800 = vadd.f32 0.0, %v1799
      %1801 = vmatmul.bf16.gmra.mxu0 %v1655
      %v1802 = vpop.f32.mrf.mxu0
      %v1803 = vadd.f32 0.0, %v1802
      %v1804 = vpop.f32.mrf.mxu0
      %v1805 = vadd.f32 0.0, %v1804
      %1806 = vmatmul.bf16.gmra.mxu0 %v1656
      %v1807 = vpop.f32.mrf.mxu0
      %v1808 = vadd.f32 0.0, %v1807
      %v1809 = vpop.f32.mrf.mxu0
      %v1810 = vadd.f32 0.0, %v1809
      %1811 = vdwg.mxu0
      %v1812 = vadd.f32 %v1610, %v1793
      %v1813 = vadd.f32 %v1612, %v1795
      %v1814 = vadd.f32 %v1615, %v1798
      %v1815 = vadd.f32 %v1617, %v1800
      %v1816 = vadd.f32 %v1620, %v1803
      %v1817 = vadd.f32 %v1622, %v1805
      %v1818 = vadd.f32 %v1625, %v1808
      %v1819 = vadd.f32 %v1627, %v1810
      %v1820 = vld [vmem:[#allocation2 + $0x60] sm:$0xf]
      %v1821 = vld [vmem:[#allocation2 + $0x64] sm:$0xf]
      %v1822 = vld [vmem:[#allocation2 + $0x68] sm:$0xf]
      %v1823 = vld [vmem:[#allocation2 + $0x6c] sm:$0xf]
      %v1824 = vld [vmem:[#allocation2 + $0x70] sm:$0xf]
      %v1825 = vld [vmem:[#allocation2 + $0x74] sm:$0xf]
      %v1826 = vld [vmem:[#allocation2 + $0x78] sm:$0xf]
      %v1827 = vld [vmem:[#allocation2 + $0x7c] sm:$0xf]
      %v1836 = vunpack.c.l.b16 %v1820
      %v1837 = vunpack.c.l.b16 %v1821
      %v1838 = vunpack.c.l.b16 %v1822
      %v1839 = vunpack.c.l.b16 %v1823
      %v1840 = vunpack.c.l.b16 %v1824
      %v1841 = vunpack.c.l.b16 %v1825
      %v1842 = vunpack.c.l.b16 %v1826
      %v1843 = vunpack.c.l.b16 %v1827
      %v1844 = vpack.c.b16 %v1837, %v1836
      %v1845 = vpack.c.b16 %v1839, %v1838
      %v1846 = vpack.c.b16 %v1841, %v1840
      %v1847 = vpack.c.b16 %v1843, %v1842
      %1852 = vmatpush.bf16.msra.mxu0 %v1774
      %1853 = vmatpush.bf16.msra.mxu0 %v1773
      %1854 = vmatpush.bf16.msra.mxu0 %v1772
      %1855 = vmatpush.bf16.msra.mxu0 %v1771
      %1856 = vmatpush.bf16.msra.mxu0 %v1770
      %1857 = vmatpush.bf16.msra.mxu0 %v1769
      %1858 = vmatpush.bf16.msra.mxu0 %v1768
      %1859 = vmatpush.bf16.msra.mxu0 %v1767
      %1860 = vmatmul.bf16.gmra.mxu0 %v1844
      %v1861 = vpop.f32.mrf.mxu0
      %v1862 = vadd.f32 0.0, %v1861
      %v1863 = vpop.f32.mrf.mxu0
      %v1864 = vadd.f32 0.0, %v1863
      %1865 = vmatmul.bf16.gmra.mxu0 %v1845
      %v1866 = vpop.f32.mrf.mxu0
      %v1867 = vadd.f32 0.0, %v1866
      %v1868 = vpop.f32.mrf.mxu0
      %v1869 = vadd.f32 0.0, %v1868
      %1870 = vmatmul.bf16.gmra.mxu0 %v1846
      %v1871 = vpop.f32.mrf.mxu0
      %v1872 = vadd.f32 0.0, %v1871
      %v1873 = vpop.f32.mrf.mxu0
      %v1874 = vadd.f32 0.0, %v1873
      %1875 = vmatmul.bf16.gmra.mxu0 %v1847
      %v1876 = vpop.f32.mrf.mxu0
      %v1877 = vadd.f32 0.0, %v1876
      %v1878 = vpop.f32.mrf.mxu0
      %v1879 = vadd.f32 0.0, %v1878
      %1880 = vdwg.mxu0
      %v1881 = vadd.f32 %v1700, %v1862
      %v1882 = vadd.f32 %v1702, %v1864
      %v1883 = vadd.f32 %v1705, %v1867
      %v1884 = vadd.f32 %v1707, %v1869
      %v1885 = vadd.f32 %v1710, %v1872
      %v1886 = vadd.f32 %v1712, %v1874
      %v1887 = vadd.f32 %v1715, %v1877
      %v1888 = vadd.f32 %v1717, %v1879
      %v1889 = vld [vmem:[%s4 + $0xc0] sm:$0xf]
      %v1890 = vld [vmem:[%s4 + $0xc4] sm:$0xf]
      %v1891 = vld [vmem:[%s4 + $0xc8] sm:$0xf]
      %v1892 = vld [vmem:[%s4 + $0xcc] sm:$0xf]
      %v1893 = vld [vmem:[%s4 + $0xd0] sm:$0xf]
      %v1894 = vld [vmem:[%s4 + $0xd4] sm:$0xf]
      %v1895 = vld [vmem:[%s4 + $0xd8] sm:$0xf]
      %v1896 = vld [vmem:[%s4 + $0xdc] sm:$0xf]
      %v1897 = vld [vmem:[%s4 + $0xe0] sm:$0xf]
      %v1898 = vld [vmem:[%s4 + $0xe4] sm:$0xf]
      %v1899 = vld [vmem:[%s4 + $0xe8] sm:$0xf]
      %v1900 = vld [vmem:[%s4 + $0xec] sm:$0xf]
      %v1901 = vld [vmem:[%s4 + $0xf0] sm:$0xf]
      %v1902 = vld [vmem:[%s4 + $0xf4] sm:$0xf]
      %v1903 = vld [vmem:[%s4 + $0xf8] sm:$0xf]
      %v1904 = vld [vmem:[%s4 + $0xfc] sm:$0xf]
      %v1921 = vunpack.c.l.b16 %v1889
      %v1922 = vunpack.c.l.b16 %v1890
      %v1923 = vunpack.c.l.b16 %v1891
      %v1924 = vunpack.c.l.b16 %v1892
      %v1925 = vunpack.c.l.b16 %v1893
      %v1926 = vunpack.c.l.b16 %v1894
      %v1927 = vunpack.c.l.b16 %v1895
      %v1928 = vunpack.c.l.b16 %v1896
      %v1929 = vunpack.c.l.b16 %v1897
      %v1930 = vunpack.c.l.b16 %v1898
      %v1931 = vunpack.c.l.b16 %v1899
      %v1932 = vunpack.c.l.b16 %v1900
      %v1933 = vunpack.c.l.b16 %v1901
      %v1934 = vunpack.c.l.b16 %v1902
      %v1935 = vunpack.c.l.b16 %v1903
      %v1936 = vunpack.c.l.b16 %v1904
      %v1937 = vpack.c.b16 %v1922, %v1921
      %v1938 = vpack.c.b16 %v1924, %v1923
      %v1939 = vpack.c.b16 %v1926, %v1925
      %v1940 = vpack.c.b16 %v1928, %v1927
      %v1941 = vpack.c.b16 %v1930, %v1929
      %v1942 = vpack.c.b16 %v1932, %v1931
      %v1943 = vpack.c.b16 %v1934, %v1933
      %v1944 = vpack.c.b16 %v1936, %v1935
      %1953 = vmatpush.bf16.msra.mxu0 %v1944
      %1954 = vmatpush.bf16.msra.mxu0 %v1943
      %1955 = vmatpush.bf16.msra.mxu0 %v1942
      %1956 = vmatpush.bf16.msra.mxu0 %v1941
      %1957 = vmatpush.bf16.msra.mxu0 %v1940
      %1958 = vmatpush.bf16.msra.mxu0 %v1939
      %1959 = vmatpush.bf16.msra.mxu0 %v1938
      %1960 = vmatpush.bf16.msra.mxu0 %v1937
      %1961 = vmatmul.bf16.gmra.mxu0 %v1844
      %v1962 = vpop.f32.mrf.mxu0
      %v1963 = vadd.f32 0.0, %v1962
      %v1964 = vpop.f32.mrf.mxu0
      %v1965 = vadd.f32 0.0, %v1964
      %1966 = vmatmul.bf16.gmra.mxu0 %v1845
      %v1967 = vpop.f32.mrf.mxu0
      %v1968 = vadd.f32 0.0, %v1967
      %v1969 = vpop.f32.mrf.mxu0
      %v1970 = vadd.f32 0.0, %v1969
      %1971 = vmatmul.bf16.gmra.mxu0 %v1846
      %v1972 = vpop.f32.mrf.mxu0
      %v1973 = vadd.f32 0.0, %v1972
      %v1974 = vpop.f32.mrf.mxu0
      %v1975 = vadd.f32 0.0, %v1974
      %1976 = vmatmul.bf16.gmra.mxu0 %v1847
      %v1977 = vpop.f32.mrf.mxu0
      %v1978 = vadd.f32 0.0, %v1977
      %v1979 = vpop.f32.mrf.mxu0
      %v1980 = vadd.f32 0.0, %v1979
      %1981 = vdwg.mxu0
      %v1982 = vadd.f32 %v1812, %v1963
      %v1983 = vadd.f32 %v1813, %v1965
      %v1984 = vadd.f32 %v1814, %v1968
      %v1985 = vadd.f32 %v1815, %v1970
      %v1986 = vadd.f32 %v1816, %v1973
      %v1987 = vadd.f32 %v1817, %v1975
      %v1988 = vadd.f32 %v1818, %v1978
      %v1989 = vadd.f32 %v1819, %v1980
      %v1990 = vld [vmem:[#allocation2 + $0x80] sm:$0xf]
      %v1991 = vld [vmem:[#allocation2 + $0x84] sm:$0xf]
      %v1992 = vld [vmem:[#allocation2 + $0x88] sm:$0xf]
      %v1993 = vld [vmem:[#allocation2 + $0x8c] sm:$0xf]
      %v1994 = vld [vmem:[#allocation2 + $0x90] sm:$0xf]
      %v1995 = vld [vmem:[#allocation2 + $0x94] sm:$0xf]
      %v1996 = vld [vmem:[#allocation2 + $0x98] sm:$0xf]
      %v1997 = vld [vmem:[#allocation2 + $0x9c] sm:$0xf]
      %v2006 = vunpack.c.l.b16 %v1990
      %v2007 = vunpack.c.l.b16 %v1991
      %v2008 = vunpack.c.l.b16 %v1992
      %v2009 = vunpack.c.l.b16 %v1993
      %v2010 = vunpack.c.l.b16 %v1994
      %v2011 = vunpack.c.l.b16 %v1995
      %v2012 = vunpack.c.l.b16 %v1996
      %v2013 = vunpack.c.l.b16 %v1997
      %v2014 = vpack.c.b16 %v2007, %v2006
      %v2015 = vpack.c.b16 %v2009, %v2008
      %v2016 = vpack.c.b16 %v2011, %v2010
      %v2017 = vpack.c.b16 %v2013, %v2012
      %2022 = vmatpush.bf16.msra.mxu0 %v1944
      %2023 = vmatpush.bf16.msra.mxu0 %v1943
      %2024 = vmatpush.bf16.msra.mxu0 %v1942
      %2025 = vmatpush.bf16.msra.mxu0 %v1941
      %2026 = vmatpush.bf16.msra.mxu0 %v1940
      %2027 = vmatpush.bf16.msra.mxu0 %v1939
      %2028 = vmatpush.bf16.msra.mxu0 %v1938
      %2029 = vmatpush.bf16.msra.mxu0 %v1937
      %2030 = vmatmul.bf16.gmra.mxu0 %v2014
      %v2031 = vpop.f32.mrf.mxu0
      %v2032 = vadd.f32 0.0, %v2031
      %v2033 = vpop.f32.mrf.mxu0
      %v2034 = vadd.f32 0.0, %v2033
      %2035 = vmatmul.bf16.gmra.mxu0 %v2015
      %v2036 = vpop.f32.mrf.mxu0
      %v2037 = vadd.f32 0.0, %v2036
      %v2038 = vpop.f32.mrf.mxu0
      %v2039 = vadd.f32 0.0, %v2038
      %2040 = vmatmul.bf16.gmra.mxu0 %v2016
      %v2041 = vpop.f32.mrf.mxu0
      %v2042 = vadd.f32 0.0, %v2041
      %v2043 = vpop.f32.mrf.mxu0
      %v2044 = vadd.f32 0.0, %v2043
      %2045 = vmatmul.bf16.gmra.mxu0 %v2017
      %v2046 = vpop.f32.mrf.mxu0
      %v2047 = vadd.f32 0.0, %v2046
      %v2048 = vpop.f32.mrf.mxu0
      %v2049 = vadd.f32 0.0, %v2048
      %2050 = vdwg.mxu0
      %v2051 = vadd.f32 %v1881, %v2032
      %v2052 = vadd.f32 %v1882, %v2034
      %v2053 = vadd.f32 %v1883, %v2037
      %v2054 = vadd.f32 %v1884, %v2039
      %v2055 = vadd.f32 %v1885, %v2042
      %v2056 = vadd.f32 %v1886, %v2044
      %v2057 = vadd.f32 %v1887, %v2047
      %v2058 = vadd.f32 %v1888, %v2049
      %v2059 = vld [vmem:[%s4 + $0x100] sm:$0xf]
      %v2060 = vld [vmem:[%s4 + $0x104] sm:$0xf]
      %v2061 = vld [vmem:[%s4 + $0x108] sm:$0xf]
      %v2062 = vld [vmem:[%s4 + $0x10c] sm:$0xf]
      %v2063 = vld [vmem:[%s4 + $0x110] sm:$0xf]
      %v2064 = vld [vmem:[%s4 + $0x114] sm:$0xf]
      %v2065 = vld [vmem:[%s4 + $0x118] sm:$0xf]
      %v2066 = vld [vmem:[%s4 + $0x11c] sm:$0xf]
      %v2067 = vld [vmem:[%s4 + $0x120] sm:$0xf]
      %v2068 = vld [vmem:[%s4 + $0x124] sm:$0xf]
      %v2069 = vld [vmem:[%s4 + $0x128] sm:$0xf]
      %v2070 = vld [vmem:[%s4 + $0x12c] sm:$0xf]
      %v2071 = vld [vmem:[%s4 + $0x130] sm:$0xf]
      %v2072 = vld [vmem:[%s4 + $0x134] sm:$0xf]
      %v2073 = vld [vmem:[%s4 + $0x138] sm:$0xf]
      %v2074 = vld [vmem:[%s4 + $0x13c] sm:$0xf]
      %v2091 = vunpack.c.l.b16 %v2059
      %v2092 = vunpack.c.l.b16 %v2060
      %v2093 = vunpack.c.l.b16 %v2061
      %v2094 = vunpack.c.l.b16 %v2062
      %v2095 = vunpack.c.l.b16 %v2063
      %v2096 = vunpack.c.l.b16 %v2064
      %v2097 = vunpack.c.l.b16 %v2065
      %v2098 = vunpack.c.l.b16 %v2066
      %v2099 = vunpack.c.l.b16 %v2067
      %v2100 = vunpack.c.l.b16 %v2068
      %v2101 = vunpack.c.l.b16 %v2069
      %v2102 = vunpack.c.l.b16 %v2070
      %v2103 = vunpack.c.l.b16 %v2071
      %v2104 = vunpack.c.l.b16 %v2072
      %v2105 = vunpack.c.l.b16 %v2073
      %v2106 = vunpack.c.l.b16 %v2074
      %v2107 = vpack.c.b16 %v2092, %v2091
      %v2108 = vpack.c.b16 %v2094, %v2093
      %v2109 = vpack.c.b16 %v2096, %v2095
      %v2110 = vpack.c.b16 %v2098, %v2097
      %v2111 = vpack.c.b16 %v2100, %v2099
      %v2112 = vpack.c.b16 %v2102, %v2101
      %v2113 = vpack.c.b16 %v2104, %v2103
      %v2114 = vpack.c.b16 %v2106, %v2105
      %2123 = vmatpush.bf16.msra.mxu0 %v2114
      %2124 = vmatpush.bf16.msra.mxu0 %v2113
      %2125 = vmatpush.bf16.msra.mxu0 %v2112
      %2126 = vmatpush.bf16.msra.mxu0 %v2111
      %2127 = vmatpush.bf16.msra.mxu0 %v2110
      %2128 = vmatpush.bf16.msra.mxu0 %v2109
      %2129 = vmatpush.bf16.msra.mxu0 %v2108
      %2130 = vmatpush.bf16.msra.mxu0 %v2107
      %2131 = vmatmul.bf16.gmra.mxu0 %v2014
      %v2132 = vpop.f32.mrf.mxu0
      %v2133 = vadd.f32 0.0, %v2132
      %v2134 = vpop.f32.mrf.mxu0
      %v2135 = vadd.f32 0.0, %v2134
      %2136 = vmatmul.bf16.gmra.mxu0 %v2015
      %v2137 = vpop.f32.mrf.mxu0
      %v2138 = vadd.f32 0.0, %v2137
      %v2139 = vpop.f32.mrf.mxu0
      %v2140 = vadd.f32 0.0, %v2139
      %2141 = vmatmul.bf16.gmra.mxu0 %v2016
      %v2142 = vpop.f32.mrf.mxu0
      %v2143 = vadd.f32 0.0, %v2142
      %v2144 = vpop.f32.mrf.mxu0
      %v2145 = vadd.f32 0.0, %v2144
      %2146 = vmatmul.bf16.gmra.mxu0 %v2017
      %v2147 = vpop.f32.mrf.mxu0
      %v2148 = vadd.f32 0.0, %v2147
      %v2149 = vpop.f32.mrf.mxu0
      %v2150 = vadd.f32 0.0, %v2149
      %2151 = vdwg.mxu0
      %v2152 = vadd.f32 %v1982, %v2133
      %v2153 = vadd.f32 %v1983, %v2135
      %v2154 = vadd.f32 %v1984, %v2138
      %v2155 = vadd.f32 %v1985, %v2140
      %v2156 = vadd.f32 %v1986, %v2143
      %v2157 = vadd.f32 %v1987, %v2145
      %v2158 = vadd.f32 %v1988, %v2148
      %v2159 = vadd.f32 %v1989, %v2150
      %v2160 = vld [vmem:[#allocation2 + $0xa0] sm:$0xf]
      %v2161 = vld [vmem:[#allocation2 + $0xa4] sm:$0xf]
      %v2162 = vld [vmem:[#allocation2 + $0xa8] sm:$0xf]
      %v2163 = vld [vmem:[#allocation2 + $0xac] sm:$0xf]
      %v2164 = vld [vmem:[#allocation2 + $0xb0] sm:$0xf]
      %v2165 = vld [vmem:[#allocation2 + $0xb4] sm:$0xf]
      %v2166 = vld [vmem:[#allocation2 + $0xb8] sm:$0xf]
      %v2167 = vld [vmem:[#allocation2 + $0xbc] sm:$0xf]
      %v2176 = vunpack.c.l.b16 %v2160
      %v2177 = vunpack.c.l.b16 %v2161
      %v2178 = vunpack.c.l.b16 %v2162
      %v2179 = vunpack.c.l.b16 %v2163
      %v2180 = vunpack.c.l.b16 %v2164
      %v2181 = vunpack.c.l.b16 %v2165
      %v2182 = vunpack.c.l.b16 %v2166
      %v2183 = vunpack.c.l.b16 %v2167
      %v2184 = vpack.c.b16 %v2177, %v2176
      %v2185 = vpack.c.b16 %v2179, %v2178
      %v2186 = vpack.c.b16 %v2181, %v2180
      %v2187 = vpack.c.b16 %v2183, %v2182
      %2192 = vmatpush.bf16.msra.mxu0 %v2114
      %2193 = vmatpush.bf16.msra.mxu0 %v2113
      %2194 = vmatpush.bf16.msra.mxu0 %v2112
      %2195 = vmatpush.bf16.msra.mxu0 %v2111
      %2196 = vmatpush.bf16.msra.mxu0 %v2110
      %2197 = vmatpush.bf16.msra.mxu0 %v2109
      %2198 = vmatpush.bf16.msra.mxu0 %v2108
      %2199 = vmatpush.bf16.msra.mxu0 %v2107
      %2200 = vmatmul.bf16.gmra.mxu0 %v2184
      %v2201 = vpop.f32.mrf.mxu0
      %v2202 = vadd.f32 0.0, %v2201
      %v2203 = vpop.f32.mrf.mxu0
      %v2204 = vadd.f32 0.0, %v2203
      %2205 = vmatmul.bf16.gmra.mxu0 %v2185
      %v2206 = vpop.f32.mrf.mxu0
      %v2207 = vadd.f32 0.0, %v2206
      %v2208 = vpop.f32.mrf.mxu0
      %v2209 = vadd.f32 0.0, %v2208
      %2210 = vmatmul.bf16.gmra.mxu0 %v2186
      %v2211 = vpop.f32.mrf.mxu0
      %v2212 = vadd.f32 0.0, %v2211
      %v2213 = vpop.f32.mrf.mxu0
      %v2214 = vadd.f32 0.0, %v2213
      %2215 = vmatmul.bf16.gmra.mxu0 %v2187
      %v2216 = vpop.f32.mrf.mxu0
      %v2217 = vadd.f32 0.0, %v2216
      %v2218 = vpop.f32.mrf.mxu0
      %v2219 = vadd.f32 0.0, %v2218
      %2220 = vdwg.mxu0
      %v2221 = vadd.f32 %v2051, %v2202
      %v2222 = vadd.f32 %v2052, %v2204
      %v2223 = vadd.f32 %v2053, %v2207
      %v2224 = vadd.f32 %v2054, %v2209
      %v2225 = vadd.f32 %v2055, %v2212
      %v2226 = vadd.f32 %v2056, %v2214
      %v2227 = vadd.f32 %v2057, %v2217
      %v2228 = vadd.f32 %v2058, %v2219
      %v2229 = vmax.f32 %v2152, %v2221
      %v2230 = vmax.f32 %v2153, %v2222
      %v2231 = vmax.f32 %v2154, %v2223
      %v2232 = vmax.f32 %v2155, %v2224
      %v2233 = vmax.f32 %v2156, %v2225
      %v2234 = vmax.f32 %v2157, %v2226
      %v2235 = vmax.f32 %v2158, %v2227
      %v2236 = vmax.f32 %v2159, %v2228
      %v2237 = vmax.f32 %v2229, 0.0
      %v2238 = vmax.f32 %v2230, 0.0
      %v2239 = vmax.f32 %v2231, 0.0
      %v2240 = vmax.f32 %v2232, 0.0
      %v2241 = vmax.f32 %v2233, 0.0
      %v2242 = vmax.f32 %v2234, 0.0
      %v2243 = vmax.f32 %v2235, 0.0
      %v2244 = vmax.f32 %v2236, 0.0
      %2253 = vrot.lane.b32.xlu0 %v2237, 64
      %v2254 = vpop.permute.xlu0 %2253
      %2255 = vrot.lane.b32.xlu0 %v2238, 64
      %v2256 = vpop.permute.xlu0 %2255
      %2257 = vrot.lane.b32.xlu0 %v2239, 64
      %v2258 = vpop.permute.xlu0 %2257
      %2259 = vrot.lane.b32.xlu0 %v2240, 64
      %v2260 = vpop.permute.xlu0 %2259
      %2261 = vrot.lane.b32.xlu0 %v2241, 64
      %v2262 = vpop.permute.xlu0 %2261
      %2263 = vrot.lane.b32.xlu0 %v2242, 64
      %v2264 = vpop.permute.xlu0 %2263
      %2265 = vrot.lane.b32.xlu0 %v2243, 64
      %v2266 = vpop.permute.xlu0 %2265
      %2267 = vrot.lane.b32.xlu0 %v2244, 64
      %v2268 = vpop.permute.xlu0 %2267
      %v2277 = vmax.f32 %v2237, %v2254
      %v2278 = vmax.f32 %v2238, %v2256
      %v2279 = vmax.f32 %v2239, %v2258
      %v2280 = vmax.f32 %v2240, %v2260
      %v2281 = vmax.f32 %v2241, %v2262
      %v2282 = vmax.f32 %v2242, %v2264
      %v2283 = vmax.f32 %v2243, %v2266
      %v2284 = vmax.f32 %v2244, %v2268
      %v2285 = vld [vmem:[%s5] sm:$0x1]
      %v2287 = vperm.slane %v2285, 0
      %v2289 = vmul.f32 %v2277, %v2287
      %v2290 = vmul.f32 %v2278, %v2287
      %v2291 = vmul.f32 %v2279, %v2287
      %v2292 = vmul.f32 %v2280, %v2287
      %v2293 = vmul.f32 %v2281, %v2287
      %v2294 = vmul.f32 %v2282, %v2287
      %v2295 = vmul.f32 %v2283, %v2287
      %v2296 = vmul.f32 %v2284, %v2287
      %v2297 = vld [vmem:[%s6] sm:$0x1]
      %v2299 = vperm.slane %v2297, 0
      %v2301 = vadd.f32 %v2289, %v2299
      %v2302 = vadd.f32 %v2290, %v2299
      %v2303 = vadd.f32 %v2291, %v2299
      %v2304 = vadd.f32 %v2292, %v2299
      %v2305 = vadd.f32 %v2293, %v2299
      %v2306 = vadd.f32 %v2294, %v2299
      %v2307 = vadd.f32 %v2295, %v2299
      %v2308 = vadd.f32 %v2296, %v2299
      %v2309 = vpack.c.bf16 %v2301, %v2301
      %v2310 = vpack.c.bf16 %v2302, %v2302
      %v2311 = vpack.c.bf16 %v2303, %v2303
      %v2312 = vpack.c.bf16 %v2304, %v2304
      %v2313 = vpack.c.bf16 %v2305, %v2305
      %v2314 = vpack.c.bf16 %v2306, %v2306
      %v2315 = vpack.c.bf16 %v2307, %v2307
      %v2316 = vpack.c.bf16 %v2308, %v2308
      %vm2317 = vcmask 519168
      %2318 = vst.msk [vmem:[#allocation3] sm:$0xf] %vm2317, %v2309
      %2319 = vst.msk [vmem:[#allocation3 + $0x8] sm:$0xf] %vm2317, %v2310
      %2320 = vst.msk [vmem:[#allocation3 + $0x10] sm:$0xf] %vm2317, %v2311
      %2321 = vst.msk [vmem:[#allocation3 + $0x18] sm:$0xf] %vm2317, %v2312
      %2322 = vst.msk [vmem:[#allocation3 + $0x20] sm:$0xf] %vm2317, %v2313
      %2323 = vst.msk [vmem:[#allocation3 + $0x28] sm:$0xf] %vm2317, %v2314
      %2324 = vst.msk [vmem:[#allocation3 + $0x30] sm:$0xf] %vm2317, %v2315
      %2325 = vst.msk [vmem:[#allocation3 + $0x38] sm:$0xf] %vm2317, %v2316
      %v2326 = vld [vmem:[#allocation2 + $0x40] sm:$0xf]
      %v2327 = vld [vmem:[#allocation2 + $0x44] sm:$0xf]
      %v2328 = vld [vmem:[#allocation2 + $0x48] sm:$0xf]
      %v2329 = vld [vmem:[#allocation2 + $0x4c] sm:$0xf]
      %v2330 = vld [vmem:[#allocation2 + $0x50] sm:$0xf]
      %v2331 = vld [vmem:[#allocation2 + $0x54] sm:$0xf]
      %v2332 = vld [vmem:[#allocation2 + $0x58] sm:$0xf]
      %v2333 = vld [vmem:[#allocation2 + $0x5c] sm:$0xf]
      %v2334 = vld [vmem:[%s4] sm:$0xf]
      %v2335 = vld [vmem:[%s4 + $0x4] sm:$0xf]
      %v2336 = vld [vmem:[%s4 + $0x8] sm:$0xf]
      %v2337 = vld [vmem:[%s4 + $0xc] sm:$0xf]
      %v2338 = vld [vmem:[%s4 + $0x10] sm:$0xf]
      %v2339 = vld [vmem:[%s4 + $0x14] sm:$0xf]
      %v2340 = vld [vmem:[%s4 + $0x18] sm:$0xf]
      %v2341 = vld [vmem:[%s4 + $0x1c] sm:$0xf]
      %v2342 = vld [vmem:[%s4 + $0x20] sm:$0xf]
      %v2343 = vld [vmem:[%s4 + $0x24] sm:$0xf]
      %v2344 = vld [vmem:[%s4 + $0x28] sm:$0xf]
      %v2345 = vld [vmem:[%s4 + $0x2c] sm:$0xf]
      %v2346 = vld [vmem:[%s4 + $0x30] sm:$0xf]
      %v2347 = vld [vmem:[%s4 + $0x34] sm:$0xf]
      %v2348 = vld [vmem:[%s4 + $0x38] sm:$0xf]
      %v2349 = vld [vmem:[%s4 + $0x3c] sm:$0xf]
      %v2350 = vld [vmem:[#allocation2 + $0x60] sm:$0xf]
      %v2351 = vld [vmem:[#allocation2 + $0x64] sm:$0xf]
      %v2352 = vld [vmem:[#allocation2 + $0x68] sm:$0xf]
      %v2353 = vld [vmem:[#allocation2 + $0x6c] sm:$0xf]
      %v2354 = vld [vmem:[#allocation2 + $0x70] sm:$0xf]
      %v2355 = vld [vmem:[#allocation2 + $0x74] sm:$0xf]
      %v2356 = vld [vmem:[#allocation2 + $0x78] sm:$0xf]
      %v2357 = vld [vmem:[#allocation2 + $0x7c] sm:$0xf]
      %v2358 = vld [vmem:[%s4 + $0x40] sm:$0xf]
      %v2359 = vld [vmem:[%s4 + $0x44] sm:$0xf]
      %v2360 = vld [vmem:[%s4 + $0x48] sm:$0xf]
      %v2361 = vld [vmem:[%s4 + $0x4c] sm:$0xf]
      %v2362 = vld [vmem:[%s4 + $0x50] sm:$0xf]
      %v2363 = vld [vmem:[%s4 + $0x54] sm:$0xf]
      %v2364 = vld [vmem:[%s4 + $0x58] sm:$0xf]
      %v2365 = vld [vmem:[%s4 + $0x5c] sm:$0xf]
      %v2366 = vld [vmem:[%s4 + $0x60] sm:$0xf]
      %v2367 = vld [vmem:[%s4 + $0x64] sm:$0xf]
      %v2368 = vld [vmem:[%s4 + $0x68] sm:$0xf]
      %v2369 = vld [vmem:[%s4 + $0x6c] sm:$0xf]
      %v2370 = vld [vmem:[%s4 + $0x70] sm:$0xf]
      %v2371 = vld [vmem:[%s4 + $0x74] sm:$0xf]
      %v2372 = vld [vmem:[%s4 + $0x78] sm:$0xf]
      %v2373 = vld [vmem:[%s4 + $0x7c] sm:$0xf]
      %v2382 = vunpack.c.l.b16 %v2350
      %v2383 = vunpack.c.l.b16 %v2351
      %v2384 = vunpack.c.l.b16 %v2352
      %v2385 = vunpack.c.l.b16 %v2353
      %v2386 = vunpack.c.l.b16 %v2354
      %v2387 = vunpack.c.l.b16 %v2355
      %v2388 = vunpack.c.l.b16 %v2356
      %v2389 = vunpack.c.l.b16 %v2357
      %v2390 = vpack.c.b16 %v2383, %v2382
      %v2391 = vpack.c.b16 %v2385, %v2384
      %v2392 = vpack.c.b16 %v2387, %v2386
      %v2393 = vpack.c.b16 %v2389, %v2388
      %v2414 = vunpack.c.l.b16 %v2358
      %v2415 = vunpack.c.l.b16 %v2359
      %v2416 = vunpack.c.l.b16 %v2360
      %v2417 = vunpack.c.l.b16 %v2361
      %v2418 = vunpack.c.l.b16 %v2362
      %v2419 = vunpack.c.l.b16 %v2363
      %v2420 = vunpack.c.l.b16 %v2364
      %v2421 = vunpack.c.l.b16 %v2365
      %v2422 = vunpack.c.l.b16 %v2366
      %v2423 = vunpack.c.l.b16 %v2367
      %v2424 = vunpack.c.l.b16 %v2368
      %v2425 = vunpack.c.l.b16 %v2369
      %v2426 = vunpack.c.l.b16 %v2370
      %v2427 = vunpack.c.l.b16 %v2371
      %v2428 = vunpack.c.l.b16 %v2372
      %v2429 = vunpack.c.l.b16 %v2373
      %v2430 = vpack.c.b16 %v2415, %v2414
      %v2431 = vpack.c.b16 %v2417, %v2416
      %v2432 = vpack.c.b16 %v2419, %v2418
      %v2433 = vpack.c.b16 %v2421, %v2420
      %v2434 = vpack.c.b16 %v2423, %v2422
      %v2435 = vpack.c.b16 %v2425, %v2424
      %v2436 = vpack.c.b16 %v2427, %v2426
      %v2437 = vpack.c.b16 %v2429, %v2428
      %2446 = vmatpush.bf16.msra.mxu0 %v2437
      %2447 = vmatpush.bf16.msra.mxu0 %v2436
      %2448 = vmatpush.bf16.msra.mxu0 %v2435
      %2449 = vmatpush.bf16.msra.mxu0 %v2434
      %2450 = vmatpush.bf16.msra.mxu0 %v2433
      %2451 = vmatpush.bf16.msra.mxu0 %v2432
      %2452 = vmatpush.bf16.msra.mxu0 %v2431
      %2453 = vmatpush.bf16.msra.mxu0 %v2430
      %2454 = vmatmul.bf16.gmra.mxu0 %v2390
      %v2455 = vpop.f32.mrf.mxu0
      %v2456 = vadd.f32 0.0, %v2455
      %v2457 = vpop.f32.mrf.mxu0
      %v2458 = vadd.f32 0.0, %v2457
      %2459 = vmatmul.bf16.gmra.mxu0 %v2391
      %v2460 = vpop.f32.mrf.mxu0
      %v2461 = vadd.f32 0.0, %v2460
      %v2462 = vpop.f32.mrf.mxu0
      %v2463 = vadd.f32 0.0, %v2462
      %2464 = vmatmul.bf16.gmra.mxu0 %v2392
      %v2465 = vpop.f32.mrf.mxu0
      %v2466 = vadd.f32 0.0, %v2465
      %v2467 = vpop.f32.mrf.mxu0
      %v2468 = vadd.f32 0.0, %v2467
      %2469 = vmatmul.bf16.gmra.mxu0 %v2393
      %v2470 = vpop.f32.mrf.mxu0
      %v2471 = vadd.f32 0.0, %v2470
      %v2472 = vpop.f32.mrf.mxu0
      %v2473 = vadd.f32 0.0, %v2472
      %2474 = vdwg.mxu0
      %v2483 = vunpack.c.l.b16 %v2326
      %v2484 = vunpack.c.l.b16 %v2327
      %v2485 = vunpack.c.l.b16 %v2328
      %v2486 = vunpack.c.l.b16 %v2329
      %v2487 = vunpack.c.l.b16 %v2330
      %v2488 = vunpack.c.l.b16 %v2331
      %v2489 = vunpack.c.l.b16 %v2332
      %v2490 = vunpack.c.l.b16 %v2333
      %v2491 = vpack.c.b16 %v2484, %v2483
      %v2492 = vpack.c.b16 %v2486, %v2485
      %v2493 = vpack.c.b16 %v2488, %v2487
      %v2494 = vpack.c.b16 %v2490, %v2489
      %v2515 = vunpack.c.l.b16 %v2334
      %v2516 = vunpack.c.l.b16 %v2335
      %v2517 = vunpack.c.l.b16 %v2336
      %v2518 = vunpack.c.l.b16 %v2337
      %v2519 = vunpack.c.l.b16 %v2338
      %v2520 = vunpack.c.l.b16 %v2339
      %v2521 = vunpack.c.l.b16 %v2340
      %v2522 = vunpack.c.l.b16 %v2341
      %v2523 = vunpack.c.l.b16 %v2342
      %v2524 = vunpack.c.l.b16 %v2343
      %v2525 = vunpack.c.l.b16 %v2344
      %v2526 = vunpack.c.l.b16 %v2345
      %v2527 = vunpack.c.l.b16 %v2346
      %v2528 = vunpack.c.l.b16 %v2347
      %v2529 = vunpack.c.l.b16 %v2348
      %v2530 = vunpack.c.l.b16 %v2349
      %v2531 = vpack.c.b16 %v2516, %v2515
      %v2532 = vpack.c.b16 %v2518, %v2517
      %v2533 = vpack.c.b16 %v2520, %v2519
      %v2534 = vpack.c.b16 %v2522, %v2521
      %v2535 = vpack.c.b16 %v2524, %v2523
      %v2536 = vpack.c.b16 %v2526, %v2525
      %v2537 = vpack.c.b16 %v2528, %v2527
      %v2538 = vpack.c.b16 %v2530, %v2529
      %2547 = vmatpush.bf16.msra.mxu0 %v2538
      %2548 = vmatpush.bf16.msra.mxu0 %v2537
      %2549 = vmatpush.bf16.msra.mxu0 %v2536
      %2550 = vmatpush.bf16.msra.mxu0 %v2535
      %2551 = vmatpush.bf16.msra.mxu0 %v2534
      %2552 = vmatpush.bf16.msra.mxu0 %v2533
      %2553 = vmatpush.bf16.msra.mxu0 %v2532
      %2554 = vmatpush.bf16.msra.mxu0 %v2531
      %2555 = vmatmul.bf16.gmra.mxu0 %v2491
      %v2556 = vpop.f32.mrf.mxu0
      %v2557 = vadd.f32 %v2456, %v2556
      %v2558 = vpop.f32.mrf.mxu0
      %v2559 = vadd.f32 %v2458, %v2558
      %2560 = vmatmul.bf16.gmra.mxu0 %v2492
      %v2561 = vpop.f32.mrf.mxu0
      %v2562 = vadd.f32 %v2461, %v2561
      %v2563 = vpop.f32.mrf.mxu0
      %v2564 = vadd.f32 %v2463, %v2563
      %2565 = vmatmul.bf16.gmra.mxu0 %v2493
      %v2566 = vpop.f32.mrf.mxu0
      %v2567 = vadd.f32 %v2466, %v2566
      %v2568 = vpop.f32.mrf.mxu0
      %v2569 = vadd.f32 %v2468, %v2568
      %2570 = vmatmul.bf16.gmra.mxu0 %v2494
      %v2571 = vpop.f32.mrf.mxu0
      %v2572 = vadd.f32 %v2471, %v2571
      %v2573 = vpop.f32.mrf.mxu0
      %v2574 = vadd.f32 %v2473, %v2573
      %2575 = vdwg.mxu0
      %v2576 = vld [vmem:[#allocation2 + $0x80] sm:$0xf]
      %v2577 = vld [vmem:[#allocation2 + $0x84] sm:$0xf]
      %v2578 = vld [vmem:[#allocation2 + $0x88] sm:$0xf]
      %v2579 = vld [vmem:[#allocation2 + $0x8c] sm:$0xf]
      %v2580 = vld [vmem:[#allocation2 + $0x90] sm:$0xf]
      %v2581 = vld [vmem:[#allocation2 + $0x94] sm:$0xf]
      %v2582 = vld [vmem:[#allocation2 + $0x98] sm:$0xf]
      %v2583 = vld [vmem:[#allocation2 + $0x9c] sm:$0xf]
      %v2592 = vunpack.c.l.b16 %v2576
      %v2593 = vunpack.c.l.b16 %v2577
      %v2594 = vunpack.c.l.b16 %v2578
      %v2595 = vunpack.c.l.b16 %v2579
      %v2596 = vunpack.c.l.b16 %v2580
      %v2597 = vunpack.c.l.b16 %v2581
      %v2598 = vunpack.c.l.b16 %v2582
      %v2599 = vunpack.c.l.b16 %v2583
      %v2600 = vpack.c.b16 %v2593, %v2592
      %v2601 = vpack.c.b16 %v2595, %v2594
      %v2602 = vpack.c.b16 %v2597, %v2596
      %v2603 = vpack.c.b16 %v2599, %v2598
      %2608 = vmatpush.bf16.msra.mxu0 %v2437
      %2609 = vmatpush.bf16.msra.mxu0 %v2436
      %2610 = vmatpush.bf16.msra.mxu0 %v2435
      %2611 = vmatpush.bf16.msra.mxu0 %v2434
      %2612 = vmatpush.bf16.msra.mxu0 %v2433
      %2613 = vmatpush.bf16.msra.mxu0 %v2432
      %2614 = vmatpush.bf16.msra.mxu0 %v2431
      %2615 = vmatpush.bf16.msra.mxu0 %v2430
      %2616 = vmatmul.bf16.gmra.mxu0 %v2600
      %v2617 = vpop.f32.mrf.mxu0
      %v2618 = vadd.f32 0.0, %v2617
      %v2619 = vpop.f32.mrf.mxu0
      %v2620 = vadd.f32 0.0, %v2619
      %2621 = vmatmul.bf16.gmra.mxu0 %v2601
      %v2622 = vpop.f32.mrf.mxu0
      %v2623 = vadd.f32 0.0, %v2622
      %v2624 = vpop.f32.mrf.mxu0
      %v2625 = vadd.f32 0.0, %v2624
      %2626 = vmatmul.bf16.gmra.mxu0 %v2602
      %v2627 = vpop.f32.mrf.mxu0
      %v2628 = vadd.f32 0.0, %v2627
      %v2629 = vpop.f32.mrf.mxu0
      %v2630 = vadd.f32 0.0, %v2629
      %2631 = vmatmul.bf16.gmra.mxu0 %v2603
      %v2632 = vpop.f32.mrf.mxu0
      %v2633 = vadd.f32 0.0, %v2632
      %v2634 = vpop.f32.mrf.mxu0
      %v2635 = vadd.f32 0.0, %v2634
      %2636 = vdwg.mxu0
      %2637 = vmatpush.bf16.msra.mxu0 %v2538
      %2638 = vmatpush.bf16.msra.mxu0 %v2537
      %2639 = vmatpush.bf16.msra.mxu0 %v2536
      %2640 = vmatpush.bf16.msra.mxu0 %v2535
      %2641 = vmatpush.bf16.msra.mxu0 %v2534
      %2642 = vmatpush.bf16.msra.mxu0 %v2533
      %2643 = vmatpush.bf16.msra.mxu0 %v2532
      %2644 = vmatpush.bf16.msra.mxu0 %v2531
      %2645 = vmatmul.bf16.gmra.mxu0 %v2390
      %v2646 = vpop.f32.mrf.mxu0
      %v2647 = vadd.f32 %v2618, %v2646
      %v2648 = vpop.f32.mrf.mxu0
      %v2649 = vadd.f32 %v2620, %v2648
      %2650 = vmatmul.bf16.gmra.mxu0 %v2391
      %v2651 = vpop.f32.mrf.mxu0
      %v2652 = vadd.f32 %v2623, %v2651
      %v2653 = vpop.f32.mrf.mxu0
      %v2654 = vadd.f32 %v2625, %v2653
      %2655 = vmatmul.bf16.gmra.mxu0 %v2392
      %v2656 = vpop.f32.mrf.mxu0
      %v2657 = vadd.f32 %v2628, %v2656
      %v2658 = vpop.f32.mrf.mxu0
      %v2659 = vadd.f32 %v2630, %v2658
      %2660 = vmatmul.bf16.gmra.mxu0 %v2393
      %v2661 = vpop.f32.mrf.mxu0
      %v2662 = vadd.f32 %v2633, %v2661
      %v2663 = vpop.f32.mrf.mxu0
      %v2664 = vadd.f32 %v2635, %v2663
      %2665 = vdwg.mxu0
      %v2666 = vld [vmem:[%s4 + $0x80] sm:$0xf]
      %v2667 = vld [vmem:[%s4 + $0x84] sm:$0xf]
      %v2668 = vld [vmem:[%s4 + $0x88] sm:$0xf]
      %v2669 = vld [vmem:[%s4 + $0x8c] sm:$0xf]
      %v2670 = vld [vmem:[%s4 + $0x90] sm:$0xf]
      %v2671 = vld [vmem:[%s4 + $0x94] sm:$0xf]
      %v2672 = vld [vmem:[%s4 + $0x98] sm:$0xf]
      %v2673 = vld [vmem:[%s4 + $0x9c] sm:$0xf]
      %v2674 = vld [vmem:[%s4 + $0xa0] sm:$0xf]
      %v2675 = vld [vmem:[%s4 + $0xa4] sm:$0xf]
      %v2676 = vld [vmem:[%s4 + $0xa8] sm:$0xf]
      %v2677 = vld [vmem:[%s4 + $0xac] sm:$0xf]
      %v2678 = vld [vmem:[%s4 + $0xb0] sm:$0xf]
      %v2679 = vld [vmem:[%s4 + $0xb4] sm:$0xf]
      %v2680 = vld [vmem:[%s4 + $0xb8] sm:$0xf]
      %v2681 = vld [vmem:[%s4 + $0xbc] sm:$0xf]
      %v2698 = vunpack.c.l.b16 %v2666
      %v2699 = vunpack.c.l.b16 %v2667
      %v2700 = vunpack.c.l.b16 %v2668
      %v2701 = vunpack.c.l.b16 %v2669
      %v2702 = vunpack.c.l.b16 %v2670
      %v2703 = vunpack.c.l.b16 %v2671
      %v2704 = vunpack.c.l.b16 %v2672
      %v2705 = vunpack.c.l.b16 %v2673
      %v2706 = vunpack.c.l.b16 %v2674
      %v2707 = vunpack.c.l.b16 %v2675
      %v2708 = vunpack.c.l.b16 %v2676
      %v2709 = vunpack.c.l.b16 %v2677
      %v2710 = vunpack.c.l.b16 %v2678
      %v2711 = vunpack.c.l.b16 %v2679
      %v2712 = vunpack.c.l.b16 %v2680
      %v2713 = vunpack.c.l.b16 %v2681
      %v2714 = vpack.c.b16 %v2699, %v2698
      %v2715 = vpack.c.b16 %v2701, %v2700
      %v2716 = vpack.c.b16 %v2703, %v2702
      %v2717 = vpack.c.b16 %v2705, %v2704
      %v2718 = vpack.c.b16 %v2707, %v2706
      %v2719 = vpack.c.b16 %v2709, %v2708
      %v2720 = vpack.c.b16 %v2711, %v2710
      %v2721 = vpack.c.b16 %v2713, %v2712
      %2730 = vmatpush.bf16.msra.mxu0 %v2721
      %2731 = vmatpush.bf16.msra.mxu0 %v2720
      %2732 = vmatpush.bf16.msra.mxu0 %v2719
      %2733 = vmatpush.bf16.msra.mxu0 %v2718
      %2734 = vmatpush.bf16.msra.mxu0 %v2717
      %2735 = vmatpush.bf16.msra.mxu0 %v2716
      %2736 = vmatpush.bf16.msra.mxu0 %v2715
      %2737 = vmatpush.bf16.msra.mxu0 %v2714
      %2738 = vmatmul.bf16.gmra.mxu0 %v2600
      %v2739 = vpop.f32.mrf.mxu0
      %v2740 = vadd.f32 0.0, %v2739
      %v2741 = vpop.f32.mrf.mxu0
      %v2742 = vadd.f32 0.0, %v2741
      %2743 = vmatmul.bf16.gmra.mxu0 %v2601
      %v2744 = vpop.f32.mrf.mxu0
      %v2745 = vadd.f32 0.0, %v2744
      %v2746 = vpop.f32.mrf.mxu0
      %v2747 = vadd.f32 0.0, %v2746
      %2748 = vmatmul.bf16.gmra.mxu0 %v2602
      %v2749 = vpop.f32.mrf.mxu0
      %v2750 = vadd.f32 0.0, %v2749
      %v2751 = vpop.f32.mrf.mxu0
      %v2752 = vadd.f32 0.0, %v2751
      %2753 = vmatmul.bf16.gmra.mxu0 %v2603
      %v2754 = vpop.f32.mrf.mxu0
      %v2755 = vadd.f32 0.0, %v2754
      %v2756 = vpop.f32.mrf.mxu0
      %v2757 = vadd.f32 0.0, %v2756
      %2758 = vdwg.mxu0
      %v2759 = vadd.f32 %v2557, %v2740
      %v2760 = vadd.f32 %v2559, %v2742
      %v2761 = vadd.f32 %v2562, %v2745
      %v2762 = vadd.f32 %v2564, %v2747
      %v2763 = vadd.f32 %v2567, %v2750
      %v2764 = vadd.f32 %v2569, %v2752
      %v2765 = vadd.f32 %v2572, %v2755
      %v2766 = vadd.f32 %v2574, %v2757
      %v2767 = vld [vmem:[#allocation2 + $0xa0] sm:$0xf]
      %v2768 = vld [vmem:[#allocation2 + $0xa4] sm:$0xf]
      %v2769 = vld [vmem:[#allocation2 + $0xa8] sm:$0xf]
      %v2770 = vld [vmem:[#allocation2 + $0xac] sm:$0xf]
      %v2771 = vld [vmem:[#allocation2 + $0xb0] sm:$0xf]
      %v2772 = vld [vmem:[#allocation2 + $0xb4] sm:$0xf]
      %v2773 = vld [vmem:[#allocation2 + $0xb8] sm:$0xf]
      %v2774 = vld [vmem:[#allocation2 + $0xbc] sm:$0xf]
      %v2783 = vunpack.c.l.b16 %v2767
      %v2784 = vunpack.c.l.b16 %v2768
      %v2785 = vunpack.c.l.b16 %v2769
      %v2786 = vunpack.c.l.b16 %v2770
      %v2787 = vunpack.c.l.b16 %v2771
      %v2788 = vunpack.c.l.b16 %v2772
      %v2789 = vunpack.c.l.b16 %v2773
      %v2790 = vunpack.c.l.b16 %v2774
      %v2791 = vpack.c.b16 %v2784, %v2783
      %v2792 = vpack.c.b16 %v2786, %v2785
      %v2793 = vpack.c.b16 %v2788, %v2787
      %v2794 = vpack.c.b16 %v2790, %v2789
      %2799 = vmatpush.bf16.msra.mxu0 %v2721
      %2800 = vmatpush.bf16.msra.mxu0 %v2720
      %2801 = vmatpush.bf16.msra.mxu0 %v2719
      %2802 = vmatpush.bf16.msra.mxu0 %v2718
      %2803 = vmatpush.bf16.msra.mxu0 %v2717
      %2804 = vmatpush.bf16.msra.mxu0 %v2716
      %2805 = vmatpush.bf16.msra.mxu0 %v2715
      %2806 = vmatpush.bf16.msra.mxu0 %v2714
      %2807 = vmatmul.bf16.gmra.mxu0 %v2791
      %v2808 = vpop.f32.mrf.mxu0
      %v2809 = vadd.f32 0.0, %v2808
      %v2810 = vpop.f32.mrf.mxu0
      %v2811 = vadd.f32 0.0, %v2810
      %2812 = vmatmul.bf16.gmra.mxu0 %v2792
      %v2813 = vpop.f32.mrf.mxu0
      %v2814 = vadd.f32 0.0, %v2813
      %v2815 = vpop.f32.mrf.mxu0
      %v2816 = vadd.f32 0.0, %v2815
      %2817 = vmatmul.bf16.gmra.mxu0 %v2793
      %v2818 = vpop.f32.mrf.mxu0
      %v2819 = vadd.f32 0.0, %v2818
      %v2820 = vpop.f32.mrf.mxu0
      %v2821 = vadd.f32 0.0, %v2820
      %2822 = vmatmul.bf16.gmra.mxu0 %v2794
      %v2823 = vpop.f32.mrf.mxu0
      %v2824 = vadd.f32 0.0, %v2823
      %v2825 = vpop.f32.mrf.mxu0
      %v2826 = vadd.f32 0.0, %v2825
      %2827 = vdwg.mxu0
      %v2828 = vadd.f32 %v2647, %v2809
      %v2829 = vadd.f32 %v2649, %v2811
      %v2830 = vadd.f32 %v2652, %v2814
      %v2831 = vadd.f32 %v2654, %v2816
      %v2832 = vadd.f32 %v2657, %v2819
      %v2833 = vadd.f32 %v2659, %v2821
      %v2834 = vadd.f32 %v2662, %v2824
      %v2835 = vadd.f32 %v2664, %v2826
      %v2836 = vld [vmem:[%s4 + $0xc0] sm:$0xf]
      %v2837 = vld [vmem:[%s4 + $0xc4] sm:$0xf]
      %v2838 = vld [vmem:[%s4 + $0xc8] sm:$0xf]
      %v2839 = vld [vmem:[%s4 + $0xcc] sm:$0xf]
      %v2840 = vld [vmem:[%s4 + $0xd0] sm:$0xf]
      %v2841 = vld [vmem:[%s4 + $0xd4] sm:$0xf]
      %v2842 = vld [vmem:[%s4 + $0xd8] sm:$0xf]
      %v2843 = vld [vmem:[%s4 + $0xdc] sm:$0xf]
      %v2844 = vld [vmem:[%s4 + $0xe0] sm:$0xf]
      %v2845 = vld [vmem:[%s4 + $0xe4] sm:$0xf]
      %v2846 = vld [vmem:[%s4 + $0xe8] sm:$0xf]
      %v2847 = vld [vmem:[%s4 + $0xec] sm:$0xf]
      %v2848 = vld [vmem:[%s4 + $0xf0] sm:$0xf]
      %v2849 = vld [vmem:[%s4 + $0xf4] sm:$0xf]
      %v2850 = vld [vmem:[%s4 + $0xf8] sm:$0xf]
      %v2851 = vld [vmem:[%s4 + $0xfc] sm:$0xf]
      %v2868 = vunpack.c.l.b16 %v2836
      %v2869 = vunpack.c.l.b16 %v2837
      %v2870 = vunpack.c.l.b16 %v2838
      %v2871 = vunpack.c.l.b16 %v2839
      %v2872 = vunpack.c.l.b16 %v2840
      %v2873 = vunpack.c.l.b16 %v2841
      %v2874 = vunpack.c.l.b16 %v2842
      %v2875 = vunpack.c.l.b16 %v2843
      %v2876 = vunpack.c.l.b16 %v2844
      %v2877 = vunpack.c.l.b16 %v2845
      %v2878 = vunpack.c.l.b16 %v2846
      %v2879 = vunpack.c.l.b16 %v2847
      %v2880 = vunpack.c.l.b16 %v2848
      %v2881 = vunpack.c.l.b16 %v2849
      %v2882 = vunpack.c.l.b16 %v2850
      %v2883 = vunpack.c.l.b16 %v2851
      %v2884 = vpack.c.b16 %v2869, %v2868
      %v2885 = vpack.c.b16 %v2871, %v2870
      %v2886 = vpack.c.b16 %v2873, %v2872
      %v2887 = vpack.c.b16 %v2875, %v2874
      %v2888 = vpack.c.b16 %v2877, %v2876
      %v2889 = vpack.c.b16 %v2879, %v2878
      %v2890 = vpack.c.b16 %v2881, %v2880
      %v2891 = vpack.c.b16 %v2883, %v2882
      %2900 = vmatpush.bf16.msra.mxu0 %v2891
      %2901 = vmatpush.bf16.msra.mxu0 %v2890
      %2902 = vmatpush.bf16.msra.mxu0 %v2889
      %2903 = vmatpush.bf16.msra.mxu0 %v2888
      %2904 = vmatpush.bf16.msra.mxu0 %v2887
      %2905 = vmatpush.bf16.msra.mxu0 %v2886
      %2906 = vmatpush.bf16.msra.mxu0 %v2885
      %2907 = vmatpush.bf16.msra.mxu0 %v2884
      %2908 = vmatmul.bf16.gmra.mxu0 %v2791
      %v2909 = vpop.f32.mrf.mxu0
      %v2910 = vadd.f32 0.0, %v2909
      %v2911 = vpop.f32.mrf.mxu0
      %v2912 = vadd.f32 0.0, %v2911
      %2913 = vmatmul.bf16.gmra.mxu0 %v2792
      %v2914 = vpop.f32.mrf.mxu0
      %v2915 = vadd.f32 0.0, %v2914
      %v2916 = vpop.f32.mrf.mxu0
      %v2917 = vadd.f32 0.0, %v2916
      %2918 = vmatmul.bf16.gmra.mxu0 %v2793
      %v2919 = vpop.f32.mrf.mxu0
      %v2920 = vadd.f32 0.0, %v2919
      %v2921 = vpop.f32.mrf.mxu0
      %v2922 = vadd.f32 0.0, %v2921
      %2923 = vmatmul.bf16.gmra.mxu0 %v2794
      %v2924 = vpop.f32.mrf.mxu0
      %v2925 = vadd.f32 0.0, %v2924
      %v2926 = vpop.f32.mrf.mxu0
      %v2927 = vadd.f32 0.0, %v2926
      %2928 = vdwg.mxu0
      %v2929 = vadd.f32 %v2759, %v2910
      %v2930 = vadd.f32 %v2760, %v2912
      %v2931 = vadd.f32 %v2761, %v2915
      %v2932 = vadd.f32 %v2762, %v2917
      %v2933 = vadd.f32 %v2763, %v2920
      %v2934 = vadd.f32 %v2764, %v2922
      %v2935 = vadd.f32 %v2765, %v2925
      %v2936 = vadd.f32 %v2766, %v2927
      %v2937 = vld [vmem:[#allocation2 + $0xc0] sm:$0xf]
      %v2938 = vld [vmem:[#allocation2 + $0xc4] sm:$0xf]
      %v2939 = vld [vmem:[#allocation2 + $0xc8] sm:$0xf]
      %v2940 = vld [vmem:[#allocation2 + $0xcc] sm:$0xf]
      %v2941 = vld [vmem:[#allocation2 + $0xd0] sm:$0xf]
      %v2942 = vld [vmem:[#allocation2 + $0xd4] sm:$0xf]
      %v2943 = vld [vmem:[#allocation2 + $0xd8] sm:$0xf]
      %v2944 = vld [vmem:[#allocation2 + $0xdc] sm:$0xf]
      %v2953 = vunpack.c.l.b16 %v2937
      %v2954 = vunpack.c.l.b16 %v2938
      %v2955 = vunpack.c.l.b16 %v2939
      %v2956 = vunpack.c.l.b16 %v2940
      %v2957 = vunpack.c.l.b16 %v2941
      %v2958 = vunpack.c.l.b16 %v2942
      %v2959 = vunpack.c.l.b16 %v2943
      %v2960 = vunpack.c.l.b16 %v2944
      %v2961 = vpack.c.b16 %v2954, %v2953
      %v2962 = vpack.c.b16 %v2956, %v2955
      %v2963 = vpack.c.b16 %v2958, %v2957
      %v2964 = vpack.c.b16 %v2960, %v2959
      %2969 = vmatpush.bf16.msra.mxu0 %v2891
      %2970 = vmatpush.bf16.msra.mxu0 %v2890
      %2971 = vmatpush.bf16.msra.mxu0 %v2889
      %2972 = vmatpush.bf16.msra.mxu0 %v2888
      %2973 = vmatpush.bf16.msra.mxu0 %v2887
      %2974 = vmatpush.bf16.msra.mxu0 %v2886
      %2975 = vmatpush.bf16.msra.mxu0 %v2885
      %2976 = vmatpush.bf16.msra.mxu0 %v2884
      %2977 = vmatmul.bf16.gmra.mxu0 %v2961
      %v2978 = vpop.f32.mrf.mxu0
      %v2979 = vadd.f32 0.0, %v2978
      %v2980 = vpop.f32.mrf.mxu0
      %v2981 = vadd.f32 0.0, %v2980
      %2982 = vmatmul.bf16.gmra.mxu0 %v2962
      %v2983 = vpop.f32.mrf.mxu0
      %v2984 = vadd.f32 0.0, %v2983
      %v2985 = vpop.f32.mrf.mxu0
      %v2986 = vadd.f32 0.0, %v2985
      %2987 = vmatmul.bf16.gmra.mxu0 %v2963
      %v2988 = vpop.f32.mrf.mxu0
      %v2989 = vadd.f32 0.0, %v2988
      %v2990 = vpop.f32.mrf.mxu0
      %v2991 = vadd.f32 0.0, %v2990
      %2992 = vmatmul.bf16.gmra.mxu0 %v2964
      %v2993 = vpop.f32.mrf.mxu0
      %v2994 = vadd.f32 0.0, %v2993
      %v2995 = vpop.f32.mrf.mxu0
      %v2996 = vadd.f32 0.0, %v2995
      %2997 = vdwg.mxu0
      %v2998 = vadd.f32 %v2828, %v2979
      %v2999 = vadd.f32 %v2829, %v2981
      %v3000 = vadd.f32 %v2830, %v2984
      %v3001 = vadd.f32 %v2831, %v2986
      %v3002 = vadd.f32 %v2832, %v2989
      %v3003 = vadd.f32 %v2833, %v2991
      %v3004 = vadd.f32 %v2834, %v2994
      %v3005 = vadd.f32 %v2835, %v2996
      %v3006 = vld [vmem:[%s4 + $0x100] sm:$0xf]
      %v3007 = vld [vmem:[%s4 + $0x104] sm:$0xf]
      %v3008 = vld [vmem:[%s4 + $0x108] sm:$0xf]
      %v3009 = vld [vmem:[%s4 + $0x10c] sm:$0xf]
      %v3010 = vld [vmem:[%s4 + $0x110] sm:$0xf]
      %v3011 = vld [vmem:[%s4 + $0x114] sm:$0xf]
      %v3012 = vld [vmem:[%s4 + $0x118] sm:$0xf]
      %v3013 = vld [vmem:[%s4 + $0x11c] sm:$0xf]
      %v3014 = vld [vmem:[%s4 + $0x120] sm:$0xf]
      %v3015 = vld [vmem:[%s4 + $0x124] sm:$0xf]
      %v3016 = vld [vmem:[%s4 + $0x128] sm:$0xf]
      %v3017 = vld [vmem:[%s4 + $0x12c] sm:$0xf]
      %v3018 = vld [vmem:[%s4 + $0x130] sm:$0xf]
      %v3019 = vld [vmem:[%s4 + $0x134] sm:$0xf]
      %v3020 = vld [vmem:[%s4 + $0x138] sm:$0xf]
      %v3021 = vld [vmem:[%s4 + $0x13c] sm:$0xf]
      %v3038 = vunpack.c.l.b16 %v3006
      %v3039 = vunpack.c.l.b16 %v3007
      %v3040 = vunpack.c.l.b16 %v3008
      %v3041 = vunpack.c.l.b16 %v3009
      %v3042 = vunpack.c.l.b16 %v3010
      %v3043 = vunpack.c.l.b16 %v3011
      %v3044 = vunpack.c.l.b16 %v3012
      %v3045 = vunpack.c.l.b16 %v3013
      %v3046 = vunpack.c.l.b16 %v3014
      %v3047 = vunpack.c.l.b16 %v3015
      %v3048 = vunpack.c.l.b16 %v3016
      %v3049 = vunpack.c.l.b16 %v3017
      %v3050 = vunpack.c.l.b16 %v3018
      %v3051 = vunpack.c.l.b16 %v3019
      %v3052 = vunpack.c.l.b16 %v3020
      %v3053 = vunpack.c.l.b16 %v3021
      %v3054 = vpack.c.b16 %v3039, %v3038
      %v3055 = vpack.c.b16 %v3041, %v3040
      %v3056 = vpack.c.b16 %v3043, %v3042
      %v3057 = vpack.c.b16 %v3045, %v3044
      %v3058 = vpack.c.b16 %v3047, %v3046
      %v3059 = vpack.c.b16 %v3049, %v3048
      %v3060 = vpack.c.b16 %v3051, %v3050
      %v3061 = vpack.c.b16 %v3053, %v3052
      %3070 = vmatpush.bf16.msra.mxu0 %v3061
      %3071 = vmatpush.bf16.msra.mxu0 %v3060
      %3072 = vmatpush.bf16.msra.mxu0 %v3059
      %3073 = vmatpush.bf16.msra.mxu0 %v3058
      %3074 = vmatpush.bf16.msra.mxu0 %v3057
      %3075 = vmatpush.bf16.msra.mxu0 %v3056
      %3076 = vmatpush.bf16.msra.mxu0 %v3055
      %3077 = vmatpush.bf16.msra.mxu0 %v3054
      %3078 = vmatmul.bf16.gmra.mxu0 %v2961
      %v3079 = vpop.f32.mrf.mxu0
      %v3080 = vadd.f32 0.0, %v3079
      %v3081 = vpop.f32.mrf.mxu0
      %v3082 = vadd.f32 0.0, %v3081
      %3083 = vmatmul.bf16.gmra.mxu0 %v2962
      %v3084 = vpop.f32.mrf.mxu0
      %v3085 = vadd.f32 0.0, %v3084
      %v3086 = vpop.f32.mrf.mxu0
      %v3087 = vadd.f32 0.0, %v3086
      %3088 = vmatmul.bf16.gmra.mxu0 %v2963
      %v3089 = vpop.f32.mrf.mxu0
      %v3090 = vadd.f32 0.0, %v3089
      %v3091 = vpop.f32.mrf.mxu0
      %v3092 = vadd.f32 0.0, %v3091
      %3093 = vmatmul.bf16.gmra.mxu0 %v2964
      %v3094 = vpop.f32.mrf.mxu0
      %v3095 = vadd.f32 0.0, %v3094
      %v3096 = vpop.f32.mrf.mxu0
      %v3097 = vadd.f32 0.0, %v3096
      %3098 = vdwg.mxu0
      %v3099 = vadd.f32 %v2929, %v3080
      %v3100 = vadd.f32 %v2930, %v3082
      %v3101 = vadd.f32 %v2931, %v3085
      %v3102 = vadd.f32 %v2932, %v3087
      %v3103 = vadd.f32 %v2933, %v3090
      %v3104 = vadd.f32 %v2934, %v3092
      %v3105 = vadd.f32 %v2935, %v3095
      %v3106 = vadd.f32 %v2936, %v3097
      %v3107 = vld [vmem:[#allocation2 + $0xe0] sm:$0xf]
      %v3108 = vld [vmem:[#allocation2 + $0xe4] sm:$0xf]
      %v3109 = vld [vmem:[#allocation2 + $0xe8] sm:$0xf]
      %v3110 = vld [vmem:[#allocation2 + $0xec] sm:$0xf]
      %v3111 = vld [vmem:[#allocation2 + $0xf0] sm:$0xf]
      %v3112 = vld [vmem:[#allocation2 + $0xf4] sm:$0xf]
      %v3113 = vld [vmem:[#allocation2 + $0xf8] sm:$0xf]
      %v3114 = vld [vmem:[#allocation2 + $0xfc] sm:$0xf]
      %v3123 = vunpack.c.l.b16 %v3107
      %v3124 = vunpack.c.l.b16 %v3108
      %v3125 = vunpack.c.l.b16 %v3109
      %v3126 = vunpack.c.l.b16 %v3110
      %v3127 = vunpack.c.l.b16 %v3111
      %v3128 = vunpack.c.l.b16 %v3112
      %v3129 = vunpack.c.l.b16 %v3113
      %v3130 = vunpack.c.l.b16 %v3114
      %v3131 = vpack.c.b16 %v3124, %v3123
      %v3132 = vpack.c.b16 %v3126, %v3125
      %v3133 = vpack.c.b16 %v3128, %v3127
      %v3134 = vpack.c.b16 %v3130, %v3129
      %3139 = vmatpush.bf16.msra.mxu0 %v3061
      %3140 = vmatpush.bf16.msra.mxu0 %v3060
      %3141 = vmatpush.bf16.msra.mxu0 %v3059
      %3142 = vmatpush.bf16.msra.mxu0 %v3058
      %3143 = vmatpush.bf16.msra.mxu0 %v3057
      %3144 = vmatpush.bf16.msra.mxu0 %v3056
      %3145 = vmatpush.bf16.msra.mxu0 %v3055
      %3146 = vmatpush.bf16.msra.mxu0 %v3054
      %3147 = vmatmul.bf16.gmra.mxu0 %v3131
      %v3148 = vpop.f32.mrf.mxu0
      %v3149 = vadd.f32 0.0, %v3148
      %v3150 = vpop.f32.mrf.mxu0
      %v3151 = vadd.f32 0.0, %v3150
      %3152 = vmatmul.bf16.gmra.mxu0 %v3132
      %v3153 = vpop.f32.mrf.mxu0
      %v3154 = vadd.f32 0.0, %v3153
      %v3155 = vpop.f32.mrf.mxu0
      %v3156 = vadd.f32 0.0, %v3155
      %3157 = vmatmul.bf16.gmra.mxu0 %v3133
      %v3158 = vpop.f32.mrf.mxu0
      %v3159 = vadd.f32 0.0, %v3158
      %v3160 = vpop.f32.mrf.mxu0
      %v3161 = vadd.f32 0.0, %v3160
      %3162 = vmatmul.bf16.gmra.mxu0 %v3134
      %v3163 = vpop.f32.mrf.mxu0
      %v3164 = vadd.f32 0.0, %v3163
      %v3165 = vpop.f32.mrf.mxu0
      %v3166 = vadd.f32 0.0, %v3165
      %3167 = vdwg.mxu0
      %v3168 = vadd.f32 %v2998, %v3149
      %v3169 = vadd.f32 %v2999, %v3151
      %v3170 = vadd.f32 %v3000, %v3154
      %v3171 = vadd.f32 %v3001, %v3156
      %v3172 = vadd.f32 %v3002, %v3159
      %v3173 = vadd.f32 %v3003, %v3161
      %v3174 = vadd.f32 %v3004, %v3164
      %v3175 = vadd.f32 %v3005, %v3166
      %v3176 = vmax.f32 %v3099, %v3168
      %v3177 = vmax.f32 %v3100, %v3169
      %v3178 = vmax.f32 %v3101, %v3170
      %v3179 = vmax.f32 %v3102, %v3171
      %v3180 = vmax.f32 %v3103, %v3172
      %v3181 = vmax.f32 %v3104, %v3173
      %v3182 = vmax.f32 %v3105, %v3174
      %v3183 = vmax.f32 %v3106, %v3175
      %v3184 = vmax.f32 %v3176, 0.0
      %v3185 = vmax.f32 %v3177, 0.0
      %v3186 = vmax.f32 %v3178, 0.0
      %v3187 = vmax.f32 %v3179, 0.0
      %v3188 = vmax.f32 %v3180, 0.0
      %v3189 = vmax.f32 %v3181, 0.0
      %v3190 = vmax.f32 %v3182, 0.0
      %v3191 = vmax.f32 %v3183, 0.0
      %3200 = vrot.lane.b32.xlu0 %v3184, 64
      %v3201 = vpop.permute.xlu0 %3200
      %3202 = vrot.lane.b32.xlu0 %v3185, 64
      %v3203 = vpop.permute.xlu0 %3202
      %3204 = vrot.lane.b32.xlu0 %v3186, 64
      %v3205 = vpop.permute.xlu0 %3204
      %3206 = vrot.lane.b32.xlu0 %v3187, 64
      %v3207 = vpop.permute.xlu0 %3206
      %3208 = vrot.lane.b32.xlu0 %v3188, 64
      %v3209 = vpop.permute.xlu0 %3208
      %3210 = vrot.lane.b32.xlu0 %v3189, 64
      %v3211 = vpop.permute.xlu0 %3210
      %3212 = vrot.lane.b32.xlu0 %v3190, 64
      %v3213 = vpop.permute.xlu0 %3212
      %3214 = vrot.lane.b32.xlu0 %v3191, 64
      %v3215 = vpop.permute.xlu0 %3214
      %v3224 = vmax.f32 %v3184, %v3201
      %v3225 = vmax.f32 %v3185, %v3203
      %v3226 = vmax.f32 %v3186, %v3205
      %v3227 = vmax.f32 %v3187, %v3207
      %v3228 = vmax.f32 %v3188, %v3209
      %v3229 = vmax.f32 %v3189, %v3211
      %v3230 = vmax.f32 %v3190, %v3213
      %v3231 = vmax.f32 %v3191, %v3215
      %v3232 = vld [vmem:[%s5] sm:$0x1]
      %v3234 = vperm.slane %v3232, 0
      %v3236 = vmul.f32 %v3224, %v3234
      %v3237 = vmul.f32 %v3225, %v3234
      %v3238 = vmul.f32 %v3226, %v3234
      %v3239 = vmul.f32 %v3227, %v3234
      %v3240 = vmul.f32 %v3228, %v3234
      %v3241 = vmul.f32 %v3229, %v3234
      %v3242 = vmul.f32 %v3230, %v3234
      %v3243 = vmul.f32 %v3231, %v3234
      %v3244 = vld [vmem:[%s6] sm:$0x1]
      %v3246 = vperm.slane %v3244, 0
      %v3248 = vadd.f32 %v3236, %v3246
      %v3249 = vadd.f32 %v3237, %v3246
      %v3250 = vadd.f32 %v3238, %v3246
      %v3251 = vadd.f32 %v3239, %v3246
      %v3252 = vadd.f32 %v3240, %v3246
      %v3253 = vadd.f32 %v3241, %v3246
      %v3254 = vadd.f32 %v3242, %v3246
      %v3255 = vadd.f32 %v3243, %v3246
      %v3256 = vpack.c.bf16 %v3248, %v3248
      %v3257 = vpack.c.bf16 %v3249, %v3249
      %v3258 = vpack.c.bf16 %v3250, %v3250
      %v3259 = vpack.c.bf16 %v3251, %v3251
      %v3260 = vpack.c.bf16 %v3252, %v3252
      %v3261 = vpack.c.bf16 %v3253, %v3253
      %v3262 = vpack.c.bf16 %v3254, %v3254
      %v3263 = vpack.c.bf16 %v3255, %v3255
      %3272 = vrot.lane.b32.xlu0 %v3256, 64
      %v3273 = vpop.permute.xlu0 %3272
      %3274 = vrot.lane.b32.xlu0 %v3257, 64
      %v3275 = vpop.permute.xlu0 %3274
      %3276 = vrot.lane.b32.xlu0 %v3258, 64
      %v3277 = vpop.permute.xlu0 %3276
      %3278 = vrot.lane.b32.xlu0 %v3259, 64
      %v3279 = vpop.permute.xlu0 %3278
      %3280 = vrot.lane.b32.xlu0 %v3260, 64
      %v3281 = vpop.permute.xlu0 %3280
      %3282 = vrot.lane.b32.xlu0 %v3261, 64
      %v3283 = vpop.permute.xlu0 %3282
      %3284 = vrot.lane.b32.xlu0 %v3262, 64
      %v3285 = vpop.permute.xlu0 %3284
      %3286 = vrot.lane.b32.xlu0 %v3263, 64
      %v3287 = vpop.permute.xlu0 %3286
      %vm3296 = vcmask 1043968
      %3297 = vst.msk [vmem:[#allocation3] sm:$0xf] %vm3296, %v3273
      %3298 = vst.msk [vmem:[#allocation3 + $0x8] sm:$0xf] %vm3296, %v3275
      %3299 = vst.msk [vmem:[#allocation3 + $0x10] sm:$0xf] %vm3296, %v3277
      %3300 = vst.msk [vmem:[#allocation3 + $0x18] sm:$0xf] %vm3296, %v3279
      %3301 = vst.msk [vmem:[#allocation3 + $0x20] sm:$0xf] %vm3296, %v3281
      %3302 = vst.msk [vmem:[#allocation3 + $0x28] sm:$0xf] %vm3296, %v3283
      %3303 = vst.msk [vmem:[#allocation3 + $0x30] sm:$0xf] %vm3296, %v3285
      %3304 = vst.msk [vmem:[#allocation3 + $0x38] sm:$0xf] %vm3296, %v3287
      %v3305 = vld [vmem:[#allocation2 + $0x80] sm:$0xf]
      %v3306 = vld [vmem:[#allocation2 + $0x84] sm:$0xf]
      %v3307 = vld [vmem:[#allocation2 + $0x88] sm:$0xf]
      %v3308 = vld [vmem:[#allocation2 + $0x8c] sm:$0xf]
      %v3309 = vld [vmem:[#allocation2 + $0x90] sm:$0xf]
      %v3310 = vld [vmem:[#allocation2 + $0x94] sm:$0xf]
      %v3311 = vld [vmem:[#allocation2 + $0x98] sm:$0xf]
      %v3312 = vld [vmem:[#allocation2 + $0x9c] sm:$0xf]
      %v3313 = vld [vmem:[%s4] sm:$0xf]
      %v3314 = vld [vmem:[%s4 + $0x4] sm:$0xf]
      %v3315 = vld [vmem:[%s4 + $0x8] sm:$0xf]
      %v3316 = vld [vmem:[%s4 + $0xc] sm:$0xf]
      %v3317 = vld [vmem:[%s4 + $0x10] sm:$0xf]
      %v3318 = vld [vmem:[%s4 + $0x14] sm:$0xf]
      %v3319 = vld [vmem:[%s4 + $0x18] sm:$0xf]
      %v3320 = vld [vmem:[%s4 + $0x1c] sm:$0xf]
      %v3321 = vld [vmem:[%s4 + $0x20] sm:$0xf]
      %v3322 = vld [vmem:[%s4 + $0x24] sm:$0xf]
      %v3323 = vld [vmem:[%s4 + $0x28] sm:$0xf]
      %v3324 = vld [vmem:[%s4 + $0x2c] sm:$0xf]
      %v3325 = vld [vmem:[%s4 + $0x30] sm:$0xf]
      %v3326 = vld [vmem:[%s4 + $0x34] sm:$0xf]
      %v3327 = vld [vmem:[%s4 + $0x38] sm:$0xf]
      %v3328 = vld [vmem:[%s4 + $0x3c] sm:$0xf]
      %v3329 = vld [vmem:[#allocation2 + $0xa0] sm:$0xf]
      %v3330 = vld [vmem:[#allocation2 + $0xa4] sm:$0xf]
      %v3331 = vld [vmem:[#allocation2 + $0xa8] sm:$0xf]
      %v3332 = vld [vmem:[#allocation2 + $0xac] sm:$0xf]
      %v3333 = vld [vmem:[#allocation2 + $0xb0] sm:$0xf]
      %v3334 = vld [vmem:[#allocation2 + $0xb4] sm:$0xf]
      %v3335 = vld [vmem:[#allocation2 + $0xb8] sm:$0xf]
      %v3336 = vld [vmem:[#allocation2 + $0xbc] sm:$0xf]
      %v3337 = vld [vmem:[%s4 + $0x40] sm:$0xf]
      %v3338 = vld [vmem:[%s4 + $0x44] sm:$0xf]
      %v3339 = vld [vmem:[%s4 + $0x48] sm:$0xf]
      %v3340 = vld [vmem:[%s4 + $0x4c] sm:$0xf]
      %v3341 = vld [vmem:[%s4 + $0x50] sm:$0xf]
      %v3342 = vld [vmem:[%s4 + $0x54] sm:$0xf]
      %v3343 = vld [vmem:[%s4 + $0x58] sm:$0xf]
      %v3344 = vld [vmem:[%s4 + $0x5c] sm:$0xf]
      %v3345 = vld [vmem:[%s4 + $0x60] sm:$0xf]
      %v3346 = vld [vmem:[%s4 + $0x64] sm:$0xf]
      %v3347 = vld [vmem:[%s4 + $0x68] sm:$0xf]
      %v3348 = vld [vmem:[%s4 + $0x6c] sm:$0xf]
      %v3349 = vld [vmem:[%s4 + $0x70] sm:$0xf]
      %v3350 = vld [vmem:[%s4 + $0x74] sm:$0xf]
      %v3351 = vld [vmem:[%s4 + $0x78] sm:$0xf]
      %v3352 = vld [vmem:[%s4 + $0x7c] sm:$0xf]
      %v3361 = vunpack.c.l.b16 %v3329
      %v3362 = vunpack.c.l.b16 %v3330
      %v3363 = vunpack.c.l.b16 %v3331
      %v3364 = vunpack.c.l.b16 %v3332
      %v3365 = vunpack.c.l.b16 %v3333
      %v3366 = vunpack.c.l.b16 %v3334
      %v3367 = vunpack.c.l.b16 %v3335
      %v3368 = vunpack.c.l.b16 %v3336
      %v3369 = vpack.c.b16 %v3362, %v3361
      %v3370 = vpack.c.b16 %v3364, %v3363
      %v3371 = vpack.c.b16 %v3366, %v3365
      %v3372 = vpack.c.b16 %v3368, %v3367
      %v3393 = vunpack.c.l.b16 %v3337
      %v3394 = vunpack.c.l.b16 %v3338
      %v3395 = vunpack.c.l.b16 %v3339
      %v3396 = vunpack.c.l.b16 %v3340
      %v3397 = vunpack.c.l.b16 %v3341
      %v3398 = vunpack.c.l.b16 %v3342
      %v3399 = vunpack.c.l.b16 %v3343
      %v3400 = vunpack.c.l.b16 %v3344
      %v3401 = vunpack.c.l.b16 %v3345
      %v3402 = vunpack.c.l.b16 %v3346
      %v3403 = vunpack.c.l.b16 %v3347
      %v3404 = vunpack.c.l.b16 %v3348
      %v3405 = vunpack.c.l.b16 %v3349
      %v3406 = vunpack.c.l.b16 %v3350
      %v3407 = vunpack.c.l.b16 %v3351
      %v3408 = vunpack.c.l.b16 %v3352
      %v3409 = vpack.c.b16 %v3394, %v3393
      %v3410 = vpack.c.b16 %v3396, %v3395
      %v3411 = vpack.c.b16 %v3398, %v3397
      %v3412 = vpack.c.b16 %v3400, %v3399
      %v3413 = vpack.c.b16 %v3402, %v3401
      %v3414 = vpack.c.b16 %v3404, %v3403
      %v3415 = vpack.c.b16 %v3406, %v3405
      %v3416 = vpack.c.b16 %v3408, %v3407
      %3425 = vmatpush.bf16.msra.mxu0 %v3416
      %3426 = vmatpush.bf16.msra.mxu0 %v3415
      %3427 = vmatpush.bf16.msra.mxu0 %v3414
      %3428 = vmatpush.bf16.msra.mxu0 %v3413
      %3429 = vmatpush.bf16.msra.mxu0 %v3412
      %3430 = vmatpush.bf16.msra.mxu0 %v3411
      %3431 = vmatpush.bf16.msra.mxu0 %v3410
      %3432 = vmatpush.bf16.msra.mxu0 %v3409
      %3433 = vmatmul.bf16.gmra.mxu0 %v3369
      %v3434 = vpop.f32.mrf.mxu0
      %v3435 = vadd.f32 0.0, %v3434
      %v3436 = vpop.f32.mrf.mxu0
      %v3437 = vadd.f32 0.0, %v3436
      %3438 = vmatmul.bf16.gmra.mxu0 %v3370
      %v3439 = vpop.f32.mrf.mxu0
      %v3440 = vadd.f32 0.0, %v3439
      %v3441 = vpop.f32.mrf.mxu0
      %v3442 = vadd.f32 0.0, %v3441
      %3443 = vmatmul.bf16.gmra.mxu0 %v3371
      %v3444 = vpop.f32.mrf.mxu0
      %v3445 = vadd.f32 0.0, %v3444
      %v3446 = vpop.f32.mrf.mxu0
      %v3447 = vadd.f32 0.0, %v3446
      %3448 = vmatmul.bf16.gmra.mxu0 %v3372
      %v3449 = vpop.f32.mrf.mxu0
      %v3450 = vadd.f32 0.0, %v3449
      %v3451 = vpop.f32.mrf.mxu0
      %v3452 = vadd.f32 0.0, %v3451
      %3453 = vdwg.mxu0
      %v3462 = vunpack.c.l.b16 %v3305
      %v3463 = vunpack.c.l.b16 %v3306
      %v3464 = vunpack.c.l.b16 %v3307
      %v3465 = vunpack.c.l.b16 %v3308
      %v3466 = vunpack.c.l.b16 %v3309
      %v3467 = vunpack.c.l.b16 %v3310
      %v3468 = vunpack.c.l.b16 %v3311
      %v3469 = vunpack.c.l.b16 %v3312
      %v3470 = vpack.c.b16 %v3463, %v3462
      %v3471 = vpack.c.b16 %v3465, %v3464
      %v3472 = vpack.c.b16 %v3467, %v3466
      %v3473 = vpack.c.b16 %v3469, %v3468
      %v3494 = vunpack.c.l.b16 %v3313
      %v3495 = vunpack.c.l.b16 %v3314
      %v3496 = vunpack.c.l.b16 %v3315
      %v3497 = vunpack.c.l.b16 %v3316
      %v3498 = vunpack.c.l.b16 %v3317
      %v3499 = vunpack.c.l.b16 %v3318
      %v3500 = vunpack.c.l.b16 %v3319
      %v3501 = vunpack.c.l.b16 %v3320
      %v3502 = vunpack.c.l.b16 %v3321
      %v3503 = vunpack.c.l.b16 %v3322
      %v3504 = vunpack.c.l.b16 %v3323
      %v3505 = vunpack.c.l.b16 %v3324
      %v3506 = vunpack.c.l.b16 %v3325
      %v3507 = vunpack.c.l.b16 %v3326
      %v3508 = vunpack.c.l.b16 %v3327
      %v3509 = vunpack.c.l.b16 %v3328
      %v3510 = vpack.c.b16 %v3495, %v3494
      %v3511 = vpack.c.b16 %v3497, %v3496
      %v3512 = vpack.c.b16 %v3499, %v3498
      %v3513 = vpack.c.b16 %v3501, %v3500
      %v3514 = vpack.c.b16 %v3503, %v3502
      %v3515 = vpack.c.b16 %v3505, %v3504
      %v3516 = vpack.c.b16 %v3507, %v3506
      %v3517 = vpack.c.b16 %v3509, %v3508
      %3526 = vmatpush.bf16.msra.mxu0 %v3517
      %3527 = vmatpush.bf16.msra.mxu0 %v3516
      %3528 = vmatpush.bf16.msra.mxu0 %v3515
      %3529 = vmatpush.bf16.msra.mxu0 %v3514
      %3530 = vmatpush.bf16.msra.mxu0 %v3513
      %3531 = vmatpush.bf16.msra.mxu0 %v3512
      %3532 = vmatpush.bf16.msra.mxu0 %v3511
      %3533 = vmatpush.bf16.msra.mxu0 %v3510
      %3534 = vmatmul.bf16.gmra.mxu0 %v3470
      %v3535 = vpop.f32.mrf.mxu0
      %v3536 = vadd.f32 %v3435, %v3535
      %v3537 = vpop.f32.mrf.mxu0
      %v3538 = vadd.f32 %v3437, %v3537
      %3539 = vmatmul.bf16.gmra.mxu0 %v3471
      %v3540 = vpop.f32.mrf.mxu0
      %v3541 = vadd.f32 %v3440, %v3540
      %v3542 = vpop.f32.mrf.mxu0
      %v3543 = vadd.f32 %v3442, %v3542
      %3544 = vmatmul.bf16.gmra.mxu0 %v3472
      %v3545 = vpop.f32.mrf.mxu0
      %v3546 = vadd.f32 %v3445, %v3545
      %v3547 = vpop.f32.mrf.mxu0
      %v3548 = vadd.f32 %v3447, %v3547
      %3549 = vmatmul.bf16.gmra.mxu0 %v3473
      %v3550 = vpop.f32.mrf.mxu0
      %v3551 = vadd.f32 %v3450, %v3550
      %v3552 = vpop.f32.mrf.mxu0
      %v3553 = vadd.f32 %v3452, %v3552
      %3554 = vdwg.mxu0
      %v3555 = vld [vmem:[#allocation2 + $0xc0] sm:$0xf]
      %v3556 = vld [vmem:[#allocation2 + $0xc4] sm:$0xf]
      %v3557 = vld [vmem:[#allocation2 + $0xc8] sm:$0xf]
      %v3558 = vld [vmem:[#allocation2 + $0xcc] sm:$0xf]
      %v3559 = vld [vmem:[#allocation2 + $0xd0] sm:$0xf]
      %v3560 = vld [vmem:[#allocation2 + $0xd4] sm:$0xf]
      %v3561 = vld [vmem:[#allocation2 + $0xd8] sm:$0xf]
      %v3562 = vld [vmem:[#allocation2 + $0xdc] sm:$0xf]
      %v3571 = vunpack.c.l.b16 %v3555
      %v3572 = vunpack.c.l.b16 %v3556
      %v3573 = vunpack.c.l.b16 %v3557
      %v3574 = vunpack.c.l.b16 %v3558
      %v3575 = vunpack.c.l.b16 %v3559
      %v3576 = vunpack.c.l.b16 %v3560
      %v3577 = vunpack.c.l.b16 %v3561
      %v3578 = vunpack.c.l.b16 %v3562
      %v3579 = vpack.c.b16 %v3572, %v3571
      %v3580 = vpack.c.b16 %v3574, %v3573
      %v3581 = vpack.c.b16 %v3576, %v3575
      %v3582 = vpack.c.b16 %v3578, %v3577
      %3587 = vmatpush.bf16.msra.mxu0 %v3416
      %3588 = vmatpush.bf16.msra.mxu0 %v3415
      %3589 = vmatpush.bf16.msra.mxu0 %v3414
      %3590 = vmatpush.bf16.msra.mxu0 %v3413
      %3591 = vmatpush.bf16.msra.mxu0 %v3412
      %3592 = vmatpush.bf16.msra.mxu0 %v3411
      %3593 = vmatpush.bf16.msra.mxu0 %v3410
      %3594 = vmatpush.bf16.msra.mxu0 %v3409
      %3595 = vmatmul.bf16.gmra.mxu0 %v3579
      %v3596 = vpop.f32.mrf.mxu0
      %v3597 = vadd.f32 0.0, %v3596
      %v3598 = vpop.f32.mrf.mxu0
      %v3599 = vadd.f32 0.0, %v3598
      %3600 = vmatmul.bf16.gmra.mxu0 %v3580
      %v3601 = vpop.f32.mrf.mxu0
      %v3602 = vadd.f32 0.0, %v3601
      %v3603 = vpop.f32.mrf.mxu0
      %v3604 = vadd.f32 0.0, %v3603
      %3605 = vmatmul.bf16.gmra.mxu0 %v3581
      %v3606 = vpop.f32.mrf.mxu0
      %v3607 = vadd.f32 0.0, %v3606
      %v3608 = vpop.f32.mrf.mxu0
      %v3609 = vadd.f32 0.0, %v3608
      %3610 = vmatmul.bf16.gmra.mxu0 %v3582
      %v3611 = vpop.f32.mrf.mxu0
      %v3612 = vadd.f32 0.0, %v3611
      %v3613 = vpop.f32.mrf.mxu0
      %v3614 = vadd.f32 0.0, %v3613
      %3615 = vdwg.mxu0
      %3616 = vmatpush.bf16.msra.mxu0 %v3517
      %3617 = vmatpush.bf16.msra.mxu0 %v3516
      %3618 = vmatpush.bf16.msra.mxu0 %v3515
      %3619 = vmatpush.bf16.msra.mxu0 %v3514
      %3620 = vmatpush.bf16.msra.mxu0 %v3513
      %3621 = vmatpush.bf16.msra.mxu0 %v3512
      %3622 = vmatpush.bf16.msra.mxu0 %v3511
      %3623 = vmatpush.bf16.msra.mxu0 %v3510
      %3624 = vmatmul.bf16.gmra.mxu0 %v3369
      %v3625 = vpop.f32.mrf.mxu0
      %v3626 = vadd.f32 %v3597, %v3625
      %v3627 = vpop.f32.mrf.mxu0
      %v3628 = vadd.f32 %v3599, %v3627
      %3629 = vmatmul.bf16.gmra.mxu0 %v3370
      %v3630 = vpop.f32.mrf.mxu0
      %v3631 = vadd.f32 %v3602, %v3630
      %v3632 = vpop.f32.mrf.mxu0
      %v3633 = vadd.f32 %v3604, %v3632
      %3634 = vmatmul.bf16.gmra.mxu0 %v3371
      %v3635 = vpop.f32.mrf.mxu0
      %v3636 = vadd.f32 %v3607, %v3635
      %v3637 = vpop.f32.mrf.mxu0
      %v3638 = vadd.f32 %v3609, %v3637
      %3639 = vmatmul.bf16.gmra.mxu0 %v3372
      %v3640 = vpop.f32.mrf.mxu0
      %v3641 = vadd.f32 %v3612, %v3640
      %v3642 = vpop.f32.mrf.mxu0
      %v3643 = vadd.f32 %v3614, %v3642
      %3644 = vdwg.mxu0
      %v3645 = vld [vmem:[%s4 + $0x80] sm:$0xf]
      %v3646 = vld [vmem:[%s4 + $0x84] sm:$0xf]
      %v3647 = vld [vmem:[%s4 + $0x88] sm:$0xf]
      %v3648 = vld [vmem:[%s4 + $0x8c] sm:$0xf]
      %v3649 = vld [vmem:[%s4 + $0x90] sm:$0xf]
      %v3650 = vld [vmem:[%s4 + $0x94] sm:$0xf]
      %v3651 = vld [vmem:[%s4 + $0x98] sm:$0xf]
      %v3652 = vld [vmem:[%s4 + $0x9c] sm:$0xf]
      %v3653 = vld [vmem:[%s4 + $0xa0] sm:$0xf]
      %v3654 = vld [vmem:[%s4 + $0xa4] sm:$0xf]
      %v3655 = vld [vmem:[%s4 + $0xa8] sm:$0xf]
      %v3656 = vld [vmem:[%s4 + $0xac] sm:$0xf]
      %v3657 = vld [vmem:[%s4 + $0xb0] sm:$0xf]
      %v3658 = vld [vmem:[%s4 + $0xb4] sm:$0xf]
      %v3659 = vld [vmem:[%s4 + $0xb8] sm:$0xf]
      %v3660 = vld [vmem:[%s4 + $0xbc] sm:$0xf]
      %v3677 = vunpack.c.l.b16 %v3645
      %v3678 = vunpack.c.l.b16 %v3646
      %v3679 = vunpack.c.l.b16 %v3647
      %v3680 = vunpack.c.l.b16 %v3648
      %v3681 = vunpack.c.l.b16 %v3649
      %v3682 = vunpack.c.l.b16 %v3650
      %v3683 = vunpack.c.l.b16 %v3651
      %v3684 = vunpack.c.l.b16 %v3652
      %v3685 = vunpack.c.l.b16 %v3653
      %v3686 = vunpack.c.l.b16 %v3654
      %v3687 = vunpack.c.l.b16 %v3655
      %v3688 = vunpack.c.l.b16 %v3656
      %v3689 = vunpack.c.l.b16 %v3657
      %v3690 = vunpack.c.l.b16 %v3658
      %v3691 = vunpack.c.l.b16 %v3659
      %v3692 = vunpack.c.l.b16 %v3660
      %v3693 = vpack.c.b16 %v3678, %v3677
      %v3694 = vpack.c.b16 %v3680, %v3679
      %v3695 = vpack.c.b16 %v3682, %v3681
      %v3696 = vpack.c.b16 %v3684, %v3683
      %v3697 = vpack.c.b16 %v3686, %v3685
      %v3698 = vpack.c.b16 %v3688, %v3687
      %v3699 = vpack.c.b16 %v3690, %v3689
      %v3700 = vpack.c.b16 %v3692, %v3691
      %3709 = vmatpush.bf16.msra.mxu0 %v3700
      %3710 = vmatpush.bf16.msra.mxu0 %v3699
      %3711 = vmatpush.bf16.msra.mxu0 %v3698
      %3712 = vmatpush.bf16.msra.mxu0 %v3697
      %3713 = vmatpush.bf16.msra.mxu0 %v3696
      %3714 = vmatpush.bf16.msra.mxu0 %v3695
      %3715 = vmatpush.bf16.msra.mxu0 %v3694
      %3716 = vmatpush.bf16.msra.mxu0 %v3693
      %3717 = vmatmul.bf16.gmra.mxu0 %v3579
      %v3718 = vpop.f32.mrf.mxu0
      %v3719 = vadd.f32 0.0, %v3718
      %v3720 = vpop.f32.mrf.mxu0
      %v3721 = vadd.f32 0.0, %v3720
      %3722 = vmatmul.bf16.gmra.mxu0 %v3580
      %v3723 = vpop.f32.mrf.mxu0
      %v3724 = vadd.f32 0.0, %v3723
      %v3725 = vpop.f32.mrf.mxu0
      %v3726 = vadd.f32 0.0, %v3725
      %3727 = vmatmul.bf16.gmra.mxu0 %v3581
      %v3728 = vpop.f32.mrf.mxu0
      %v3729 = vadd.f32 0.0, %v3728
      %v3730 = vpop.f32.mrf.mxu0
      %v3731 = vadd.f32 0.0, %v3730
      %3732 = vmatmul.bf16.gmra.mxu0 %v3582
      %v3733 = vpop.f32.mrf.mxu0
      %v3734 = vadd.f32 0.0, %v3733
      %v3735 = vpop.f32.mrf.mxu0
      %v3736 = vadd.f32 0.0, %v3735
      %3737 = vdwg.mxu0
      %v3738 = vadd.f32 %v3536, %v3719
      %v3739 = vadd.f32 %v3538, %v3721
      %v3740 = vadd.f32 %v3541, %v3724
      %v3741 = vadd.f32 %v3543, %v3726
      %v3742 = vadd.f32 %v3546, %v3729
      %v3743 = vadd.f32 %v3548, %v3731
      %v3744 = vadd.f32 %v3551, %v3734
      %v3745 = vadd.f32 %v3553, %v3736
      %v3746 = vld [vmem:[#allocation2 + $0xe0] sm:$0xf]
      %v3747 = vld [vmem:[#allocation2 + $0xe4] sm:$0xf]
      %v3748 = vld [vmem:[#allocation2 + $0xe8] sm:$0xf]
      %v3749 = vld [vmem:[#allocation2 + $0xec] sm:$0xf]
      %v3750 = vld [vmem:[#allocation2 + $0xf0] sm:$0xf]
      %v3751 = vld [vmem:[#allocation2 + $0xf4] sm:$0xf]
      %v3752 = vld [vmem:[#allocation2 + $0xf8] sm:$0xf]
      %v3753 = vld [vmem:[#allocation2 + $0xfc] sm:$0xf]
      %v3762 = vunpack.c.l.b16 %v3746
      %v3763 = vunpack.c.l.b16 %v3747
      %v3764 = vunpack.c.l.b16 %v3748
      %v3765 = vunpack.c.l.b16 %v3749
      %v3766 = vunpack.c.l.b16 %v3750
      %v3767 = vunpack.c.l.b16 %v3751
      %v3768 = vunpack.c.l.b16 %v3752
      %v3769 = vunpack.c.l.b16 %v3753
      %v3770 = vpack.c.b16 %v3763, %v3762
      %v3771 = vpack.c.b16 %v3765, %v3764
      %v3772 = vpack.c.b16 %v3767, %v3766
      %v3773 = vpack.c.b16 %v3769, %v3768
      %3778 = vmatpush.bf16.msra.mxu0 %v3700
      %3779 = vmatpush.bf16.msra.mxu0 %v3699
      %3780 = vmatpush.bf16.msra.mxu0 %v3698
      %3781 = vmatpush.bf16.msra.mxu0 %v3697
      %3782 = vmatpush.bf16.msra.mxu0 %v3696
      %3783 = vmatpush.bf16.msra.mxu0 %v3695
      %3784 = vmatpush.bf16.msra.mxu0 %v3694
      %3785 = vmatpush.bf16.msra.mxu0 %v3693
      %3786 = vmatmul.bf16.gmra.mxu0 %v3770
      %v3787 = vpop.f32.mrf.mxu0
      %v3788 = vadd.f32 0.0, %v3787
      %v3789 = vpop.f32.mrf.mxu0
      %v3790 = vadd.f32 0.0, %v3789
      %3791 = vmatmul.bf16.gmra.mxu0 %v3771
      %v3792 = vpop.f32.mrf.mxu0
      %v3793 = vadd.f32 0.0, %v3792
      %v3794 = vpop.f32.mrf.mxu0
      %v3795 = vadd.f32 0.0, %v3794
      %3796 = vmatmul.bf16.gmra.mxu0 %v3772
      %v3797 = vpop.f32.mrf.mxu0
      %v3798 = vadd.f32 0.0, %v3797
      %v3799 = vpop.f32.mrf.mxu0
      %v3800 = vadd.f32 0.0, %v3799
      %3801 = vmatmul.bf16.gmra.mxu0 %v3773
      %v3802 = vpop.f32.mrf.mxu0
      %v3803 = vadd.f32 0.0, %v3802
      %v3804 = vpop.f32.mrf.mxu0
      %v3805 = vadd.f32 0.0, %v3804
      %3806 = vdwg.mxu0
      %v3807 = vadd.f32 %v3626, %v3788
      %v3808 = vadd.f32 %v3628, %v3790
      %v3809 = vadd.f32 %v3631, %v3793
      %v3810 = vadd.f32 %v3633, %v3795
      %v3811 = vadd.f32 %v3636, %v3798
      %v3812 = vadd.f32 %v3638, %v3800
      %v3813 = vadd.f32 %v3641, %v3803
      %v3814 = vadd.f32 %v3643, %v3805
      %v3815 = vld [vmem:[%s4 + $0xc0] sm:$0xf]
      %v3816 = vld [vmem:[%s4 + $0xc4] sm:$0xf]
      %v3817 = vld [vmem:[%s4 + $0xc8] sm:$0xf]
      %v3818 = vld [vmem:[%s4 + $0xcc] sm:$0xf]
      %v3819 = vld [vmem:[%s4 + $0xd0] sm:$0xf]
      %v3820 = vld [vmem:[%s4 + $0xd4] sm:$0xf]
      %v3821 = vld [vmem:[%s4 + $0xd8] sm:$0xf]
      %v3822 = vld [vmem:[%s4 + $0xdc] sm:$0xf]
      %v3823 = vld [vmem:[%s4 + $0xe0] sm:$0xf]
      %v3824 = vld [vmem:[%s4 + $0xe4] sm:$0xf]
      %v3825 = vld [vmem:[%s4 + $0xe8] sm:$0xf]
      %v3826 = vld [vmem:[%s4 + $0xec] sm:$0xf]
      %v3827 = vld [vmem:[%s4 + $0xf0] sm:$0xf]
      %v3828 = vld [vmem:[%s4 + $0xf4] sm:$0xf]
      %v3829 = vld [vmem:[%s4 + $0xf8] sm:$0xf]
      %v3830 = vld [vmem:[%s4 + $0xfc] sm:$0xf]
      %v3847 = vunpack.c.l.b16 %v3815
      %v3848 = vunpack.c.l.b16 %v3816
      %v3849 = vunpack.c.l.b16 %v3817
      %v3850 = vunpack.c.l.b16 %v3818
      %v3851 = vunpack.c.l.b16 %v3819
      %v3852 = vunpack.c.l.b16 %v3820
      %v3853 = vunpack.c.l.b16 %v3821
      %v3854 = vunpack.c.l.b16 %v3822
      %v3855 = vunpack.c.l.b16 %v3823
      %v3856 = vunpack.c.l.b16 %v3824
      %v3857 = vunpack.c.l.b16 %v3825
      %v3858 = vunpack.c.l.b16 %v3826
      %v3859 = vunpack.c.l.b16 %v3827
      %v3860 = vunpack.c.l.b16 %v3828
      %v3861 = vunpack.c.l.b16 %v3829
      %v3862 = vunpack.c.l.b16 %v3830
      %v3863 = vpack.c.b16 %v3848, %v3847
      %v3864 = vpack.c.b16 %v3850, %v3849
      %v3865 = vpack.c.b16 %v3852, %v3851
      %v3866 = vpack.c.b16 %v3854, %v3853
      %v3867 = vpack.c.b16 %v3856, %v3855
      %v3868 = vpack.c.b16 %v3858, %v3857
      %v3869 = vpack.c.b16 %v3860, %v3859
      %v3870 = vpack.c.b16 %v3862, %v3861
      %3879 = vmatpush.bf16.msra.mxu0 %v3870
      %3880 = vmatpush.bf16.msra.mxu0 %v3869
      %3881 = vmatpush.bf16.msra.mxu0 %v3868
      %3882 = vmatpush.bf16.msra.mxu0 %v3867
      %3883 = vmatpush.bf16.msra.mxu0 %v3866
      %3884 = vmatpush.bf16.msra.mxu0 %v3865
      %3885 = vmatpush.bf16.msra.mxu0 %v3864
      %3886 = vmatpush.bf16.msra.mxu0 %v3863
      %3887 = vmatmul.bf16.gmra.mxu0 %v3770
      %v3888 = vpop.f32.mrf.mxu0
      %v3889 = vadd.f32 0.0, %v3888
      %v3890 = vpop.f32.mrf.mxu0
      %v3891 = vadd.f32 0.0, %v3890
      %3892 = vmatmul.bf16.gmra.mxu0 %v3771
      %v3893 = vpop.f32.mrf.mxu0
      %v3894 = vadd.f32 0.0, %v3893
      %v3895 = vpop.f32.mrf.mxu0
      %v3896 = vadd.f32 0.0, %v3895
      %3897 = vmatmul.bf16.gmra.mxu0 %v3772
      %v3898 = vpop.f32.mrf.mxu0
      %v3899 = vadd.f32 0.0, %v3898
      %v3900 = vpop.f32.mrf.mxu0
      %v3901 = vadd.f32 0.0, %v3900
      %3902 = vmatmul.bf16.gmra.mxu0 %v3773
      %v3903 = vpop.f32.mrf.mxu0
      %v3904 = vadd.f32 0.0, %v3903
      %v3905 = vpop.f32.mrf.mxu0
      %v3906 = vadd.f32 0.0, %v3905
      %3907 = vdwg.mxu0
      %v3908 = vadd.f32 %v3738, %v3889
      %v3909 = vadd.f32 %v3739, %v3891
      %v3910 = vadd.f32 %v3740, %v3894
      %v3911 = vadd.f32 %v3741, %v3896
      %v3912 = vadd.f32 %v3742, %v3899
      %v3913 = vadd.f32 %v3743, %v3901
      %v3914 = vadd.f32 %v3744, %v3904
      %v3915 = vadd.f32 %v3745, %v3906
      %v3916 = vld [vmem:[#allocation2 + $0x100] sm:$0xf]
      %v3917 = vld [vmem:[#allocation2 + $0x104] sm:$0xf]
      %v3918 = vld [vmem:[#allocation2 + $0x108] sm:$0xf]
      %v3919 = vld [vmem:[#allocation2 + $0x10c] sm:$0xf]
      %v3920 = vld [vmem:[#allocation2 + $0x110] sm:$0xf]
      %v3921 = vld [vmem:[#allocation2 + $0x114] sm:$0xf]
      %v3922 = vld [vmem:[#allocation2 + $0x118] sm:$0xf]
      %v3923 = vld [vmem:[#allocation2 + $0x11c] sm:$0xf]
      %v3932 = vunpack.c.l.b16 %v3916
      %v3933 = vunpack.c.l.b16 %v3917
      %v3934 = vunpack.c.l.b16 %v3918
      %v3935 = vunpack.c.l.b16 %v3919
      %v3936 = vunpack.c.l.b16 %v3920
      %v3937 = vunpack.c.l.b16 %v3921
      %v3938 = vunpack.c.l.b16 %v3922
      %v3939 = vunpack.c.l.b16 %v3923
      %v3940 = vpack.c.b16 %v3933, %v3932
      %v3941 = vpack.c.b16 %v3935, %v3934
      %v3942 = vpack.c.b16 %v3937, %v3936
      %v3943 = vpack.c.b16 %v3939, %v3938
      %3948 = vmatpush.bf16.msra.mxu0 %v3870
      %3949 = vmatpush.bf16.msra.mxu0 %v3869
      %3950 = vmatpush.bf16.msra.mxu0 %v3868
      %3951 = vmatpush.bf16.msra.mxu0 %v3867
      %3952 = vmatpush.bf16.msra.mxu0 %v3866
      %3953 = vmatpush.bf16.msra.mxu0 %v3865
      %3954 = vmatpush.bf16.msra.mxu0 %v3864
      %3955 = vmatpush.bf16.msra.mxu0 %v3863
      %3956 = vmatmul.bf16.gmra.mxu0 %v3940
      %v3957 = vpop.f32.mrf.mxu0
      %v3958 = vadd.f32 0.0, %v3957
      %v3959 = vpop.f32.mrf.mxu0
      %v3960 = vadd.f32 0.0, %v3959
      %3961 = vmatmul.bf16.gmra.mxu0 %v3941
      %v3962 = vpop.f32.mrf.mxu0
      %v3963 = vadd.f32 0.0, %v3962
      %v3964 = vpop.f32.mrf.mxu0
      %v3965 = vadd.f32 0.0, %v3964
      %3966 = vmatmul.bf16.gmra.mxu0 %v3942
      %v3967 = vpop.f32.mrf.mxu0
      %v3968 = vadd.f32 0.0, %v3967
      %v3969 = vpop.f32.mrf.mxu0
      %v3970 = vadd.f32 0.0, %v3969
      %3971 = vmatmul.bf16.gmra.mxu0 %v3943
      %v3972 = vpop.f32.mrf.mxu0
      %v3973 = vadd.f32 0.0, %v3972
      %v3974 = vpop.f32.mrf.mxu0
      %v3975 = vadd.f32 0.0, %v3974
      %3976 = vdwg.mxu0
      %v3977 = vadd.f32 %v3807, %v3958
      %v3978 = vadd.f32 %v3808, %v3960
      %v3979 = vadd.f32 %v3809, %v3963
      %v3980 = vadd.f32 %v3810, %v3965
      %v3981 = vadd.f32 %v3811, %v3968
      %v3982 = vadd.f32 %v3812, %v3970
      %v3983 = vadd.f32 %v3813, %v3973
      %v3984 = vadd.f32 %v3814, %v3975
      %v3985 = vld [vmem:[%s4 + $0x100] sm:$0xf]
      %v3986 = vld [vmem:[%s4 + $0x104] sm:$0xf]
      %v3987 = vld [vmem:[%s4 + $0x108] sm:$0xf]
      %v3988 = vld [vmem:[%s4 + $0x10c] sm:$0xf]
      %v3989 = vld [vmem:[%s4 + $0x110] sm:$0xf]
      %v3990 = vld [vmem:[%s4 + $0x114] sm:$0xf]
      %v3991 = vld [vmem:[%s4 + $0x118] sm:$0xf]
      %v3992 = vld [vmem:[%s4 + $0x11c] sm:$0xf]
      %v3993 = vld [vmem:[%s4 + $0x120] sm:$0xf]
      %v3994 = vld [vmem:[%s4 + $0x124] sm:$0xf]
      %v3995 = vld [vmem:[%s4 + $0x128] sm:$0xf]
      %v3996 = vld [vmem:[%s4 + $0x12c] sm:$0xf]
      %v3997 = vld [vmem:[%s4 + $0x130] sm:$0xf]
      %v3998 = vld [vmem:[%s4 + $0x134] sm:$0xf]
      %v3999 = vld [vmem:[%s4 + $0x138] sm:$0xf]
      %v4000 = vld [vmem:[%s4 + $0x13c] sm:$0xf]
      %v4017 = vunpack.c.l.b16 %v3985
      %v4018 = vunpack.c.l.b16 %v3986
      %v4019 = vunpack.c.l.b16 %v3987
      %v4020 = vunpack.c.l.b16 %v3988
      %v4021 = vunpack.c.l.b16 %v3989
      %v4022 = vunpack.c.l.b16 %v3990
      %v4023 = vunpack.c.l.b16 %v3991
      %v4024 = vunpack.c.l.b16 %v3992
      %v4025 = vunpack.c.l.b16 %v3993
      %v4026 = vunpack.c.l.b16 %v3994
      %v4027 = vunpack.c.l.b16 %v3995
      %v4028 = vunpack.c.l.b16 %v3996
      %v4029 = vunpack.c.l.b16 %v3997
      %v4030 = vunpack.c.l.b16 %v3998
      %v4031 = vunpack.c.l.b16 %v3999
      %v4032 = vunpack.c.l.b16 %v4000
      %v4033 = vpack.c.b16 %v4018, %v4017
      %v4034 = vpack.c.b16 %v4020, %v4019
      %v4035 = vpack.c.b16 %v4022, %v4021
      %v4036 = vpack.c.b16 %v4024, %v4023
      %v4037 = vpack.c.b16 %v4026, %v4025
      %v4038 = vpack.c.b16 %v4028, %v4027
      %v4039 = vpack.c.b16 %v4030, %v4029
      %v4040 = vpack.c.b16 %v4032, %v4031
      %4049 = vmatpush.bf16.msra.mxu0 %v4040
      %4050 = vmatpush.bf16.msra.mxu0 %v4039
      %4051 = vmatpush.bf16.msra.mxu0 %v4038
      %4052 = vmatpush.bf16.msra.mxu0 %v4037
      %4053 = vmatpush.bf16.msra.mxu0 %v4036
      %4054 = vmatpush.bf16.msra.mxu0 %v4035
      %4055 = vmatpush.bf16.msra.mxu0 %v4034
      %4056 = vmatpush.bf16.msra.mxu0 %v4033
      %4057 = vmatmul.bf16.gmra.mxu0 %v3940
      %v4058 = vpop.f32.mrf.mxu0
      %v4059 = vadd.f32 0.0, %v4058
      %v4060 = vpop.f32.mrf.mxu0
      %v4061 = vadd.f32 0.0, %v4060
      %4062 = vmatmul.bf16.gmra.mxu0 %v3941
      %v4063 = vpop.f32.mrf.mxu0
      %v4064 = vadd.f32 0.0, %v4063
      %v4065 = vpop.f32.mrf.mxu0
      %v4066 = vadd.f32 0.0, %v4065
      %4067 = vmatmul.bf16.gmra.mxu0 %v3942
      %v4068 = vpop.f32.mrf.mxu0
      %v4069 = vadd.f32 0.0, %v4068
      %v4070 = vpop.f32.mrf.mxu0
      %v4071 = vadd.f32 0.0, %v4070
      %4072 = vmatmul.bf16.gmra.mxu0 %v3943
      %v4073 = vpop.f32.mrf.mxu0
      %v4074 = vadd.f32 0.0, %v4073
      %v4075 = vpop.f32.mrf.mxu0
      %v4076 = vadd.f32 0.0, %v4075
      %4077 = vdwg.mxu0
      %v4078 = vadd.f32 %v3908, %v4059
      %v4079 = vadd.f32 %v3909, %v4061
      %v4080 = vadd.f32 %v3910, %v4064
      %v4081 = vadd.f32 %v3911, %v4066
      %v4082 = vadd.f32 %v3912, %v4069
      %v4083 = vadd.f32 %v3913, %v4071
      %v4084 = vadd.f32 %v3914, %v4074
      %v4085 = vadd.f32 %v3915, %v4076
      %v4086 = vld [vmem:[#allocation2 + $0x120] sm:$0xf]
      %v4087 = vld [vmem:[#allocation2 + $0x124] sm:$0xf]
      %v4088 = vld [vmem:[#allocation2 + $0x128] sm:$0xf]
      %v4089 = vld [vmem:[#allocation2 + $0x12c] sm:$0xf]
      %v4090 = vld [vmem:[#allocation2 + $0x130] sm:$0xf]
      %v4091 = vld [vmem:[#allocation2 + $0x134] sm:$0xf]
      %v4092 = vld [vmem:[#allocation2 + $0x138] sm:$0xf]
      %v4093 = vld [vmem:[#allocation2 + $0x13c] sm:$0xf]
      %v4102 = vunpack.c.l.b16 %v4086
      %v4103 = vunpack.c.l.b16 %v4087
      %v4104 = vunpack.c.l.b16 %v4088
      %v4105 = vunpack.c.l.b16 %v4089
      %v4106 = vunpack.c.l.b16 %v4090
      %v4107 = vunpack.c.l.b16 %v4091
      %v4108 = vunpack.c.l.b16 %v4092
      %v4109 = vunpack.c.l.b16 %v4093
      %v4110 = vpack.c.b16 %v4103, %v4102
      %v4111 = vpack.c.b16 %v4105, %v4104
      %v4112 = vpack.c.b16 %v4107, %v4106
      %v4113 = vpack.c.b16 %v4109, %v4108
      %4118 = vmatpush.bf16.msra.mxu0 %v4040
      %4119 = vmatpush.bf16.msra.mxu0 %v4039
      %4120 = vmatpush.bf16.msra.mxu0 %v4038
      %4121 = vmatpush.bf16.msra.mxu0 %v4037
      %4122 = vmatpush.bf16.msra.mxu0 %v4036
      %4123 = vmatpush.bf16.msra.mxu0 %v4035
      %4124 = vmatpush.bf16.msra.mxu0 %v4034
      %4125 = vmatpush.bf16.msra.mxu0 %v4033
      %4126 = vmatmul.bf16.gmra.mxu0 %v4110
      %v4127 = vpop.f32.mrf.mxu0
      %v4128 = vadd.f32 0.0, %v4127
      %v4129 = vpop.f32.mrf.mxu0
      %v4130 = vadd.f32 0.0, %v4129
      %4131 = vmatmul.bf16.gmra.mxu0 %v4111
      %v4132 = vpop.f32.mrf.mxu0
      %v4133 = vadd.f32 0.0, %v4132
      %v4134 = vpop.f32.mrf.mxu0
      %v4135 = vadd.f32 0.0, %v4134
      %4136 = vmatmul.bf16.gmra.mxu0 %v4112
      %v4137 = vpop.f32.mrf.mxu0
      %v4138 = vadd.f32 0.0, %v4137
      %v4139 = vpop.f32.mrf.mxu0
      %v4140 = vadd.f32 0.0, %v4139
      %4141 = vmatmul.bf16.gmra.mxu0 %v4113
      %v4142 = vpop.f32.mrf.mxu0
      %v4143 = vadd.f32 0.0, %v4142
      %v4144 = vpop.f32.mrf.mxu0
      %v4145 = vadd.f32 0.0, %v4144
      %4146 = vdwg.mxu0
      %v4147 = vadd.f32 %v3977, %v4128
      %v4148 = vadd.f32 %v3978, %v4130
      %v4149 = vadd.f32 %v3979, %v4133
      %v4150 = vadd.f32 %v3980, %v4135
      %v4151 = vadd.f32 %v3981, %v4138
      %v4152 = vadd.f32 %v3982, %v4140
      %v4153 = vadd.f32 %v3983, %v4143
      %v4154 = vadd.f32 %v3984, %v4145
      %v4155 = vmax.f32 %v4078, %v4147
      %v4156 = vmax.f32 %v4079, %v4148
      %v4157 = vmax.f32 %v4080, %v4149
      %v4158 = vmax.f32 %v4081, %v4150
      %v4159 = vmax.f32 %v4082, %v4151
      %v4160 = vmax.f32 %v4083, %v4152
      %v4161 = vmax.f32 %v4084, %v4153
      %v4162 = vmax.f32 %v4085, %v4154
      %v4163 = vmax.f32 %v4155, 0.0
      %v4164 = vmax.f32 %v4156, 0.0
      %v4165 = vmax.f32 %v4157, 0.0
      %v4166 = vmax.f32 %v4158, 0.0
      %v4167 = vmax.f32 %v4159, 0.0
      %v4168 = vmax.f32 %v4160, 0.0
      %v4169 = vmax.f32 %v4161, 0.0
      %v4170 = vmax.f32 %v4162, 0.0
      %4179 = vrot.lane.b32.xlu0 %v4163, 64
      %v4180 = vpop.permute.xlu0 %4179
      %4181 = vrot.lane.b32.xlu0 %v4164, 64
      %v4182 = vpop.permute.xlu0 %4181
      %4183 = vrot.lane.b32.xlu0 %v4165, 64
      %v4184 = vpop.permute.xlu0 %4183
      %4185 = vrot.lane.b32.xlu0 %v4166, 64
      %v4186 = vpop.permute.xlu0 %4185
      %4187 = vrot.lane.b32.xlu0 %v4167, 64
      %v4188 = vpop.permute.xlu0 %4187
      %4189 = vrot.lane.b32.xlu0 %v4168, 64
      %v4190 = vpop.permute.xlu0 %4189
      %4191 = vrot.lane.b32.xlu0 %v4169, 64
      %v4192 = vpop.permute.xlu0 %4191
      %4193 = vrot.lane.b32.xlu0 %v4170, 64
      %v4194 = vpop.permute.xlu0 %4193
      %v4203 = vmax.f32 %v4163, %v4180
      %v4204 = vmax.f32 %v4164, %v4182
      %v4205 = vmax.f32 %v4165, %v4184
      %v4206 = vmax.f32 %v4166, %v4186
      %v4207 = vmax.f32 %v4167, %v4188
      %v4208 = vmax.f32 %v4168, %v4190
      %v4209 = vmax.f32 %v4169, %v4192
      %v4210 = vmax.f32 %v4170, %v4194
      %v4211 = vld [vmem:[%s5] sm:$0x1]
      %v4213 = vperm.slane %v4211, 0
      %v4215 = vmul.f32 %v4203, %v4213
      %v4216 = vmul.f32 %v4204, %v4213
      %v4217 = vmul.f32 %v4205, %v4213
      %v4218 = vmul.f32 %v4206, %v4213
      %v4219 = vmul.f32 %v4207, %v4213
      %v4220 = vmul.f32 %v4208, %v4213
      %v4221 = vmul.f32 %v4209, %v4213
      %v4222 = vmul.f32 %v4210, %v4213
      %v4223 = vld [vmem:[%s6] sm:$0x1]
      %v4225 = vperm.slane %v4223, 0
      %v4227 = vadd.f32 %v4215, %v4225
      %v4228 = vadd.f32 %v4216, %v4225
      %v4229 = vadd.f32 %v4217, %v4225
      %v4230 = vadd.f32 %v4218, %v4225
      %v4231 = vadd.f32 %v4219, %v4225
      %v4232 = vadd.f32 %v4220, %v4225
      %v4233 = vadd.f32 %v4221, %v4225
      %v4234 = vadd.f32 %v4222, %v4225
      %v4235 = vpack.c.bf16 %v4227, %v4227
      %v4236 = vpack.c.bf16 %v4228, %v4228
      %v4237 = vpack.c.bf16 %v4229, %v4229
      %v4238 = vpack.c.bf16 %v4230, %v4230
      %v4239 = vpack.c.bf16 %v4231, %v4231
      %v4240 = vpack.c.bf16 %v4232, %v4232
      %v4241 = vpack.c.bf16 %v4233, %v4233
      %v4242 = vpack.c.bf16 %v4234, %v4234
      %4243 = vst.msk [vmem:[#allocation3 + $0x4] sm:$0xf] %vm2317, %v4235
      %4244 = vst.msk [vmem:[#allocation3 + $0xc] sm:$0xf] %vm2317, %v4236
      %4245 = vst.msk [vmem:[#allocation3 + $0x14] sm:$0xf] %vm2317, %v4237
      %4246 = vst.msk [vmem:[#allocation3 + $0x1c] sm:$0xf] %vm2317, %v4238
      %4247 = vst.msk [vmem:[#allocation3 + $0x24] sm:$0xf] %vm2317, %v4239
      %4248 = vst.msk [vmem:[#allocation3 + $0x2c] sm:$0xf] %vm2317, %v4240
      %4249 = vst.msk [vmem:[#allocation3 + $0x34] sm:$0xf] %vm2317, %v4241
      %4250 = vst.msk [vmem:[#allocation3 + $0x3c] sm:$0xf] %vm2317, %v4242
      %v4251 = vld [vmem:[#allocation2 + $0xc0] sm:$0xf]
      %v4252 = vld [vmem:[#allocation2 + $0xc4] sm:$0xf]
      %v4253 = vld [vmem:[#allocation2 + $0xc8] sm:$0xf]
      %v4254 = vld [vmem:[#allocation2 + $0xcc] sm:$0xf]
      %v4255 = vld [vmem:[#allocation2 + $0xd0] sm:$0xf]
      %v4256 = vld [vmem:[#allocation2 + $0xd4] sm:$0xf]
      %v4257 = vld [vmem:[#allocation2 + $0xd8] sm:$0xf]
      %v4258 = vld [vmem:[#allocation2 + $0xdc] sm:$0xf]
      %v4259 = vld [vmem:[%s4] sm:$0xf]
      %v4260 = vld [vmem:[%s4 + $0x4] sm:$0xf]
      %v4261 = vld [vmem:[%s4 + $0x8] sm:$0xf]
      %v4262 = vld [vmem:[%s4 + $0xc] sm:$0xf]
      %v4263 = vld [vmem:[%s4 + $0x10] sm:$0xf]
      %v4264 = vld [vmem:[%s4 + $0x14] sm:$0xf]
      %v4265 = vld [vmem:[%s4 + $0x18] sm:$0xf]
      %v4266 = vld [vmem:[%s4 + $0x1c] sm:$0xf]
      %v4267 = vld [vmem:[%s4 + $0x20] sm:$0xf]
      %v4268 = vld [vmem:[%s4 + $0x24] sm:$0xf]
      %v4269 = vld [vmem:[%s4 + $0x28] sm:$0xf]
      %v4270 = vld [vmem:[%s4 + $0x2c] sm:$0xf]
      %v4271 = vld [vmem:[%s4 + $0x30] sm:$0xf]
      %v4272 = vld [vmem:[%s4 + $0x34] sm:$0xf]
      %v4273 = vld [vmem:[%s4 + $0x38] sm:$0xf]
      %v4274 = vld [vmem:[%s4 + $0x3c] sm:$0xf]
      %v4275 = vld [vmem:[#allocation2 + $0xe0] sm:$0xf]
      %v4276 = vld [vmem:[#allocation2 + $0xe4] sm:$0xf]
      %v4277 = vld [vmem:[#allocation2 + $0xe8] sm:$0xf]
      %v4278 = vld [vmem:[#allocation2 + $0xec] sm:$0xf]
      %v4279 = vld [vmem:[#allocation2 + $0xf0] sm:$0xf]
      %v4280 = vld [vmem:[#allocation2 + $0xf4] sm:$0xf]
      %v4281 = vld [vmem:[#allocation2 + $0xf8] sm:$0xf]
      %v4282 = vld [vmem:[#allocation2 + $0xfc] sm:$0xf]
      %v4283 = vld [vmem:[%s4 + $0x40] sm:$0xf]
      %v4284 = vld [vmem:[%s4 + $0x44] sm:$0xf]
      %v4285 = vld [vmem:[%s4 + $0x48] sm:$0xf]
      %v4286 = vld [vmem:[%s4 + $0x4c] sm:$0xf]
      %v4287 = vld [vmem:[%s4 + $0x50] sm:$0xf]
      %v4288 = vld [vmem:[%s4 + $0x54] sm:$0xf]
      %v4289 = vld [vmem:[%s4 + $0x58] sm:$0xf]
      %v4290 = vld [vmem:[%s4 + $0x5c] sm:$0xf]
      %v4291 = vld [vmem:[%s4 + $0x60] sm:$0xf]
      %v4292 = vld [vmem:[%s4 + $0x64] sm:$0xf]
      %v4293 = vld [vmem:[%s4 + $0x68] sm:$0xf]
      %v4294 = vld [vmem:[%s4 + $0x6c] sm:$0xf]
      %v4295 = vld [vmem:[%s4 + $0x70] sm:$0xf]
      %v4296 = vld [vmem:[%s4 + $0x74] sm:$0xf]
      %v4297 = vld [vmem:[%s4 + $0x78] sm:$0xf]
      %v4298 = vld [vmem:[%s4 + $0x7c] sm:$0xf]
      %v4307 = vunpack.c.l.b16 %v4275
      %v4308 = vunpack.c.l.b16 %v4276
      %v4309 = vunpack.c.l.b16 %v4277
      %v4310 = vunpack.c.l.b16 %v4278
      %v4311 = vunpack.c.l.b16 %v4279
      %v4312 = vunpack.c.l.b16 %v4280
      %v4313 = vunpack.c.l.b16 %v4281
      %v4314 = vunpack.c.l.b16 %v4282
      %v4315 = vpack.c.b16 %v4308, %v4307
      %v4316 = vpack.c.b16 %v4310, %v4309
      %v4317 = vpack.c.b16 %v4312, %v4311
      %v4318 = vpack.c.b16 %v4314, %v4313
      %v4339 = vunpack.c.l.b16 %v4283
      %v4340 = vunpack.c.l.b16 %v4284
      %v4341 = vunpack.c.l.b16 %v4285
      %v4342 = vunpack.c.l.b16 %v4286
      %v4343 = vunpack.c.l.b16 %v4287
      %v4344 = vunpack.c.l.b16 %v4288
      %v4345 = vunpack.c.l.b16 %v4289
      %v4346 = vunpack.c.l.b16 %v4290
      %v4347 = vunpack.c.l.b16 %v4291
      %v4348 = vunpack.c.l.b16 %v4292
      %v4349 = vunpack.c.l.b16 %v4293
      %v4350 = vunpack.c.l.b16 %v4294
      %v4351 = vunpack.c.l.b16 %v4295
      %v4352 = vunpack.c.l.b16 %v4296
      %v4353 = vunpack.c.l.b16 %v4297
      %v4354 = vunpack.c.l.b16 %v4298
      %v4355 = vpack.c.b16 %v4340, %v4339
      %v4356 = vpack.c.b16 %v4342, %v4341
      %v4357 = vpack.c.b16 %v4344, %v4343
      %v4358 = vpack.c.b16 %v4346, %v4345
      %v4359 = vpack.c.b16 %v4348, %v4347
      %v4360 = vpack.c.b16 %v4350, %v4349
      %v4361 = vpack.c.b16 %v4352, %v4351
      %v4362 = vpack.c.b16 %v4354, %v4353
      %4371 = vmatpush.bf16.msra.mxu0 %v4362
      %4372 = vmatpush.bf16.msra.mxu0 %v4361
      %4373 = vmatpush.bf16.msra.mxu0 %v4360
      %4374 = vmatpush.bf16.msra.mxu0 %v4359
      %4375 = vmatpush.bf16.msra.mxu0 %v4358
      %4376 = vmatpush.bf16.msra.mxu0 %v4357
      %4377 = vmatpush.bf16.msra.mxu0 %v4356
      %4378 = vmatpush.bf16.msra.mxu0 %v4355
      %4379 = vmatmul.bf16.gmra.mxu0 %v4315
      %v4380 = vpop.f32.mrf.mxu0
      %v4381 = vadd.f32 0.0, %v4380
      %v4382 = vpop.f32.mrf.mxu0
      %v4383 = vadd.f32 0.0, %v4382
      %4384 = vmatmul.bf16.gmra.mxu0 %v4316
      %v4385 = vpop.f32.mrf.mxu0
      %v4386 = vadd.f32 0.0, %v4385
      %v4387 = vpop.f32.mrf.mxu0
      %v4388 = vadd.f32 0.0, %v4387
      %4389 = vmatmul.bf16.gmra.mxu0 %v4317
      %v4390 = vpop.f32.mrf.mxu0
      %v4391 = vadd.f32 0.0, %v4390
      %v4392 = vpop.f32.mrf.mxu0
      %v4393 = vadd.f32 0.0, %v4392
      %4394 = vmatmul.bf16.gmra.mxu0 %v4318
      %v4395 = vpop.f32.mrf.mxu0
      %v4396 = vadd.f32 0.0, %v4395
      %v4397 = vpop.f32.mrf.mxu0
      %v4398 = vadd.f32 0.0, %v4397
      %4399 = vdwg.mxu0
      %v4408 = vunpack.c.l.b16 %v4251
      %v4409 = vunpack.c.l.b16 %v4252
      %v4410 = vunpack.c.l.b16 %v4253
      %v4411 = vunpack.c.l.b16 %v4254
      %v4412 = vunpack.c.l.b16 %v4255
      %v4413 = vunpack.c.l.b16 %v4256
      %v4414 = vunpack.c.l.b16 %v4257
      %v4415 = vunpack.c.l.b16 %v4258
      %v4416 = vpack.c.b16 %v4409, %v4408
      %v4417 = vpack.c.b16 %v4411, %v4410
      %v4418 = vpack.c.b16 %v4413, %v4412
      %v4419 = vpack.c.b16 %v4415, %v4414
      %v4440 = vunpack.c.l.b16 %v4259
      %v4441 = vunpack.c.l.b16 %v4260
      %v4442 = vunpack.c.l.b16 %v4261
      %v4443 = vunpack.c.l.b16 %v4262
      %v4444 = vunpack.c.l.b16 %v4263
      %v4445 = vunpack.c.l.b16 %v4264
      %v4446 = vunpack.c.l.b16 %v4265
      %v4447 = vunpack.c.l.b16 %v4266
      %v4448 = vunpack.c.l.b16 %v4267
      %v4449 = vunpack.c.l.b16 %v4268
      %v4450 = vunpack.c.l.b16 %v4269
      %v4451 = vunpack.c.l.b16 %v4270
      %v4452 = vunpack.c.l.b16 %v4271
      %v4453 = vunpack.c.l.b16 %v4272
      %v4454 = vunpack.c.l.b16 %v4273
      %v4455 = vunpack.c.l.b16 %v4274
      %v4456 = vpack.c.b16 %v4441, %v4440
      %v4457 = vpack.c.b16 %v4443, %v4442
      %v4458 = vpack.c.b16 %v4445, %v4444
      %v4459 = vpack.c.b16 %v4447, %v4446
      %v4460 = vpack.c.b16 %v4449, %v4448
      %v4461 = vpack.c.b16 %v4451, %v4450
      %v4462 = vpack.c.b16 %v4453, %v4452
      %v4463 = vpack.c.b16 %v4455, %v4454
      %4472 = vmatpush.bf16.msra.mxu0 %v4463
      %4473 = vmatpush.bf16.msra.mxu0 %v4462
      %4474 = vmatpush.bf16.msra.mxu0 %v4461
      %4475 = vmatpush.bf16.msra.mxu0 %v4460
      %4476 = vmatpush.bf16.msra.mxu0 %v4459
      %4477 = vmatpush.bf16.msra.mxu0 %v4458
      %4478 = vmatpush.bf16.msra.mxu0 %v4457
      %4479 = vmatpush.bf16.msra.mxu0 %v4456
      %4480 = vmatmul.bf16.gmra.mxu0 %v4416
      %v4481 = vpop.f32.mrf.mxu0
      %v4482 = vadd.f32 %v4381, %v4481
      %v4483 = vpop.f32.mrf.mxu0
      %v4484 = vadd.f32 %v4383, %v4483
      %4485 = vmatmul.bf16.gmra.mxu0 %v4417
      %v4486 = vpop.f32.mrf.mxu0
      %v4487 = vadd.f32 %v4386, %v4486
      %v4488 = vpop.f32.mrf.mxu0
      %v4489 = vadd.f32 %v4388, %v4488
      %4490 = vmatmul.bf16.gmra.mxu0 %v4418
      %v4491 = vpop.f32.mrf.mxu0
      %v4492 = vadd.f32 %v4391, %v4491
      %v4493 = vpop.f32.mrf.mxu0
      %v4494 = vadd.f32 %v4393, %v4493
      %4495 = vmatmul.bf16.gmra.mxu0 %v4419
      %v4496 = vpop.f32.mrf.mxu0
      %v4497 = vadd.f32 %v4396, %v4496
      %v4498 = vpop.f32.mrf.mxu0
      %v4499 = vadd.f32 %v4398, %v4498
      %4500 = vdwg.mxu0
      %v4501 = vld [vmem:[#allocation2 + $0x100] sm:$0xf]
      %v4502 = vld [vmem:[#allocation2 + $0x104] sm:$0xf]
      %v4503 = vld [vmem:[#allocation2 + $0x108] sm:$0xf]
      %v4504 = vld [vmem:[#allocation2 + $0x10c] sm:$0xf]
      %v4505 = vld [vmem:[#allocation2 + $0x110] sm:$0xf]
      %v4506 = vld [vmem:[#allocation2 + $0x114] sm:$0xf]
      %v4507 = vld [vmem:[#allocation2 + $0x118] sm:$0xf]
      %v4508 = vld [vmem:[#allocation2 + $0x11c] sm:$0xf]
      %v4517 = vunpack.c.l.b16 %v4501
      %v4518 = vunpack.c.l.b16 %v4502
      %v4519 = vunpack.c.l.b16 %v4503
      %v4520 = vunpack.c.l.b16 %v4504
      %v4521 = vunpack.c.l.b16 %v4505
      %v4522 = vunpack.c.l.b16 %v4506
      %v4523 = vunpack.c.l.b16 %v4507
      %v4524 = vunpack.c.l.b16 %v4508
      %v4525 = vpack.c.b16 %v4518, %v4517
      %v4526 = vpack.c.b16 %v4520, %v4519
      %v4527 = vpack.c.b16 %v4522, %v4521
      %v4528 = vpack.c.b16 %v4524, %v4523
      %4533 = vmatpush.bf16.msra.mxu0 %v4362
      %4534 = vmatpush.bf16.msra.mxu0 %v4361
      %4535 = vmatpush.bf16.msra.mxu0 %v4360
      %4536 = vmatpush.bf16.msra.mxu0 %v4359
      %4537 = vmatpush.bf16.msra.mxu0 %v4358
      %4538 = vmatpush.bf16.msra.mxu0 %v4357
      %4539 = vmatpush.bf16.msra.mxu0 %v4356
      %4540 = vmatpush.bf16.msra.mxu0 %v4355
      %4541 = vmatmul.bf16.gmra.mxu0 %v4525
      %v4542 = vpop.f32.mrf.mxu0
      %v4543 = vadd.f32 0.0, %v4542
      %v4544 = vpop.f32.mrf.mxu0
      %v4545 = vadd.f32 0.0, %v4544
      %4546 = vmatmul.bf16.gmra.mxu0 %v4526
      %v4547 = vpop.f32.mrf.mxu0
      %v4548 = vadd.f32 0.0, %v4547
      %v4549 = vpop.f32.mrf.mxu0
      %v4550 = vadd.f32 0.0, %v4549
      %4551 = vmatmul.bf16.gmra.mxu0 %v4527
      %v4552 = vpop.f32.mrf.mxu0
      %v4553 = vadd.f32 0.0, %v4552
      %v4554 = vpop.f32.mrf.mxu0
      %v4555 = vadd.f32 0.0, %v4554
      %4556 = vmatmul.bf16.gmra.mxu0 %v4528
      %v4557 = vpop.f32.mrf.mxu0
      %v4558 = vadd.f32 0.0, %v4557
      %v4559 = vpop.f32.mrf.mxu0
      %v4560 = vadd.f32 0.0, %v4559
      %4561 = vdwg.mxu0
      %4562 = vmatpush.bf16.msra.mxu0 %v4463
      %4563 = vmatpush.bf16.msra.mxu0 %v4462
      %4564 = vmatpush.bf16.msra.mxu0 %v4461
      %4565 = vmatpush.bf16.msra.mxu0 %v4460
      %4566 = vmatpush.bf16.msra.mxu0 %v4459
      %4567 = vmatpush.bf16.msra.mxu0 %v4458
      %4568 = vmatpush.bf16.msra.mxu0 %v4457
      %4569 = vmatpush.bf16.msra.mxu0 %v4456
      %4570 = vmatmul.bf16.gmra.mxu0 %v4315
      %v4571 = vpop.f32.mrf.mxu0
      %v4572 = vadd.f32 %v4543, %v4571
      %v4573 = vpop.f32.mrf.mxu0
      %v4574 = vadd.f32 %v4545, %v4573
      %4575 = vmatmul.bf16.gmra.mxu0 %v4316
      %v4576 = vpop.f32.mrf.mxu0
      %v4577 = vadd.f32 %v4548, %v4576
      %v4578 = vpop.f32.mrf.mxu0
      %v4579 = vadd.f32 %v4550, %v4578
      %4580 = vmatmul.bf16.gmra.mxu0 %v4317
      %v4581 = vpop.f32.mrf.mxu0
      %v4582 = vadd.f32 %v4553, %v4581
      %v4583 = vpop.f32.mrf.mxu0
      %v4584 = vadd.f32 %v4555, %v4583
      %4585 = vmatmul.bf16.gmra.mxu0 %v4318
      %v4586 = vpop.f32.mrf.mxu0
      %v4587 = vadd.f32 %v4558, %v4586
      %v4588 = vpop.f32.mrf.mxu0
      %v4589 = vadd.f32 %v4560, %v4588
      %4590 = vdwg.mxu0
      %v4591 = vld [vmem:[%s4 + $0x80] sm:$0xf]
      %v4592 = vld [vmem:[%s4 + $0x84] sm:$0xf]
      %v4593 = vld [vmem:[%s4 + $0x88] sm:$0xf]
      %v4594 = vld [vmem:[%s4 + $0x8c] sm:$0xf]
      %v4595 = vld [vmem:[%s4 + $0x90] sm:$0xf]
      %v4596 = vld [vmem:[%s4 + $0x94] sm:$0xf]
      %v4597 = vld [vmem:[%s4 + $0x98] sm:$0xf]
      %v4598 = vld [vmem:[%s4 + $0x9c] sm:$0xf]
      %v4599 = vld [vmem:[%s4 + $0xa0] sm:$0xf]
      %v4600 = vld [vmem:[%s4 + $0xa4] sm:$0xf]
      %v4601 = vld [vmem:[%s4 + $0xa8] sm:$0xf]
      %v4602 = vld [vmem:[%s4 + $0xac] sm:$0xf]
      %v4603 = vld [vmem:[%s4 + $0xb0] sm:$0xf]
      %v4604 = vld [vmem:[%s4 + $0xb4] sm:$0xf]
      %v4605 = vld [vmem:[%s4 + $0xb8] sm:$0xf]
      %v4606 = vld [vmem:[%s4 + $0xbc] sm:$0xf]
      %v4623 = vunpack.c.l.b16 %v4591
      %v4624 = vunpack.c.l.b16 %v4592
      %v4625 = vunpack.c.l.b16 %v4593
      %v4626 = vunpack.c.l.b16 %v4594
      %v4627 = vunpack.c.l.b16 %v4595
      %v4628 = vunpack.c.l.b16 %v4596
      %v4629 = vunpack.c.l.b16 %v4597
      %v4630 = vunpack.c.l.b16 %v4598
      %v4631 = vunpack.c.l.b16 %v4599
      %v4632 = vunpack.c.l.b16 %v4600
      %v4633 = vunpack.c.l.b16 %v4601
      %v4634 = vunpack.c.l.b16 %v4602
      %v4635 = vunpack.c.l.b16 %v4603
      %v4636 = vunpack.c.l.b16 %v4604
      %v4637 = vunpack.c.l.b16 %v4605
      %v4638 = vunpack.c.l.b16 %v4606
      %v4639 = vpack.c.b16 %v4624, %v4623
      %v4640 = vpack.c.b16 %v4626, %v4625
      %v4641 = vpack.c.b16 %v4628, %v4627
      %v4642 = vpack.c.b16 %v4630, %v4629
      %v4643 = vpack.c.b16 %v4632, %v4631
      %v4644 = vpack.c.b16 %v4634, %v4633
      %v4645 = vpack.c.b16 %v4636, %v4635
      %v4646 = vpack.c.b16 %v4638, %v4637
      %4655 = vmatpush.bf16.msra.mxu0 %v4646
      %4656 = vmatpush.bf16.msra.mxu0 %v4645
      %4657 = vmatpush.bf16.msra.mxu0 %v4644
      %4658 = vmatpush.bf16.msra.mxu0 %v4643
      %4659 = vmatpush.bf16.msra.mxu0 %v4642
      %4660 = vmatpush.bf16.msra.mxu0 %v4641
      %4661 = vmatpush.bf16.msra.mxu0 %v4640
      %4662 = vmatpush.bf16.msra.mxu0 %v4639
      %4663 = vmatmul.bf16.gmra.mxu0 %v4525
      %v4664 = vpop.f32.mrf.mxu0
      %v4665 = vadd.f32 0.0, %v4664
      %v4666 = vpop.f32.mrf.mxu0
      %v4667 = vadd.f32 0.0, %v4666
      %4668 = vmatmul.bf16.gmra.mxu0 %v4526
      %v4669 = vpop.f32.mrf.mxu0
      %v4670 = vadd.f32 0.0, %v4669
      %v4671 = vpop.f32.mrf.mxu0
      %v4672 = vadd.f32 0.0, %v4671
      %4673 = vmatmul.bf16.gmra.mxu0 %v4527
      %v4674 = vpop.f32.mrf.mxu0
      %v4675 = vadd.f32 0.0, %v4674
      %v4676 = vpop.f32.mrf.mxu0
      %v4677 = vadd.f32 0.0, %v4676
      %4678 = vmatmul.bf16.gmra.mxu0 %v4528
      %v4679 = vpop.f32.mrf.mxu0
      %v4680 = vadd.f32 0.0, %v4679
      %v4681 = vpop.f32.mrf.mxu0
      %v4682 = vadd.f32 0.0, %v4681
      %4683 = vdwg.mxu0
      %v4684 = vadd.f32 %v4482, %v4665
      %v4685 = vadd.f32 %v4484, %v4667
      %v4686 = vadd.f32 %v4487, %v4670
      %v4687 = vadd.f32 %v4489, %v4672
      %v4688 = vadd.f32 %v4492, %v4675
      %v4689 = vadd.f32 %v4494, %v4677
      %v4690 = vadd.f32 %v4497, %v4680
      %v4691 = vadd.f32 %v4499, %v4682
      %v4692 = vld [vmem:[#allocation2 + $0x120] sm:$0xf]
      %v4693 = vld [vmem:[#allocation2 + $0x124] sm:$0xf]
      %v4694 = vld [vmem:[#allocation2 + $0x128] sm:$0xf]
      %v4695 = vld [vmem:[#allocation2 + $0x12c] sm:$0xf]
      %v4696 = vld [vmem:[#allocation2 + $0x130] sm:$0xf]
      %v4697 = vld [vmem:[#allocation2 + $0x134] sm:$0xf]
      %v4698 = vld [vmem:[#allocation2 + $0x138] sm:$0xf]
      %v4699 = vld [vmem:[#allocation2 + $0x13c] sm:$0xf]
      %v4708 = vunpack.c.l.b16 %v4692
      %v4709 = vunpack.c.l.b16 %v4693
      %v4710 = vunpack.c.l.b16 %v4694
      %v4711 = vunpack.c.l.b16 %v4695
      %v4712 = vunpack.c.l.b16 %v4696
      %v4713 = vunpack.c.l.b16 %v4697
      %v4714 = vunpack.c.l.b16 %v4698
      %v4715 = vunpack.c.l.b16 %v4699
      %v4716 = vpack.c.b16 %v4709, %v4708
      %v4717 = vpack.c.b16 %v4711, %v4710
      %v4718 = vpack.c.b16 %v4713, %v4712
      %v4719 = vpack.c.b16 %v4715, %v4714
      %4724 = vmatpush.bf16.msra.mxu0 %v4646
      %4725 = vmatpush.bf16.msra.mxu0 %v4645
      %4726 = vmatpush.bf16.msra.mxu0 %v4644
      %4727 = vmatpush.bf16.msra.mxu0 %v4643
      %4728 = vmatpush.bf16.msra.mxu0 %v4642
      %4729 = vmatpush.bf16.msra.mxu0 %v4641
      %4730 = vmatpush.bf16.msra.mxu0 %v4640
      %4731 = vmatpush.bf16.msra.mxu0 %v4639
      %4732 = vmatmul.bf16.gmra.mxu0 %v4716
      %v4733 = vpop.f32.mrf.mxu0
      %v4734 = vadd.f32 0.0, %v4733
      %v4735 = vpop.f32.mrf.mxu0
      %v4736 = vadd.f32 0.0, %v4735
      %4737 = vmatmul.bf16.gmra.mxu0 %v4717
      %v4738 = vpop.f32.mrf.mxu0
      %v4739 = vadd.f32 0.0, %v4738
      %v4740 = vpop.f32.mrf.mxu0
      %v4741 = vadd.f32 0.0, %v4740
      %4742 = vmatmul.bf16.gmra.mxu0 %v4718
      %v4743 = vpop.f32.mrf.mxu0
      %v4744 = vadd.f32 0.0, %v4743
      %v4745 = vpop.f32.mrf.mxu0
      %v4746 = vadd.f32 0.0, %v4745
      %4747 = vmatmul.bf16.gmra.mxu0 %v4719
      %v4748 = vpop.f32.mrf.mxu0
      %v4749 = vadd.f32 0.0, %v4748
      %v4750 = vpop.f32.mrf.mxu0
      %v4751 = vadd.f32 0.0, %v4750
      %4752 = vdwg.mxu0
      %v4753 = vadd.f32 %v4572, %v4734
      %v4754 = vadd.f32 %v4574, %v4736
      %v4755 = vadd.f32 %v4577, %v4739
      %v4756 = vadd.f32 %v4579, %v4741
      %v4757 = vadd.f32 %v4582, %v4744
      %v4758 = vadd.f32 %v4584, %v4746
      %v4759 = vadd.f32 %v4587, %v4749
      %v4760 = vadd.f32 %v4589, %v4751
      %v4761 = vld [vmem:[%s4 + $0xc0] sm:$0xf]
      %v4762 = vld [vmem:[%s4 + $0xc4] sm:$0xf]
      %v4763 = vld [vmem:[%s4 + $0xc8] sm:$0xf]
      %v4764 = vld [vmem:[%s4 + $0xcc] sm:$0xf]
      %v4765 = vld [vmem:[%s4 + $0xd0] sm:$0xf]
      %v4766 = vld [vmem:[%s4 + $0xd4] sm:$0xf]
      %v4767 = vld [vmem:[%s4 + $0xd8] sm:$0xf]
      %v4768 = vld [vmem:[%s4 + $0xdc] sm:$0xf]
      %v4769 = vld [vmem:[%s4 + $0xe0] sm:$0xf]
      %v4770 = vld [vmem:[%s4 + $0xe4] sm:$0xf]
      %v4771 = vld [vmem:[%s4 + $0xe8] sm:$0xf]
      %v4772 = vld [vmem:[%s4 + $0xec] sm:$0xf]
      %v4773 = vld [vmem:[%s4 + $0xf0] sm:$0xf]
      %v4774 = vld [vmem:[%s4 + $0xf4] sm:$0xf]
      %v4775 = vld [vmem:[%s4 + $0xf8] sm:$0xf]
      %v4776 = vld [vmem:[%s4 + $0xfc] sm:$0xf]
      %v4793 = vunpack.c.l.b16 %v4761
      %v4794 = vunpack.c.l.b16 %v4762
      %v4795 = vunpack.c.l.b16 %v4763
      %v4796 = vunpack.c.l.b16 %v4764
      %v4797 = vunpack.c.l.b16 %v4765
      %v4798 = vunpack.c.l.b16 %v4766
      %v4799 = vunpack.c.l.b16 %v4767
      %v4800 = vunpack.c.l.b16 %v4768
      %v4801 = vunpack.c.l.b16 %v4769
      %v4802 = vunpack.c.l.b16 %v4770
      %v4803 = vunpack.c.l.b16 %v4771
      %v4804 = vunpack.c.l.b16 %v4772
      %v4805 = vunpack.c.l.b16 %v4773
      %v4806 = vunpack.c.l.b16 %v4774
      %v4807 = vunpack.c.l.b16 %v4775
      %v4808 = vunpack.c.l.b16 %v4776
      %v4809 = vpack.c.b16 %v4794, %v4793
      %v4810 = vpack.c.b16 %v4796, %v4795
      %v4811 = vpack.c.b16 %v4798, %v4797
      %v4812 = vpack.c.b16 %v4800, %v4799
      %v4813 = vpack.c.b16 %v4802, %v4801
      %v4814 = vpack.c.b16 %v4804, %v4803
      %v4815 = vpack.c.b16 %v4806, %v4805
      %v4816 = vpack.c.b16 %v4808, %v4807
      %4825 = vmatpush.bf16.msra.mxu0 %v4816
      %4826 = vmatpush.bf16.msra.mxu0 %v4815
      %4827 = vmatpush.bf16.msra.mxu0 %v4814
      %4828 = vmatpush.bf16.msra.mxu0 %v4813
      %4829 = vmatpush.bf16.msra.mxu0 %v4812
      %4830 = vmatpush.bf16.msra.mxu0 %v4811
      %4831 = vmatpush.bf16.msra.mxu0 %v4810
      %4832 = vmatpush.bf16.msra.mxu0 %v4809
      %4833 = vmatmul.bf16.gmra.mxu0 %v4716
      %v4834 = vpop.f32.mrf.mxu0
      %v4835 = vadd.f32 0.0, %v4834
      %v4836 = vpop.f32.mrf.mxu0
      %v4837 = vadd.f32 0.0, %v4836
      %4838 = vmatmul.bf16.gmra.mxu0 %v4717
      %v4839 = vpop.f32.mrf.mxu0
      %v4840 = vadd.f32 0.0, %v4839
      %v4841 = vpop.f32.mrf.mxu0
      %v4842 = vadd.f32 0.0, %v4841
      %4843 = vmatmul.bf16.gmra.mxu0 %v4718
      %v4844 = vpop.f32.mrf.mxu0
      %v4845 = vadd.f32 0.0, %v4844
      %v4846 = vpop.f32.mrf.mxu0
      %v4847 = vadd.f32 0.0, %v4846
      %4848 = vmatmul.bf16.gmra.mxu0 %v4719
      %v4849 = vpop.f32.mrf.mxu0
      %v4850 = vadd.f32 0.0, %v4849
      %v4851 = vpop.f32.mrf.mxu0
      %v4852 = vadd.f32 0.0, %v4851
      %4853 = vdwg.mxu0
      %v4854 = vadd.f32 %v4684, %v4835
      %v4855 = vadd.f32 %v4685, %v4837
      %v4856 = vadd.f32 %v4686, %v4840
      %v4857 = vadd.f32 %v4687, %v4842
      %v4858 = vadd.f32 %v4688, %v4845
      %v4859 = vadd.f32 %v4689, %v4847
      %v4860 = vadd.f32 %v4690, %v4850
      %v4861 = vadd.f32 %v4691, %v4852
      %v4862 = vld [vmem:[#allocation2 + $0x140] sm:$0xf]
      %v4863 = vld [vmem:[#allocation2 + $0x144] sm:$0xf]
      %v4864 = vld [vmem:[#allocation2 + $0x148] sm:$0xf]
      %v4865 = vld [vmem:[#allocation2 + $0x14c] sm:$0xf]
      %v4866 = vld [vmem:[#allocation2 + $0x150] sm:$0xf]
      %v4867 = vld [vmem:[#allocation2 + $0x154] sm:$0xf]
      %v4868 = vld [vmem:[#allocation2 + $0x158] sm:$0xf]
      %v4869 = vld [vmem:[#allocation2 + $0x15c] sm:$0xf]
      %v4878 = vunpack.c.l.b16 %v4862
      %v4879 = vunpack.c.l.b16 %v4863
      %v4880 = vunpack.c.l.b16 %v4864
      %v4881 = vunpack.c.l.b16 %v4865
      %v4882 = vunpack.c.l.b16 %v4866
      %v4883 = vunpack.c.l.b16 %v4867
      %v4884 = vunpack.c.l.b16 %v4868
      %v4885 = vunpack.c.l.b16 %v4869
      %v4886 = vpack.c.b16 %v4879, %v4878
      %v4887 = vpack.c.b16 %v4881, %v4880
      %v4888 = vpack.c.b16 %v4883, %v4882
      %v4889 = vpack.c.b16 %v4885, %v4884
      %4894 = vmatpush.bf16.msra.mxu0 %v4816
      %4895 = vmatpush.bf16.msra.mxu0 %v4815
      %4896 = vmatpush.bf16.msra.mxu0 %v4814
      %4897 = vmatpush.bf16.msra.mxu0 %v4813
      %4898 = vmatpush.bf16.msra.mxu0 %v4812
      %4899 = vmatpush.bf16.msra.mxu0 %v4811
      %4900 = vmatpush.bf16.msra.mxu0 %v4810
      %4901 = vmatpush.bf16.msra.mxu0 %v4809
      %4902 = vmatmul.bf16.gmra.mxu0 %v4886
      %v4903 = vpop.f32.mrf.mxu0
      %v4904 = vadd.f32 0.0, %v4903
      %v4905 = vpop.f32.mrf.mxu0
      %v4906 = vadd.f32 0.0, %v4905
      %4907 = vmatmul.bf16.gmra.mxu0 %v4887
      %v4908 = vpop.f32.mrf.mxu0
      %v4909 = vadd.f32 0.0, %v4908
      %v4910 = vpop.f32.mrf.mxu0
      %v4911 = vadd.f32 0.0, %v4910
      %4912 = vmatmul.bf16.gmra.mxu0 %v4888
      %v4913 = vpop.f32.mrf.mxu0
      %v4914 = vadd.f32 0.0, %v4913
      %v4915 = vpop.f32.mrf.mxu0
      %v4916 = vadd.f32 0.0, %v4915
      %4917 = vmatmul.bf16.gmra.mxu0 %v4889
      %v4918 = vpop.f32.mrf.mxu0
      %v4919 = vadd.f32 0.0, %v4918
      %v4920 = vpop.f32.mrf.mxu0
      %v4921 = vadd.f32 0.0, %v4920
      %4922 = vdwg.mxu0
      %v4923 = vadd.f32 %v4753, %v4904
      %v4924 = vadd.f32 %v4754, %v4906
      %v4925 = vadd.f32 %v4755, %v4909
      %v4926 = vadd.f32 %v4756, %v4911
      %v4927 = vadd.f32 %v4757, %v4914
      %v4928 = vadd.f32 %v4758, %v4916
      %v4929 = vadd.f32 %v4759, %v4919
      %v4930 = vadd.f32 %v4760, %v4921
      %v4931 = vld [vmem:[%s4 + $0x100] sm:$0xf]
      %v4932 = vld [vmem:[%s4 + $0x104] sm:$0xf]
      %v4933 = vld [vmem:[%s4 + $0x108] sm:$0xf]
      %v4934 = vld [vmem:[%s4 + $0x10c] sm:$0xf]
      %v4935 = vld [vmem:[%s4 + $0x110] sm:$0xf]
      %v4936 = vld [vmem:[%s4 + $0x114] sm:$0xf]
      %v4937 = vld [vmem:[%s4 + $0x118] sm:$0xf]
      %v4938 = vld [vmem:[%s4 + $0x11c] sm:$0xf]
      %v4939 = vld [vmem:[%s4 + $0x120] sm:$0xf]
      %v4940 = vld [vmem:[%s4 + $0x124] sm:$0xf]
      %v4941 = vld [vmem:[%s4 + $0x128] sm:$0xf]
      %v4942 = vld [vmem:[%s4 + $0x12c] sm:$0xf]
      %v4943 = vld [vmem:[%s4 + $0x130] sm:$0xf]
      %v4944 = vld [vmem:[%s4 + $0x134] sm:$0xf]
      %v4945 = vld [vmem:[%s4 + $0x138] sm:$0xf]
      %v4946 = vld [vmem:[%s4 + $0x13c] sm:$0xf]
      %v4963 = vunpack.c.l.b16 %v4931
      %v4964 = vunpack.c.l.b16 %v4932
      %v4965 = vunpack.c.l.b16 %v4933
      %v4966 = vunpack.c.l.b16 %v4934
      %v4967 = vunpack.c.l.b16 %v4935
      %v4968 = vunpack.c.l.b16 %v4936
      %v4969 = vunpack.c.l.b16 %v4937
      %v4970 = vunpack.c.l.b16 %v4938
      %v4971 = vunpack.c.l.b16 %v4939
      %v4972 = vunpack.c.l.b16 %v4940
      %v4973 = vunpack.c.l.b16 %v4941
      %v4974 = vunpack.c.l.b16 %v4942
      %v4975 = vunpack.c.l.b16 %v4943
      %v4976 = vunpack.c.l.b16 %v4944
      %v4977 = vunpack.c.l.b16 %v4945
      %v4978 = vunpack.c.l.b16 %v4946
      %v4979 = vpack.c.b16 %v4964, %v4963
      %v4980 = vpack.c.b16 %v4966, %v4965
      %v4981 = vpack.c.b16 %v4968, %v4967
      %v4982 = vpack.c.b16 %v4970, %v4969
      %v4983 = vpack.c.b16 %v4972, %v4971
      %v4984 = vpack.c.b16 %v4974, %v4973
      %v4985 = vpack.c.b16 %v4976, %v4975
      %v4986 = vpack.c.b16 %v4978, %v4977
      %4995 = vmatpush.bf16.msra.mxu0 %v4986
      %4996 = vmatpush.bf16.msra.mxu0 %v4985
      %4997 = vmatpush.bf16.msra.mxu0 %v4984
      %4998 = vmatpush.bf16.msra.mxu0 %v4983
      %4999 = vmatpush.bf16.msra.mxu0 %v4982
      %5000 = vmatpush.bf16.msra.mxu0 %v4981
      %5001 = vmatpush.bf16.msra.mxu0 %v4980
      %5002 = vmatpush.bf16.msra.mxu0 %v4979
      %5003 = vmatmul.bf16.gmra.mxu0 %v4886
      %v5004 = vpop.f32.mrf.mxu0
      %v5005 = vadd.f32 0.0, %v5004
      %v5006 = vpop.f32.mrf.mxu0
      %v5007 = vadd.f32 0.0, %v5006
      %5008 = vmatmul.bf16.gmra.mxu0 %v4887
      %v5009 = vpop.f32.mrf.mxu0
      %v5010 = vadd.f32 0.0, %v5009
      %v5011 = vpop.f32.mrf.mxu0
      %v5012 = vadd.f32 0.0, %v5011
      %5013 = vmatmul.bf16.gmra.mxu0 %v4888
      %v5014 = vpop.f32.mrf.mxu0
      %v5015 = vadd.f32 0.0, %v5014
      %v5016 = vpop.f32.mrf.mxu0
      %v5017 = vadd.f32 0.0, %v5016
      %5018 = vmatmul.bf16.gmra.mxu0 %v4889
      %v5019 = vpop.f32.mrf.mxu0
      %v5020 = vadd.f32 0.0, %v5019
      %v5021 = vpop.f32.mrf.mxu0
      %v5022 = vadd.f32 0.0, %v5021
      %5023 = vdwg.mxu0
      %v5024 = vadd.f32 %v4854, %v5005
      %v5025 = vadd.f32 %v4855, %v5007
      %v5026 = vadd.f32 %v4856, %v5010
      %v5027 = vadd.f32 %v4857, %v5012
      %v5028 = vadd.f32 %v4858, %v5015
      %v5029 = vadd.f32 %v4859, %v5017
      %v5030 = vadd.f32 %v4860, %v5020
      %v5031 = vadd.f32 %v4861, %v5022
      %v5032 = vld [vmem:[#allocation2 + $0x160] sm:$0xf]
      %v5033 = vld [vmem:[#allocation2 + $0x164] sm:$0xf]
      %v5034 = vld [vmem:[#allocation2 + $0x168] sm:$0xf]
      %v5035 = vld [vmem:[#allocation2 + $0x16c] sm:$0xf]
      %v5036 = vld [vmem:[#allocation2 + $0x170] sm:$0xf]
      %v5037 = vld [vmem:[#allocation2 + $0x174] sm:$0xf]
      %v5038 = vld [vmem:[#allocation2 + $0x178] sm:$0xf]
      %v5039 = vld [vmem:[#allocation2 + $0x17c] sm:$0xf]
      %v5048 = vunpack.c.l.b16 %v5032
      %v5049 = vunpack.c.l.b16 %v5033
      %v5050 = vunpack.c.l.b16 %v5034
      %v5051 = vunpack.c.l.b16 %v5035
      %v5052 = vunpack.c.l.b16 %v5036
      %v5053 = vunpack.c.l.b16 %v5037
      %v5054 = vunpack.c.l.b16 %v5038
      %v5055 = vunpack.c.l.b16 %v5039
      %v5056 = vpack.c.b16 %v5049, %v5048
      %v5057 = vpack.c.b16 %v5051, %v5050
      %v5058 = vpack.c.b16 %v5053, %v5052
      %v5059 = vpack.c.b16 %v5055, %v5054
      %5064 = vmatpush.bf16.msra.mxu0 %v4986
      %5065 = vmatpush.bf16.msra.mxu0 %v4985
      %5066 = vmatpush.bf16.msra.mxu0 %v4984
      %5067 = vmatpush.bf16.msra.mxu0 %v4983
      %5068 = vmatpush.bf16.msra.mxu0 %v4982
      %5069 = vmatpush.bf16.msra.mxu0 %v4981
      %5070 = vmatpush.bf16.msra.mxu0 %v4980
      %5071 = vmatpush.bf16.msra.mxu0 %v4979
      %5072 = vmatmul.bf16.gmra.mxu0 %v5056
      %v5073 = vpop.f32.mrf.mxu0
      %v5074 = vadd.f32 0.0, %v5073
      %v5075 = vpop.f32.mrf.mxu0
      %v5076 = vadd.f32 0.0, %v5075
      %5077 = vmatmul.bf16.gmra.mxu0 %v5057
      %v5078 = vpop.f32.mrf.mxu0
      %v5079 = vadd.f32 0.0, %v5078
      %v5080 = vpop.f32.mrf.mxu0
      %v5081 = vadd.f32 0.0, %v5080
      %5082 = vmatmul.bf16.gmra.mxu0 %v5058
      %v5083 = vpop.f32.mrf.mxu0
      %v5084 = vadd.f32 0.0, %v5083
      %v5085 = vpop.f32.mrf.mxu0
      %v5086 = vadd.f32 0.0, %v5085
      %5087 = vmatmul.bf16.gmra.mxu0 %v5059
      %v5088 = vpop.f32.mrf.mxu0
      %v5089 = vadd.f32 0.0, %v5088
      %v5090 = vpop.f32.mrf.mxu0
      %v5091 = vadd.f32 0.0, %v5090
      %5092 = vdwg.mxu0
      %v5093 = vadd.f32 %v4923, %v5074
      %v5094 = vadd.f32 %v4924, %v5076
      %v5095 = vadd.f32 %v4925, %v5079
      %v5096 = vadd.f32 %v4926, %v5081
      %v5097 = vadd.f32 %v4927, %v5084
      %v5098 = vadd.f32 %v4928, %v5086
      %v5099 = vadd.f32 %v4929, %v5089
      %v5100 = vadd.f32 %v4930, %v5091
      %v5101 = vmax.f32 %v5024, %v5093
      %v5102 = vmax.f32 %v5025, %v5094
      %v5103 = vmax.f32 %v5026, %v5095
      %v5104 = vmax.f32 %v5027, %v5096
      %v5105 = vmax.f32 %v5028, %v5097
      %v5106 = vmax.f32 %v5029, %v5098
      %v5107 = vmax.f32 %v5030, %v5099
      %v5108 = vmax.f32 %v5031, %v5100
      %v5109 = vmax.f32 %v5101, 0.0
      %v5110 = vmax.f32 %v5102, 0.0
      %v5111 = vmax.f32 %v5103, 0.0
      %v5112 = vmax.f32 %v5104, 0.0
      %v5113 = vmax.f32 %v5105, 0.0
      %v5114 = vmax.f32 %v5106, 0.0
      %v5115 = vmax.f32 %v5107, 0.0
      %v5116 = vmax.f32 %v5108, 0.0
      %5125 = vrot.lane.b32.xlu0 %v5109, 64
      %v5126 = vpop.permute.xlu0 %5125
      %5127 = vrot.lane.b32.xlu0 %v5110, 64
      %v5128 = vpop.permute.xlu0 %5127
      %5129 = vrot.lane.b32.xlu0 %v5111, 64
      %v5130 = vpop.permute.xlu0 %5129
      %5131 = vrot.lane.b32.xlu0 %v5112, 64
      %v5132 = vpop.permute.xlu0 %5131
      %5133 = vrot.lane.b32.xlu0 %v5113, 64
      %v5134 = vpop.permute.xlu0 %5133
      %5135 = vrot.lane.b32.xlu0 %v5114, 64
      %v5136 = vpop.permute.xlu0 %5135
      %5137 = vrot.lane.b32.xlu0 %v5115, 64
      %v5138 = vpop.permute.xlu0 %5137
      %5139 = vrot.lane.b32.xlu0 %v5116, 64
      %v5140 = vpop.permute.xlu0 %5139
      %v5149 = vmax.f32 %v5109, %v5126
      %v5150 = vmax.f32 %v5110, %v5128
      %v5151 = vmax.f32 %v5111, %v5130
      %v5152 = vmax.f32 %v5112, %v5132
      %v5153 = vmax.f32 %v5113, %v5134
      %v5154 = vmax.f32 %v5114, %v5136
      %v5155 = vmax.f32 %v5115, %v5138
      %v5156 = vmax.f32 %v5116, %v5140
      %v5157 = vld [vmem:[%s5] sm:$0x1]
      %v5159 = vperm.slane %v5157, 0
      %v5161 = vmul.f32 %v5149, %v5159
      %v5162 = vmul.f32 %v5150, %v5159
      %v5163 = vmul.f32 %v5151, %v5159
      %v5164 = vmul.f32 %v5152, %v5159
      %v5165 = vmul.f32 %v5153, %v5159
      %v5166 = vmul.f32 %v5154, %v5159
      %v5167 = vmul.f32 %v5155, %v5159
      %v5168 = vmul.f32 %v5156, %v5159
      %v5169 = vld [vmem:[%s6] sm:$0x1]
      %v5171 = vperm.slane %v5169, 0
      %v5173 = vadd.f32 %v5161, %v5171
      %v5174 = vadd.f32 %v5162, %v5171
      %v5175 = vadd.f32 %v5163, %v5171
      %v5176 = vadd.f32 %v5164, %v5171
      %v5177 = vadd.f32 %v5165, %v5171
      %v5178 = vadd.f32 %v5166, %v5171
      %v5179 = vadd.f32 %v5167, %v5171
      %v5180 = vadd.f32 %v5168, %v5171
      %v5181 = vpack.c.bf16 %v5173, %v5173
      %v5182 = vpack.c.bf16 %v5174, %v5174
      %v5183 = vpack.c.bf16 %v5175, %v5175
      %v5184 = vpack.c.bf16 %v5176, %v5176
      %v5185 = vpack.c.bf16 %v5177, %v5177
      %v5186 = vpack.c.bf16 %v5178, %v5178
      %v5187 = vpack.c.bf16 %v5179, %v5179
      %v5188 = vpack.c.bf16 %v5180, %v5180
      %5197 = vrot.lane.b32.xlu0 %v5181, 64
      %v5198 = vpop.permute.xlu0 %5197
      %5199 = vrot.lane.b32.xlu0 %v5182, 64
      %v5200 = vpop.permute.xlu0 %5199
      %5201 = vrot.lane.b32.xlu0 %v5183, 64
      %v5202 = vpop.permute.xlu0 %5201
      %5203 = vrot.lane.b32.xlu0 %v5184, 64
      %v5204 = vpop.permute.xlu0 %5203
      %5205 = vrot.lane.b32.xlu0 %v5185, 64
      %v5206 = vpop.permute.xlu0 %5205
      %5207 = vrot.lane.b32.xlu0 %v5186, 64
      %v5208 = vpop.permute.xlu0 %5207
      %5209 = vrot.lane.b32.xlu0 %v5187, 64
      %v5210 = vpop.permute.xlu0 %5209
      %5211 = vrot.lane.b32.xlu0 %v5188, 64
      %v5212 = vpop.permute.xlu0 %5211
      %5221 = vst.msk [vmem:[#allocation3 + $0x4] sm:$0xf] %vm3296, %v5198
      %5222 = vst.msk [vmem:[#allocation3 + $0xc] sm:$0xf] %vm3296, %v5200
      %5223 = vst.msk [vmem:[#allocation3 + $0x14] sm:$0xf] %vm3296, %v5202
      %5224 = vst.msk [vmem:[#allocation3 + $0x1c] sm:$0xf] %vm3296, %v5204
      %5225 = vst.msk [vmem:[#allocation3 + $0x24] sm:$0xf] %vm3296, %v5206
      %5226 = vst.msk [vmem:[#allocation3 + $0x2c] sm:$0xf] %vm3296, %v5208
      %5227 = vst.msk [vmem:[#allocation3 + $0x34] sm:$0xf] %vm3296, %v5210
      %5228 = vst.msk [vmem:[#allocation3 + $0x3c] sm:$0xf] %vm3296, %v5212
      %v5229 = vld [vmem:[#allocation3] sm:$0xff]
      %v5230 = vld [vmem:[#allocation3 + $0x8] sm:$0xff]
      %v5231 = vld [vmem:[#allocation3 + $0x10] sm:$0xff]
      %v5232 = vld [vmem:[#allocation3 + $0x18] sm:$0xff]
      %v5233 = vld [vmem:[#allocation3 + $0x20] sm:$0xff]
      %v5234 = vld [vmem:[#allocation3 + $0x28] sm:$0xff]
      %v5235 = vld [vmem:[#allocation3 + $0x30] sm:$0xff]
      %v5236 = vld [vmem:[#allocation3 + $0x38] sm:$0xff]
      %v5237 = vld [vmem:[%s7] sm:$0xf]
      %v5238 = vld [vmem:[%s7 + $0x4] sm:$0xf]
      %v5239 = vld [vmem:[%s7 + $0x8] sm:$0xf]
      %v5240 = vld [vmem:[%s7 + $0xc] sm:$0xf]
      %v5241 = vld [vmem:[%s7 + $0x10] sm:$0xf]
      %v5242 = vld [vmem:[%s7 + $0x14] sm:$0xf]
      %v5243 = vld [vmem:[%s7 + $0x18] sm:$0xf]
      %v5244 = vld [vmem:[%s7 + $0x1c] sm:$0xf]
      %v5245 = vld [vmem:[%s7 + $0x20] sm:$0xf]
      %v5246 = vld [vmem:[%s7 + $0x24] sm:$0xf]
      %v5247 = vld [vmem:[%s7 + $0x28] sm:$0xf]
      %v5248 = vld [vmem:[%s7 + $0x2c] sm:$0xf]
      %v5249 = vld [vmem:[%s7 + $0x30] sm:$0xf]
      %v5250 = vld [vmem:[%s7 + $0x34] sm:$0xf]
      %v5251 = vld [vmem:[%s7 + $0x38] sm:$0xf]
      %v5252 = vld [vmem:[%s7 + $0x3c] sm:$0xf]
      %v5253 = vld [vmem:[%s7 + $0x40] sm:$0xf]
      %v5254 = vld [vmem:[%s7 + $0x44] sm:$0xf]
      %v5255 = vld [vmem:[%s7 + $0x48] sm:$0xf]
      %v5256 = vld [vmem:[%s7 + $0x4c] sm:$0xf]
      %v5257 = vld [vmem:[%s7 + $0x50] sm:$0xf]
      %v5258 = vld [vmem:[%s7 + $0x54] sm:$0xf]
      %v5259 = vld [vmem:[%s7 + $0x58] sm:$0xf]
      %v5260 = vld [vmem:[%s7 + $0x5c] sm:$0xf]
      %v5261 = vld [vmem:[%s7 + $0x60] sm:$0xf]
      %v5262 = vld [vmem:[%s7 + $0x64] sm:$0xf]
      %v5263 = vld [vmem:[%s7 + $0x68] sm:$0xf]
      %v5264 = vld [vmem:[%s7 + $0x6c] sm:$0xf]
      %v5265 = vld [vmem:[%s7 + $0x70] sm:$0xf]
      %v5266 = vld [vmem:[%s7 + $0x74] sm:$0xf]
      %v5267 = vld [vmem:[%s7 + $0x78] sm:$0xf]
      %v5268 = vld [vmem:[%s7 + $0x7c] sm:$0xf]
      %v5277 = vunpack.c.l.b16 %v5229
      %v5278 = vunpack.c.h.b16 %v5229
      %v5279 = vunpack.c.l.b16 %v5230
      %v5280 = vunpack.c.h.b16 %v5230
      %v5281 = vunpack.c.l.b16 %v5231
      %v5282 = vunpack.c.h.b16 %v5231
      %v5283 = vunpack.c.l.b16 %v5232
      %v5284 = vunpack.c.h.b16 %v5232
      %v5285 = vunpack.c.l.b16 %v5233
      %v5286 = vunpack.c.h.b16 %v5233
      %v5287 = vunpack.c.l.b16 %v5234
      %v5288 = vunpack.c.h.b16 %v5234
      %v5289 = vunpack.c.l.b16 %v5235
      %v5290 = vunpack.c.h.b16 %v5235
      %v5291 = vunpack.c.l.b16 %v5236
      %v5292 = vunpack.c.h.b16 %v5236
      %v5293 = vpack.c.b16 %v5279, %v5277
      %v5294 = vpack.c.b16 %v5280, %v5278
      %v5295 = vpack.c.b16 %v5283, %v5281
      %v5296 = vpack.c.b16 %v5284, %v5282
      %v5297 = vpack.c.b16 %v5287, %v5285
      %v5298 = vpack.c.b16 %v5288, %v5286
      %v5299 = vpack.c.b16 %v5291, %v5289
      %v5300 = vpack.c.b16 %v5292, %v5290
      %v5341 = vunpack.c.l.b16 %v5237
      %v5342 = vunpack.c.l.b16 %v5238
      %v5343 = vunpack.c.l.b16 %v5239
      %v5344 = vunpack.c.l.b16 %v5240
      %v5345 = vunpack.c.l.b16 %v5241
      %v5346 = vunpack.c.l.b16 %v5242
      %v5347 = vunpack.c.l.b16 %v5243
      %v5348 = vunpack.c.l.b16 %v5244
      %v5349 = vunpack.c.l.b16 %v5245
      %v5350 = vunpack.c.l.b16 %v5246
      %v5351 = vunpack.c.l.b16 %v5247
      %v5352 = vunpack.c.l.b16 %v5248
      %v5353 = vunpack.c.l.b16 %v5249
      %v5354 = vunpack.c.l.b16 %v5250
      %v5355 = vunpack.c.l.b16 %v5251
      %v5356 = vunpack.c.l.b16 %v5252
      %v5357 = vunpack.c.l.b16 %v5253
      %v5358 = vunpack.c.l.b16 %v5254
      %v5359 = vunpack.c.l.b16 %v5255
      %v5360 = vunpack.c.l.b16 %v5256
      %v5361 = vunpack.c.l.b16 %v5257
      %v5362 = vunpack.c.l.b16 %v5258
      %v5363 = vunpack.c.l.b16 %v5259
      %v5364 = vunpack.c.l.b16 %v5260
      %v5365 = vunpack.c.l.b16 %v5261
      %v5366 = vunpack.c.l.b16 %v5262
      %v5367 = vunpack.c.l.b16 %v5263
      %v5368 = vunpack.c.l.b16 %v5264
      %v5369 = vunpack.c.l.b16 %v5265
      %v5370 = vunpack.c.l.b16 %v5266
      %v5371 = vunpack.c.l.b16 %v5267
      %v5372 = vunpack.c.l.b16 %v5268
      %v5373 = vpack.c.b16 %v5342, %v5341
      %v5374 = vpack.c.b16 %v5344, %v5343
      %v5375 = vpack.c.b16 %v5346, %v5345
      %v5376 = vpack.c.b16 %v5348, %v5347
      %v5377 = vpack.c.b16 %v5350, %v5349
      %v5378 = vpack.c.b16 %v5352, %v5351
      %v5379 = vpack.c.b16 %v5354, %v5353
      %v5380 = vpack.c.b16 %v5356, %v5355
      %v5381 = vpack.c.b16 %v5358, %v5357
      %v5382 = vpack.c.b16 %v5360, %v5359
      %v5383 = vpack.c.b16 %v5362, %v5361
      %v5384 = vpack.c.b16 %v5364, %v5363
      %v5385 = vpack.c.b16 %v5366, %v5365
      %v5386 = vpack.c.b16 %v5368, %v5367
      %v5387 = vpack.c.b16 %v5370, %v5369
      %v5388 = vpack.c.b16 %v5372, %v5371
      %5405 = vmatpush.bf16.msra.mxu0 %v5380
      %5406 = vmatpush.bf16.msra.mxu0 %v5379
      %5407 = vmatpush.bf16.msra.mxu0 %v5378
      %5408 = vmatpush.bf16.msra.mxu0 %v5377
      %5409 = vmatpush.bf16.msra.mxu0 %v5376
      %5410 = vmatpush.bf16.msra.mxu0 %v5375
      %5411 = vmatpush.bf16.msra.mxu0 %v5374
      %5412 = vmatpush.bf16.msra.mxu0 %v5373
      %5413 = vmatmul.bf16.gmra.mxu0 %v5293
      %v5414 = vpop.f32.mrf.mxu0
      %v5415 = vadd.f32 0.0, %v5414
      %v5416 = vpop.f32.mrf.mxu0
      %v5417 = vadd.f32 0.0, %v5416
      %5418 = vmatmul.bf16.gmra.mxu0 %v5295
      %v5419 = vpop.f32.mrf.mxu0
      %v5420 = vadd.f32 0.0, %v5419
      %v5421 = vpop.f32.mrf.mxu0
      %v5422 = vadd.f32 0.0, %v5421
      %5423 = vmatmul.bf16.gmra.mxu0 %v5297
      %v5424 = vpop.f32.mrf.mxu0
      %v5425 = vadd.f32 0.0, %v5424
      %v5426 = vpop.f32.mrf.mxu0
      %v5427 = vadd.f32 0.0, %v5426
      %5428 = vmatmul.bf16.gmra.mxu0 %v5299
      %v5429 = vpop.f32.mrf.mxu0
      %v5430 = vadd.f32 0.0, %v5429
      %v5431 = vpop.f32.mrf.mxu0
      %v5432 = vadd.f32 0.0, %v5431
      %5433 = vdwg.mxu0
      %5434 = vmatpush.bf16.msra.mxu0 %v5388
      %5435 = vmatpush.bf16.msra.mxu0 %v5387
      %5436 = vmatpush.bf16.msra.mxu0 %v5386
      %5437 = vmatpush.bf16.msra.mxu0 %v5385
      %5438 = vmatpush.bf16.msra.mxu0 %v5384
      %5439 = vmatpush.bf16.msra.mxu0 %v5383
      %5440 = vmatpush.bf16.msra.mxu0 %v5382
      %5441 = vmatpush.bf16.msra.mxu0 %v5381
      %5442 = vmatmul.bf16.gmra.mxu0 %v5294
      %v5443 = vpop.f32.mrf.mxu0
      %v5444 = vadd.f32 %v5415, %v5443
      %v5445 = vpop.f32.mrf.mxu0
      %v5446 = vadd.f32 %v5417, %v5445
      %5447 = vmatmul.bf16.gmra.mxu0 %v5296
      %v5448 = vpop.f32.mrf.mxu0
      %v5449 = vadd.f32 %v5420, %v5448
      %v5450 = vpop.f32.mrf.mxu0
      %v5451 = vadd.f32 %v5422, %v5450
      %5452 = vmatmul.bf16.gmra.mxu0 %v5298
      %v5453 = vpop.f32.mrf.mxu0
      %v5454 = vadd.f32 %v5425, %v5453
      %v5455 = vpop.f32.mrf.mxu0
      %v5456 = vadd.f32 %v5427, %v5455
      %5457 = vmatmul.bf16.gmra.mxu0 %v5300
      %v5458 = vpop.f32.mrf.mxu0
      %v5459 = vadd.f32 %v5430, %v5458
      %v5460 = vpop.f32.mrf.mxu0
      %v5461 = vadd.f32 %v5432, %v5460
      %5462 = vdwg.mxu0
      %v5463 = vld [vmem:[%s8] sm:$0x1]
      %v5465 = vperm.slane %v5463, 0
      %v5467 = vmul.f32 %v5444, %v5465
      %v5468 = vmul.f32 %v5446, %v5465
      %v5469 = vmul.f32 %v5449, %v5465
      %v5470 = vmul.f32 %v5451, %v5465
      %v5471 = vmul.f32 %v5454, %v5465
      %v5472 = vmul.f32 %v5456, %v5465
      %v5473 = vmul.f32 %v5459, %v5465
      %v5474 = vmul.f32 %v5461, %v5465
      %v5475 = vld [vmem:[%s9] sm:$0x1]
      %v5477 = vperm.slane %v5475, 0
      %v5479 = vadd.f32 %v5467, %v5477
      %v5480 = vadd.f32 %v5468, %v5477
      %v5481 = vadd.f32 %v5469, %v5477
      %v5482 = vadd.f32 %v5470, %v5477
      %v5483 = vadd.f32 %v5471, %v5477
      %v5484 = vadd.f32 %v5472, %v5477
      %v5485 = vadd.f32 %v5473, %v5477
      %v5486 = vadd.f32 %v5474, %v5477
      %v5487 = vmax.f32 %v5479, 0.0
      %v5488 = vmax.f32 %v5480, 0.0
      %v5489 = vmax.f32 %v5481, 0.0
      %v5490 = vmax.f32 %v5482, 0.0
      %v5491 = vmax.f32 %v5483, 0.0
      %v5492 = vmax.f32 %v5484, 0.0
      %v5493 = vmax.f32 %v5485, 0.0
      %v5494 = vmax.f32 %v5486, 0.0
      %v5495 = vpack.c.bf16 %v5488, %v5487
      %v5496 = vpack.c.bf16 %v5490, %v5489
      %v5497 = vpack.c.bf16 %v5492, %v5491
      %v5498 = vpack.c.bf16 %v5494, %v5493
      %v5499 = vld [vmem:[%s10] sm:$0xf]
      %v5500 = vld [vmem:[%s10 + $0x4] sm:$0xf]
      %v5501 = vld [vmem:[%s10 + $0x8] sm:$0xf]
      %v5502 = vld [vmem:[%s10 + $0xc] sm:$0xf]
      %v5503 = vld [vmem:[%s10 + $0x10] sm:$0xf]
      %v5504 = vld [vmem:[%s10 + $0x14] sm:$0xf]
      %v5505 = vld [vmem:[%s10 + $0x18] sm:$0xf]
      %v5506 = vld [vmem:[%s10 + $0x1c] sm:$0xf]
      %v5507 = vld [vmem:[%s10 + $0x20] sm:$0xf]
      %v5508 = vld [vmem:[%s10 + $0x24] sm:$0xf]
      %v5509 = vld [vmem:[%s10 + $0x28] sm:$0xf]
      %v5510 = vld [vmem:[%s10 + $0x2c] sm:$0xf]
      %v5511 = vld [vmem:[%s10 + $0x30] sm:$0xf]
      %v5512 = vld [vmem:[%s10 + $0x34] sm:$0xf]
      %v5513 = vld [vmem:[%s10 + $0x38] sm:$0xf]
      %v5514 = vld [vmem:[%s10 + $0x3c] sm:$0xf]
      %v5531 = vunpack.c.l.b16 %v5499
      %v5532 = vunpack.c.l.b16 %v5500
      %v5533 = vunpack.c.l.b16 %v5501
      %v5534 = vunpack.c.l.b16 %v5502
      %v5535 = vunpack.c.l.b16 %v5503
      %v5536 = vunpack.c.l.b16 %v5504
      %v5537 = vunpack.c.l.b16 %v5505
      %v5538 = vunpack.c.l.b16 %v5506
      %v5539 = vunpack.c.l.b16 %v5507
      %v5540 = vunpack.c.l.b16 %v5508
      %v5541 = vunpack.c.l.b16 %v5509
      %v5542 = vunpack.c.l.b16 %v5510
      %v5543 = vunpack.c.l.b16 %v5511
      %v5544 = vunpack.c.l.b16 %v5512
      %v5545 = vunpack.c.l.b16 %v5513
      %v5546 = vunpack.c.l.b16 %v5514
      %v5547 = vpack.c.b16 %v5532, %v5531
      %v5548 = vpack.c.b16 %v5534, %v5533
      %v5549 = vpack.c.b16 %v5536, %v5535
      %v5550 = vpack.c.b16 %v5538, %v5537
      %v5551 = vpack.c.b16 %v5540, %v5539
      %v5552 = vpack.c.b16 %v5542, %v5541
      %v5553 = vpack.c.b16 %v5544, %v5543
      %v5554 = vpack.c.b16 %v5546, %v5545
      %5563 = vmatpush.bf16.msra.mxu0 %v5554
      %5564 = vmatpush.bf16.msra.mxu0 %v5553
      %5565 = vmatpush.bf16.msra.mxu0 %v5552
      %5566 = vmatpush.bf16.msra.mxu0 %v5551
      %5567 = vmatpush.bf16.msra.mxu0 %v5550
      %5568 = vmatpush.bf16.msra.mxu0 %v5549
      %5569 = vmatpush.bf16.msra.mxu0 %v5548
      %5570 = vmatpush.bf16.msra.mxu0 %v5547
      %5571 = vmatmul.bf16.gmra.mxu0 %v5495
      %v5572 = vpop.f32.mrf.mxu0
      %v5573 = vadd.f32 0.0, %v5572
      %v5574 = vpop.f32.mrf.mxu0
      %v5575 = vadd.f32 0.0, %v5574
      %5576 = vmatmul.bf16.gmra.mxu0 %v5496
      %v5577 = vpop.f32.mrf.mxu0
      %v5578 = vadd.f32 0.0, %v5577
      %v5579 = vpop.f32.mrf.mxu0
      %v5580 = vadd.f32 0.0, %v5579
      %5581 = vmatmul.bf16.gmra.mxu0 %v5497
      %v5582 = vpop.f32.mrf.mxu0
      %v5583 = vadd.f32 0.0, %v5582
      %v5584 = vpop.f32.mrf.mxu0
      %v5585 = vadd.f32 0.0, %v5584
      %5586 = vmatmul.bf16.gmra.mxu0 %v5498
      %v5587 = vpop.f32.mrf.mxu0
      %v5588 = vadd.f32 0.0, %v5587
      %v5589 = vpop.f32.mrf.mxu0
      %v5590 = vadd.f32 0.0, %v5589
      %5591 = vdwg.mxu0
      %v5592 = vld [vmem:[%s11] sm:$0x1]
      %v5594 = vperm.slane %v5592, 0
      %v5596 = vmul.f32 %v5573, %v5594
      %v5597 = vmul.f32 %v5575, %v5594
      %v5598 = vmul.f32 %v5578, %v5594
      %v5599 = vmul.f32 %v5580, %v5594
      %v5600 = vmul.f32 %v5583, %v5594
      %v5601 = vmul.f32 %v5585, %v5594
      %v5602 = vmul.f32 %v5588, %v5594
      %v5603 = vmul.f32 %v5590, %v5594
      %v5604 = vld [vmem:[%s12] sm:$0x1]
      %v5606 = vperm.slane %v5604, 0
      %v5608 = vadd.f32 %v5596, %v5606
      %v5609 = vadd.f32 %v5597, %v5606
      %v5610 = vadd.f32 %v5598, %v5606
      %v5611 = vadd.f32 %v5599, %v5606
      %v5612 = vadd.f32 %v5600, %v5606
      %v5613 = vadd.f32 %v5601, %v5606
      %v5614 = vadd.f32 %v5602, %v5606
      %v5615 = vadd.f32 %v5603, %v5606
      %v5616 = vmax.f32 %v5608, 0.0
      %v5617 = vmax.f32 %v5609, 0.0
      %v5618 = vmax.f32 %v5610, 0.0
      %v5619 = vmax.f32 %v5611, 0.0
      %v5620 = vmax.f32 %v5612, 0.0
      %v5621 = vmax.f32 %v5613, 0.0
      %v5622 = vmax.f32 %v5614, 0.0
      %v5623 = vmax.f32 %v5615, 0.0
      %v5624 = vpack.c.bf16 %v5617, %v5616
      %v5625 = vpack.c.bf16 %v5619, %v5618
      %v5626 = vpack.c.bf16 %v5621, %v5620
      %v5627 = vpack.c.bf16 %v5623, %v5622
      %v5628 = vld [vmem:[%s13] sm:$0xf]
      %v5629 = vld [vmem:[%s13 + $0x4] sm:$0xf]
      %v5630 = vld [vmem:[%s13 + $0x8] sm:$0xf]
      %v5631 = vld [vmem:[%s13 + $0xc] sm:$0xf]
      %v5632 = vld [vmem:[%s13 + $0x10] sm:$0xf]
      %v5633 = vld [vmem:[%s13 + $0x14] sm:$0xf]
      %v5634 = vld [vmem:[%s13 + $0x18] sm:$0xf]
      %v5635 = vld [vmem:[%s13 + $0x1c] sm:$0xf]
      %v5636 = vld [vmem:[%s13 + $0x20] sm:$0xf]
      %v5637 = vld [vmem:[%s13 + $0x24] sm:$0xf]
      %v5638 = vld [vmem:[%s13 + $0x28] sm:$0xf]
      %v5639 = vld [vmem:[%s13 + $0x2c] sm:$0xf]
      %v5640 = vld [vmem:[%s13 + $0x30] sm:$0xf]
      %v5641 = vld [vmem:[%s13 + $0x34] sm:$0xf]
      %v5642 = vld [vmem:[%s13 + $0x38] sm:$0xf]
      %v5643 = vld [vmem:[%s13 + $0x3c] sm:$0xf]
      %v5644 = vld [vmem:[%s14] sm:$0x1]
      %v5646 = vperm.slane %v5644, 0
      %v5664 = vunpack.c.l.b16 %v5628
      %v5665 = vunpack.c.l.b16 %v5629
      %v5666 = vunpack.c.l.b16 %v5630
      %v5667 = vunpack.c.l.b16 %v5631
      %v5668 = vunpack.c.l.b16 %v5632
      %v5669 = vunpack.c.l.b16 %v5633
      %v5670 = vunpack.c.l.b16 %v5634
      %v5671 = vunpack.c.l.b16 %v5635
      %v5672 = vunpack.c.l.b16 %v5636
      %v5673 = vunpack.c.l.b16 %v5637
      %v5674 = vunpack.c.l.b16 %v5638
      %v5675 = vunpack.c.l.b16 %v5639
      %v5676 = vunpack.c.l.b16 %v5640
      %v5677 = vunpack.c.l.b16 %v5641
      %v5678 = vunpack.c.l.b16 %v5642
      %v5679 = vunpack.c.l.b16 %v5643
      %v5680 = vpack.c.b16 %v5665, %v5664
      %v5681 = vpack.c.b16 %v5667, %v5666
      %v5682 = vpack.c.b16 %v5669, %v5668
      %v5683 = vpack.c.b16 %v5671, %v5670
      %v5684 = vpack.c.b16 %v5673, %v5672
      %v5685 = vpack.c.b16 %v5675, %v5674
      %v5686 = vpack.c.b16 %v5677, %v5676
      %v5687 = vpack.c.b16 %v5679, %v5678
      %5696 = vmatpush.bf16.msra.mxu0 %v5687
      %5697 = vmatpush.bf16.msra.mxu0 %v5686
      %5698 = vmatpush.bf16.msra.mxu0 %v5685
      %5699 = vmatpush.bf16.msra.mxu0 %v5684
      %5700 = vmatpush.bf16.msra.mxu0 %v5683
      %5701 = vmatpush.bf16.msra.mxu0 %v5682
      %5702 = vmatpush.bf16.msra.mxu0 %v5681
      %5703 = vmatpush.bf16.msra.mxu0 %v5680
      %5704 = vmatmul.bf16.gmra.mxu0 %v5624
      %v5705 = vpop.f32.mrf.mxu0
      %v5706 = vadd.f32 %v5646, %v5705
      %v5707 = vpop.f32.mrf.mxu0
      %v5708 = vadd.f32 %v5646, %v5707
      %5709 = vmatmul.bf16.gmra.mxu0 %v5625
      %v5710 = vpop.f32.mrf.mxu0
      %v5711 = vadd.f32 %v5646, %v5710
      %v5712 = vpop.f32.mrf.mxu0
      %v5713 = vadd.f32 %v5646, %v5712
      %5714 = vmatmul.bf16.gmra.mxu0 %v5626
      %v5715 = vpop.f32.mrf.mxu0
      %v5716 = vadd.f32 %v5646, %v5715
      %v5717 = vpop.f32.mrf.mxu0
      %v5718 = vadd.f32 %v5646, %v5717
      %5719 = vmatmul.bf16.gmra.mxu0 %v5627
      %v5720 = vpop.f32.mrf.mxu0
      %v5721 = vadd.f32 %v5646, %v5720
      %v5722 = vpop.f32.mrf.mxu0
      %v5723 = vadd.f32 %v5646, %v5722
      %5724 = vdwg.mxu0
      %5725 = vst [vmem:[%s499] sm:$0xff] %v5706
      %5726 = vst [vmem:[%s499 + $0x8] sm:$0xff] %v5708
      %5727 = vst [vmem:[%s499 + $0x10] sm:$0xff] %v5711
      %5728 = vst [vmem:[%s499 + $0x18] sm:$0xff] %v5713
      %5729 = vst [vmem:[%s499 + $0x20] sm:$0xff] %v5716
      %5730 = vst [vmem:[%s499 + $0x28] sm:$0xff] %v5718
      %5731 = vst [vmem:[%s499 + $0x30] sm:$0xff] %v5721
      %5732 = vst [vmem:[%s499 + $0x38] sm:$0xff] %v5723
      %s5733 = smul.u32 8, %s26
      %p5734 = scmp.lt.s32.totalorder %s5733, 31
      %s5735 = scalar_select %p5734, %s5733, 31
      %s5736 = smul.addr %s5735, 8
      %s5737 = scalar_lea.vmem %s15, %s5736
      // Predicated region
      $region88: #{bn_lenet5_forward.1} parent=79 // pred_check
        %p5738 = pneg %p364
      $region89: #{bn_lenet5_forward.1} parent=79 // pred_check_branch
        %5740 = sbr.rel (%p5738) target = $region91
      $region90: #{bn_lenet5_forward.1} parent=79 // pred_region
        %s5741 = smul.u32 8, %s26
      $region91: #{bn_lenet5_forward.1} parent=79 // pred_fallthru
        _
    $region80: #{bn_lenet5_forward.1} parent=5 // pred_fallthru
      _
    %p5742 = scmp.le.s32.totalorder 2, %s21
    // Predicated region
    $region92: #{bn_lenet5_forward.1} parent=5 // pred_check
      %p5743 = pneg %p5742
    $region93: #{bn_lenet5_forward.1} parent=5 // pred_check_branch
      %5745 = sbr.rel (%p5743) target = $region95
    $region94: #{bn_lenet5_forward.1} parent=5 // pred_region
      %s5746 = ssub.s32 %s21, 2
      // Predicated region
      $region96: #{bn_lenet5_forward.1} parent=94 // pred_check
        %p5747 = pneg %p370
      $region97: #{bn_lenet5_forward.1} parent=94 // pred_check_branch
        %5749 = sbr.rel (%p5747) target = $region99
      $region98: #{bn_lenet5_forward.1} parent=94 // pred_region
        %s5750 = smul.u32 8, %s27
        %p5751 = scmp.lt.s32.totalorder %s5750, 31
        %s5752 = scalar_select %p5751, %s5750, 31
        %s5753 = smul.addr %s5752, 8
        %s5754 = scalar_lea.vmem %s15, %s5753
      $region99: #{bn_lenet5_forward.1} parent=94 // pred_fallthru
        _
    $region95: #{bn_lenet5_forward.1} parent=5 // pred_fallthru
      _
  $region6: #{bn_lenet5_forward.1} parent=0 // loop_footer
    %s25 = sadd.s32 1, %s21
  $region7: #{bn_lenet5_forward.1} parent=0 // loop_footer_branch
    %20 = sbr.rel target = $region3
  $region8: #{bn_lenet5_forward.1} parent=0 // loop_exit
    _

</llo_original>
